<compile_context>
chip_gen: v7x
topology: tpu7x:2x2x1
jax: 0.10.0
libtpu: 0.0.40
codegen_flags: <defaults>
</compile_context>

<pallas_src>
import jax
import jax.numpy as jnp
import numpy as np
from jax.experimental import pallas as pl
from jax.experimental.pallas import tpu as pltpu

EPS = 1e-5
PAD = 6            # conv2 temporal zero padding
K2 = 12            # conv2 temporal kernel width
POOL_W, POOL_S = 62, 12
N_CLASSES = 4
TAP_R = 24         # per-tap row pitch of the stacked conv2 weight (20 padded to 24)


def sccnet_kernel(xp_ref, w_ref, c_ref, pool_ref, wcls_ref, bcls_ref, o_ref):
    """One batch block: B samples packed along lanes with per-sample stride Tp
    (each sample's conv2 zero padding baked into the packing)."""
    x = xp_ref[0]                      # (22, B*Tp)
    btp = x.shape[-1]
    tp = c_ref.shape[-1]
    n_smp = btp // tp                  # B (static)

    # conv1 + BN1 + BN2-scale are folded into the tap-stacked weight host-side.
    # One MXU pass over the wide activation; taps recombined with sublane-
    # aligned row slices + XLU lane rolls + VPU adds (slots the MXU leaves idle).
    p = jnp.dot(w_ref[...], x, preferred_element_type=jnp.float32)   # (12*24, B*Tp)
    acc = p[0:TAP_R]                                                  # tap 0
    for k in range(1, K2):
        pk = p[k * TAP_R:(k + 1) * TAP_R]                             # (24, B*Tp)
        acc = acc + pltpu.roll(pk, btp - k, 1)        # rolled[:, t] = pk[:, t+k]
    # TODO(synk): on v7x the 11 adds could stay in the MXU result buffer via a
    # K-concatenated dot; here they overlap the matmul's slack VALU slots.

    c_tab = c_ref[...]      # (24, Tp); padding rows 20..23 are 1.0
    pool = pool_ref[...]    # (Tp, S)
    wcls = wcls_ref[...]    # (4*24, S); padding rows are 0.0

    # Per-sample tail (lane-aligned Tp-wide slices): affine + square + AvgPool
    # + log + fused Linear(840, 4) head.
    # TODO(synk): Dropout(0.5) is the eval-mode identity here (no RNG applied).
    cols = []
    for b in range(n_smp):
        hb = acc[:, b * tp:(b + 1) * tp] + c_tab                          # (24, Tp)
        hb = hb * hb                                                      # square_layer
        pooled = jnp.dot(hb, pool, preferred_element_type=jnp.float32)   # (24, S)
        feat = jnp.log(pooled)                                            # log_layer
        # classifier: tile feat over the 4 classes along sublanes, one
        # elementwise multiply + lane reduce, then 4 tiny per-class row sums.
        featr = jnp.tile(feat, (N_CLASSES, 1))                            # (96, S)
        prod = featr * wcls                                               # (96, S)
        r = jnp.sum(prod, axis=1, keepdims=True)                          # (96, 1)
        per_cls = [jnp.sum(r[c * TAP_R:(c + 1) * TAP_R], axis=0, keepdims=True)
                   for c in range(N_CLASSES)]                             # 4 x (1,1)
        cols.append(jnp.concatenate(per_cls, axis=0))                     # (4, 1)
    o_ref[0] = jnp.concatenate(cols, axis=1) + bcls_ref[...]              # (4, B)


def _fold_params(raw, T, Tp):
    """Host-side folding of conv biases / eval-mode BN / conv1 into kernel inputs."""
    (W1, b1, g1, be1, m1, v1, W2, b2, g2, be2, m2, v2, Wlin, blin) = raw
    f2 = W2.shape[0]                      # 20
    C = W1.shape[1]                       # 22
    To = T + 2 * PAD - K2 + 1             # conv2 output width (= T + 1)
    S = (To - POOL_W) // POOL_S + 1       # pooled steps (= 42)
    assert f2 * S == Wlin.shape[1], (f2, S, Wlin.shape)
    assert Tp % 128 == 0 and Tp >= To + K2 - 1, Tp
    assert f2 <= TAP_R
    # pooling must never read conv columns contaminated by lane-roll wraparound
    # (or columns past the valid conv output range)
    assert (S - 1) * POOL_S + POOL_W <= To
    assert (S - 1) * POOL_S + POOL_W <= Tp - (K2 - 1)

    # conv1 bias + eval BN1 -> per-channel scale/shift of the conv1 output
    s1 = g1 / jnp.sqrt(v1 + EPS)
    a1 = s1
    c1 = s1 * (b1 - m1) + be1
    # conv2 bias + eval BN2 -> scale/shift of the conv2 output
    s2 = g2 / jnp.sqrt(v2 + EPS)
    c2 = s2 * (b2 - m2) + be2

    # fold conv1 AND the BN2 scale into conv2, stack the 12 taps along rows,
    # each tap padded to TAP_R=24 sublane-aligned rows: (12*24, 22)
    w3 = jnp.einsum('ock,c,cj->koj', W2, a1, W1) * s2[None, :, None]   # (12, 20, 22)
    w_all = jnp.zeros((K2, TAP_R, C), jnp.float32).at[:, :f2, :].set(w3)
    w_all = w_all.reshape(K2 * TAP_R, C)

    # constant term: c1 flowing through the conv2 taps, including the zero-pad
    # edge correction (first/last PAD output columns see fewer valid taps),
    # then BN2 shift -- one (24, Tp) table.  Padding rows are 1.0 so that
    # square -> avgpool -> log gives exactly 0 for them.
    d = jnp.einsum('ock,c->ok', W2, c1)                                # (20, 12)
    t_idx = jnp.arange(Tp)[:, None]
    k_idx = jnp.arange(K2)[None, :]
    valid = ((t_idx + k_idx >= PAD) &
             (t_idx + k_idx < PAD + T)).astype(jnp.float32)            # (Tp, 12)
    c_rows = s2[:, None] * jnp.dot(d, valid.T) + c2[:, None]           # (20, Tp)
    c_tab = jnp.ones((TAP_R, Tp), jnp.float32).at[:f2, :].set(c_rows)  # (24, Tp)

    # per-sample AvgPool2d((1,62), stride (1,12)) matrix: (Tp, S)
    tt = jnp.arange(Tp)[:, None]
    ss = jnp.arange(S)[None, :]
    pool = (((tt >= ss * POOL_S) & (tt < ss * POOL_S + POOL_W))
            .astype(jnp.float32) / POOL_W)

    # classifier weights (4, 840) -> (4, 20, S) in view(-1, 840) order, padded
    # output-channel rows zeroed, classes stacked along sublanes: (96, S)
    wr = Wlin.reshape(N_CLASSES, f2, S)
    wcls = jnp.zeros((N_CLASSES, TAP_R, S), jnp.float32).at[:, :f2, :].set(wr)
    wcls = wcls.reshape(N_CLASSES * TAP_R, S)
    bcls = blin.reshape(N_CLASSES, 1)

    return w_all, c_tab, pool, wcls, bcls


def sccnet_forward(x3, raw, block_b=None):
    """x3: (N, 22, T) float32.  Returns logits (N, 4)."""
    N, C, T = x3.shape
    if block_b is not None:
        B = block_b
    else:
        B = min(16, N)
        if N >= 2:                       # keep NB >= 2 (v7x megacore: 2 TCs)
            B = max(1, min(B, N // 2))
    # pad batch to a multiple of B by replicating the last sample (stays finite,
    # so log(pool(square(.))) of padded samples cannot introduce -inf/NaN)
    n_pad = (-N) % B
    if n_pad:
        x3 = jnp.concatenate(
            [x3, jnp.broadcast_to(x3[-1:], (n_pad, C, T))], axis=0)
    Np = N + n_pad
    NB = Np // B

    # per-sample lane stride: >= T + 2*PAD, rounded up to a multiple of 128
    Tp = ((T + 2 * PAD + 127) // 128) * 128

    w_all, c_tab, pool, wcls, bcls = _fold_params(raw, T, Tp)

    # pack B samples per block along the lane axis, conv2 zero padding baked in.
    # TODO(synk): this XLA pad/transpose pre-pass could be moved into the kernel
    # (DMA raw (B,22,T) blocks + in-kernel placement) to cut HBM traffic further.
    xq = x3.reshape(NB, B, C, T)
    xq = jnp.pad(xq, ((0, 0), (0, 0), (0, 0), (PAD, Tp - PAD - T)))
    xq = jnp.transpose(xq, (0, 2, 1, 3)).reshape(NB, C, B * Tp)

    out = pl.pallas_call(
        sccnet_kernel,
        out_shape=jax.ShapeDtypeStruct((NB, N_CLASSES, B), jnp.float32),
        grid_spec=pltpu.PrefetchScalarGridSpec(
            num_scalar_prefetch=0,
            grid=(NB,),
            in_specs=[
                pl.BlockSpec((1, C, B * Tp), lambda nb: (nb, 0, 0)),
                pl.BlockSpec(w_all.shape, lambda nb: (0, 0)),
                pl.BlockSpec(c_tab.shape, lambda nb: (0, 0)),
                pl.BlockSpec(pool.shape, lambda nb: (0, 0)),
                pl.BlockSpec(wcls.shape, lambda nb: (0, 0)),
                pl.BlockSpec(bcls.shape, lambda nb: (0, 0)),
            ],
            out_specs=pl.BlockSpec((1, N_CLASSES, B), lambda nb: (nb, 0, 0)),
        ),
        compiler_params=pltpu.CompilerParams(
            dimension_semantics=("parallel",),
            vmem_limit_bytes=48 * 1024 * 1024),
    )(xq, w_all, c_tab, pool, wcls, bcls)

    logits = jnp.transpose(out, (0, 2, 1)).reshape(Np, N_CLASSES)
    return logits[:N]


def init_params(key, *, c_eeg=22, f1=22, f2=20, n_classes=4):
    """Deterministic synthetic parameters matching SCCNet.__init__ shapes."""
    ks = jax.random.split(key, 14)
    W1 = 0.1 * jax.random.normal(ks[0], (f1, c_eeg), jnp.float32)   # conv1 (22,1,22,1)
    b1 = 0.1 * jax.random.normal(ks[1], (f1,), jnp.float32)
    g1 = 1.0 + 0.1 * jax.random.normal(ks[2], (f1,), jnp.float32)
    be1 = 0.05 * jax.random.normal(ks[3], (f1,), jnp.float32)
    m1 = 0.1 * jax.random.normal(ks[4], (f1,), jnp.float32)
    v1 = 1.0 + 0.1 * jnp.abs(jax.random.normal(ks[5], (f1,), jnp.float32))
    W2 = 0.1 * jax.random.normal(ks[6], (f2, f1, K2), jnp.float32)  # conv2 (20,22,1,12)
    b2 = 0.1 * jax.random.normal(ks[7], (f2,), jnp.float32)
    g2 = 1.0 + 0.1 * jax.random.normal(ks[8], (f2,), jnp.float32)
    be2 = 0.05 * jax.random.normal(ks[9], (f2,), jnp.float32)
    m2 = 0.1 * jax.random.normal(ks[10], (f2,), jnp.float32)
    v2 = 1.0 + 0.1 * jnp.abs(jax.random.normal(ks[11], (f2,), jnp.float32))
    Wlin = 0.1 * jax.random.normal(ks[12], (n_classes, 840), jnp.float32)
    blin = 0.1 * jax.random.normal(ks[13], (n_classes,), jnp.float32)
    return (W1, b1, g1, be1, m1, v1, W2, b2, g2, be2, m2, v2, Wlin, blin)


def reference_forward(x3, raw):
    """Pure-JAX reference (same math, no Pallas) for a sanity check."""
    W1, b1, g1, be1, m1, v1, W2, b2, g2, be2, m2, v2, Wlin, blin = raw
    N, C, T = x3.shape
    h1 = jnp.einsum('oc,nct->not', W1, x3) + b1[None, :, None]
    h1 = ((h1 - m1[None, :, None]) * (g1 / jnp.sqrt(v1 + EPS))[None, :, None]
          + be1[None, :, None])
    h1p = jnp.pad(h1, ((0, 0), (0, 0), (PAD, PAD)))
    To = T + 1
    h2 = jnp.zeros((N, W2.shape[0], To), jnp.float32)
    for k in range(K2):
        h2 = h2 + jnp.einsum('oc,nct->not', W2[:, :, k], h1p[:, :, k:k + To])
    h2 = h2 + b2[None, :, None]
    h2 = ((h2 - m2[None, :, None]) * (g2 / jnp.sqrt(v2 + EPS))[None, :, None]
          + be2[None, :, None])
    h2 = h2 ** 2
    S = (To - POOL_W) // POOL_S + 1
    pooled = jnp.stack(
        [h2[:, :, j * POOL_S:j * POOL_S + POOL_W].mean(-1) for j in range(S)],
        axis=-1)
    feat = jnp.log(pooled).reshape(N, -1)
    return feat @ Wlin.T + blin


if __name__ == "__main__":
    key = jax.random.PRNGKey(0)
    kx, kp = jax.random.split(key)

    N, C, T = 4, 22, 562          # T pinned by view(-1, 840) + Linear(840, 4)
    x = jax.random.normal(kx, (N, 1, C, T), jnp.float32)   # PyTorch NCHW input
    x3 = x[:, 0]                                           # (N, 22, T) kernel layout

    raw = init_params(kp)

    logits = sccnet_forward(x3, raw)        # auto block -> B=2, NB=2 grid steps
    logits = jax.block_until_ready(logits)

    ref = reference_forward(x3, raw)
    np.testing.assert_allclose(np.asarray(logits), np.asarray(ref),
                               rtol=2e-2, atol=2e-2)
    print("KERNEL_OK")
</pallas_src>

<mosaic_0001>
module attributes {stable_mosaic.version = 11 : i64} {
  func.func @sccnet_kernel(%arg0: i32, %arg1: memref<1x22x1280xf32, #tpu.memory_space<vmem>>, %arg2: memref<288x22xf32, #tpu.memory_space<vmem>>, %arg3: memref<24x640xf32, #tpu.memory_space<vmem>>, %arg4: memref<640x42xf32, #tpu.memory_space<vmem>>, %arg5: memref<96x42xf32, #tpu.memory_space<vmem>>, %arg6: memref<4x1xf32, #tpu.memory_space<vmem>>, %arg7: memref<1x4x2xf32, #tpu.memory_space<vmem>>) attributes {dimension_semantics = [#tpu.dimension_semantics<parallel>], iteration_bounds = array<i64: 2>, scalar_prefetch = 0 : i64, scratch_operands = 0 : i64, tpu.core_type = #tpu.core_type<tc>, window_params = [{transform_indices = @transform_0, window_bounds = array<i64: 1, 22, 1280>}, {pipeline_mode = #tpu.pipeline_mode<synchronous>, transform_indices = @transform_1, window_bounds = array<i64: 288, 22>}, {pipeline_mode = #tpu.pipeline_mode<synchronous>, transform_indices = @transform_2, window_bounds = array<i64: 24, 640>}, {pipeline_mode = #tpu.pipeline_mode<synchronous>, transform_indices = @transform_3, window_bounds = array<i64: 640, 42>}, {pipeline_mode = #tpu.pipeline_mode<synchronous>, transform_indices = @transform_4, window_bounds = array<i64: 96, 42>}, {pipeline_mode = #tpu.pipeline_mode<synchronous>, transform_indices = @transform_5, window_bounds = array<i64: 4, 1>}, {transform_indices = @transform_6, window_bounds = array<i64: 1, 4, 2>}]} {
    %c0 = arith.constant 0 : index
    %c0_0 = arith.constant 0 : index
    %c0_1 = arith.constant 0 : index
    %0 = vector.load %arg1[%c0, %c0_0, %c0_1] : memref<1x22x1280xf32, #tpu.memory_space<vmem>>, vector<1x22x1280xf32>
    %1 = vector.shape_cast %0 : vector<1x22x1280xf32> to vector<22x1280xf32>
    %c0_2 = arith.constant 0 : index
    %c0_3 = arith.constant 0 : index
    %2 = vector.load %arg2[%c0_2, %c0_3] : memref<288x22xf32, #tpu.memory_space<vmem>>, vector<288x22xf32>
    %cst = arith.constant dense<0.000000e+00> : vector<288x1280xf32>
    %3 = tpu.matmul %2, %1, %cst {dimension_numbers = #tpu.dot_dimension_numbers<[1], [0], [0], [1], [0, 0, 1, 1], [], []>} : vector<288x22xf32>, vector<22x1280xf32>, vector<288x1280xf32> -> vector<288x1280xf32>
    %4 = vector.extract_strided_slice %3 {offsets = [0, 0], sizes = [24, 1280], strides = [1, 1]} : vector<288x1280xf32> to vector<24x1280xf32>
    %5 = vector.extract_strided_slice %3 {offsets = [24, 0], sizes = [24, 1280], strides = [1, 1]} : vector<288x1280xf32> to vector<24x1280xf32>
    %c1279_i32 = arith.constant 1279 : i32
    %6 = tpu.dynamic_rotate %5 by %c1279_i32 dim 1 : vector<24x1280xf32>, i32 -> vector<24x1280xf32>
    %7 = arith.addf %4, %6 : vector<24x1280xf32>
    %8 = vector.extract_strided_slice %3 {offsets = [48, 0], sizes = [24, 1280], strides = [1, 1]} : vector<288x1280xf32> to vector<24x1280xf32>
    %c1278_i32 = arith.constant 1278 : i32
    %9 = tpu.dynamic_rotate %8 by %c1278_i32 dim 1 : vector<24x1280xf32>, i32 -> vector<24x1280xf32>
    %10 = arith.addf %7, %9 : vector<24x1280xf32>
    %11 = vector.extract_strided_slice %3 {offsets = [72, 0], sizes = [24, 1280], strides = [1, 1]} : vector<288x1280xf32> to vector<24x1280xf32>
    %c1277_i32 = arith.constant 1277 : i32
    %12 = tpu.dynamic_rotate %11 by %c1277_i32 dim 1 : vector<24x1280xf32>, i32 -> vector<24x1280xf32>
    %13 = arith.addf %10, %12 : vector<24x1280xf32>
    %14 = vector.extract_strided_slice %3 {offsets = [96, 0], sizes = [24, 1280], strides = [1, 1]} : vector<288x1280xf32> to vector<24x1280xf32>
    %c1276_i32 = arith.constant 1276 : i32
    %15 = tpu.dynamic_rotate %14 by %c1276_i32 dim 1 : vector<24x1280xf32>, i32 -> vector<24x1280xf32>
    %16 = arith.addf %13, %15 : vector<24x1280xf32>
    %17 = vector.extract_strided_slice %3 {offsets = [120, 0], sizes = [24, 1280], strides = [1, 1]} : vector<288x1280xf32> to vector<24x1280xf32>
    %c1275_i32 = arith.constant 1275 : i32
    %18 = tpu.dynamic_rotate %17 by %c1275_i32 dim 1 : vector<24x1280xf32>, i32 -> vector<24x1280xf32>
    %19 = arith.addf %16, %18 : vector<24x1280xf32>
    %20 = vector.extract_strided_slice %3 {offsets = [144, 0], sizes = [24, 1280], strides = [1, 1]} : vector<288x1280xf32> to vector<24x1280xf32>
    %c1274_i32 = arith.constant 1274 : i32
    %21 = tpu.dynamic_rotate %20 by %c1274_i32 dim 1 : vector<24x1280xf32>, i32 -> vector<24x1280xf32>
    %22 = arith.addf %19, %21 : vector<24x1280xf32>
    %23 = vector.extract_strided_slice %3 {offsets = [168, 0], sizes = [24, 1280], strides = [1, 1]} : vector<288x1280xf32> to vector<24x1280xf32>
    %c1273_i32 = arith.constant 1273 : i32
    %24 = tpu.dynamic_rotate %23 by %c1273_i32 dim 1 : vector<24x1280xf32>, i32 -> vector<24x1280xf32>
    %25 = arith.addf %22, %24 : vector<24x1280xf32>
    %26 = vector.extract_strided_slice %3 {offsets = [192, 0], sizes = [24, 1280], strides = [1, 1]} : vector<288x1280xf32> to vector<24x1280xf32>
    %c1272_i32 = arith.constant 1272 : i32
    %27 = tpu.dynamic_rotate %26 by %c1272_i32 dim 1 : vector<24x1280xf32>, i32 -> vector<24x1280xf32>
    %28 = arith.addf %25, %27 : vector<24x1280xf32>
    %29 = vector.extract_strided_slice %3 {offsets = [216, 0], sizes = [24, 1280], strides = [1, 1]} : vector<288x1280xf32> to vector<24x1280xf32>
    %c1271_i32 = arith.constant 1271 : i32
    %30 = tpu.dynamic_rotate %29 by %c1271_i32 dim 1 : vector<24x1280xf32>, i32 -> vector<24x1280xf32>
    %31 = arith.addf %28, %30 : vector<24x1280xf32>
    %32 = vector.extract_strided_slice %3 {offsets = [240, 0], sizes = [24, 1280], strides = [1, 1]} : vector<288x1280xf32> to vector<24x1280xf32>
    %c1270_i32 = arith.constant 1270 : i32
    %33 = tpu.dynamic_rotate %32 by %c1270_i32 dim 1 : vector<24x1280xf32>, i32 -> vector<24x1280xf32>
    %34 = arith.addf %31, %33 : vector<24x1280xf32>
    %35 = vector.extract_strided_slice %3 {offsets = [264, 0], sizes = [24, 1280], strides = [1, 1]} : vector<288x1280xf32> to vector<24x1280xf32>
    %c1269_i32 = arith.constant 1269 : i32
    %36 = tpu.dynamic_rotate %35 by %c1269_i32 dim 1 : vector<24x1280xf32>, i32 -> vector<24x1280xf32>
    %37 = arith.addf %34, %36 : vector<24x1280xf32>
    %c0_4 = arith.constant 0 : index
    %c0_5 = arith.constant 0 : index
    %38 = vector.load %arg3[%c0_4, %c0_5] : memref<24x640xf32, #tpu.memory_space<vmem>>, vector<24x640xf32>
    %c0_6 = arith.constant 0 : index
    %c0_7 = arith.constant 0 : index
    %39 = vector.load %arg4[%c0_6, %c0_7] : memref<640x42xf32, #tpu.memory_space<vmem>>, vector<640x42xf32>
    %c0_8 = arith.constant 0 : index
    %c0_9 = arith.constant 0 : index
    %40 = vector.load %arg5[%c0_8, %c0_9] : memref<96x42xf32, #tpu.memory_space<vmem>>, vector<96x42xf32>
    %41 = vector.extract_strided_slice %37 {offsets = [0, 0], sizes = [24, 640], strides = [1, 1]} : vector<24x1280xf32> to vector<24x640xf32>
    %42 = arith.addf %41, %38 : vector<24x640xf32>
    %43 = arith.mulf %42, %42 : vector<24x640xf32>
    %cst_10 = arith.constant dense<0.000000e+00> : vector<24x42xf32>
    %44 = tpu.matmul %43, %39, %cst_10 {dimension_numbers = #tpu.dot_dimension_numbers<[1], [0], [0], [1], [0, 0, 1, 1], [], []>} : vector<24x640xf32>, vector<640x42xf32>, vector<24x42xf32> -> vector<24x42xf32>
    %45 = math.log %44 : vector<24x42xf32>
    %46 = tpu.concatenate %45, %45, %45, %45 in 0 : vector<24x42xf32>, vector<24x42xf32>, vector<24x42xf32>, vector<24x42xf32> -> vector<96x42xf32>
    %47 = arith.mulf %46, %40 : vector<96x42xf32>
    %cst_11 = arith.constant dense<0.000000e+00> : vector<96xf32>
    %48 = vector.multi_reduction <add>, %47, %cst_11 [1] : vector<96x42xf32> to vector<96xf32>
    %49 = vector.shape_cast %48 : vector<96xf32> to vector<96x1xf32>
    %50 = vector.extract_strided_slice %49 {offsets = [0, 0], sizes = [24, 1], strides = [1, 1]} : vector<96x1xf32> to vector<24x1xf32>
    %cst_12 = arith.constant dense<0.000000e+00> : vector<1xf32>
    %51 = vector.multi_reduction <add>, %50, %cst_12 [0] : vector<24x1xf32> to vector<1xf32>
    %52 = vector.shape_cast %51 : vector<1xf32> to vector<1x1xf32>
    %53 = vector.extract_strided_slice %49 {offsets = [24, 0], sizes = [24, 1], strides = [1, 1]} : vector<96x1xf32> to vector<24x1xf32>
    %cst_13 = arith.constant dense<0.000000e+00> : vector<1xf32>
    %54 = vector.multi_reduction <add>, %53, %cst_13 [0] : vector<24x1xf32> to vector<1xf32>
    %55 = vector.shape_cast %54 : vector<1xf32> to vector<1x1xf32>
    %56 = vector.extract_strided_slice %49 {offsets = [48, 0], sizes = [24, 1], strides = [1, 1]} : vector<96x1xf32> to vector<24x1xf32>
    %cst_14 = arith.constant dense<0.000000e+00> : vector<1xf32>
    %57 = vector.multi_reduction <add>, %56, %cst_14 [0] : vector<24x1xf32> to vector<1xf32>
    %58 = vector.shape_cast %57 : vector<1xf32> to vector<1x1xf32>
    %59 = vector.extract_strided_slice %49 {offsets = [72, 0], sizes = [24, 1], strides = [1, 1]} : vector<96x1xf32> to vector<24x1xf32>
    %cst_15 = arith.constant dense<0.000000e+00> : vector<1xf32>
    %60 = vector.multi_reduction <add>, %59, %cst_15 [0] : vector<24x1xf32> to vector<1xf32>
    %61 = vector.shape_cast %60 : vector<1xf32> to vector<1x1xf32>
    %62 = tpu.concatenate %52, %55, %58, %61 in 0 : vector<1x1xf32>, vector<1x1xf32>, vector<1x1xf32>, vector<1x1xf32> -> vector<4x1xf32>
    %63 = vector.extract_strided_slice %37 {offsets = [0, 640], sizes = [24, 640], strides = [1, 1]} : vector<24x1280xf32> to vector<24x640xf32>
    %64 = arith.addf %63, %38 : vector<24x640xf32>
    %65 = arith.mulf %64, %64 : vector<24x640xf32>
    %cst_16 = arith.constant dense<0.000000e+00> : vector<24x42xf32>
    %66 = tpu.matmul %65, %39, %cst_16 {dimension_numbers = #tpu.dot_dimension_numbers<[1], [0], [0], [1], [0, 0, 1, 1], [], []>} : vector<24x640xf32>, vector<640x42xf32>, vector<24x42xf32> -> vector<24x42xf32>
    %67 = math.log %66 : vector<24x42xf32>
    %68 = tpu.concatenate %67, %67, %67, %67 in 0 : vector<24x42xf32>, vector<24x42xf32>, vector<24x42xf32>, vector<24x42xf32> -> vector<96x42xf32>
    %69 = arith.mulf %68, %40 : vector<96x42xf32>
    %cst_17 = arith.constant dense<0.000000e+00> : vector<96xf32>
    %70 = vector.multi_reduction <add>, %69, %cst_17 [1] : vector<96x42xf32> to vector<96xf32>
    %71 = vector.shape_cast %70 : vector<96xf32> to vector<96x1xf32>
    %72 = vector.extract_strided_slice %71 {offsets = [0, 0], sizes = [24, 1], strides = [1, 1]} : vector<96x1xf32> to vector<24x1xf32>
    %cst_18 = arith.constant dense<0.000000e+00> : vector<1xf32>
    %73 = vector.multi_reduction <add>, %72, %cst_18 [0] : vector<24x1xf32> to vector<1xf32>
    %74 = vector.shape_cast %73 : vector<1xf32> to vector<1x1xf32>
    %75 = vector.extract_strided_slice %71 {offsets = [24, 0], sizes = [24, 1], strides = [1, 1]} : vector<96x1xf32> to vector<24x1xf32>
    %cst_19 = arith.constant dense<0.000000e+00> : vector<1xf32>
    %76 = vector.multi_reduction <add>, %75, %cst_19 [0] : vector<24x1xf32> to vector<1xf32>
    %77 = vector.shape_cast %76 : vector<1xf32> to vector<1x1xf32>
    %78 = vector.extract_strided_slice %71 {offsets = [48, 0], sizes = [24, 1], strides = [1, 1]} : vector<96x1xf32> to vector<24x1xf32>
    %cst_20 = arith.constant dense<0.000000e+00> : vector<1xf32>
    %79 = vector.multi_reduction <add>, %78, %cst_20 [0] : vector<24x1xf32> to vector<1xf32>
    %80 = vector.shape_cast %79 : vector<1xf32> to vector<1x1xf32>
    %81 = vector.extract_strided_slice %71 {offsets = [72, 0], sizes = [24, 1], strides = [1, 1]} : vector<96x1xf32> to vector<24x1xf32>
    %cst_21 = arith.constant dense<0.000000e+00> : vector<1xf32>
    %82 = vector.multi_reduction <add>, %81, %cst_21 [0] : vector<24x1xf32> to vector<1xf32>
    %83 = vector.shape_cast %82 : vector<1xf32> to vector<1x1xf32>
    %84 = tpu.concatenate %74, %77, %80, %83 in 0 : vector<1x1xf32>, vector<1x1xf32>, vector<1x1xf32>, vector<1x1xf32> -> vector<4x1xf32>
    %85 = tpu.concatenate %62, %84 in 1 : vector<4x1xf32>, vector<4x1xf32> -> vector<4x2xf32>
    %c0_22 = arith.constant 0 : index
    %c0_23 = arith.constant 0 : index
    %86 = vector.load %arg6[%c0_22, %c0_23] : memref<4x1xf32, #tpu.memory_space<vmem>>, vector<4x1xf32>
    %87 = vector.broadcast %86 : vector<4x1xf32> to vector<4x2xf32>
    %88 = arith.addf %85, %87 : vector<4x2xf32>
    %c0_24 = arith.constant 0 : index
    %c0_25 = arith.constant 0 : index
    %c0_26 = arith.constant 0 : index
    %89 = vector.load %arg7[%c0_24, %c0_25, %c0_26] : memref<1x4x2xf32, #tpu.memory_space<vmem>>, vector<1x4x2xf32>
    %90 = vector.shape_cast %89 : vector<1x4x2xf32> to vector<4x2xf32>
    %91 = vector.shape_cast %88 : vector<4x2xf32> to vector<1x4x2xf32>
    tpu.vector_store %arg7[%c0_24, %c0_25, %c0_26], %91 {strides = array<i32>} : memref<1x4x2xf32, #tpu.memory_space<vmem>>, vector<1x4x2xf32>,
    return
  }
  func.func @transform_0(%arg0: i32) -> (i32, i32, i32) {
    %c0_i32 = arith.constant 0 : i32
    %c0_i32_0 = arith.constant 0 : i32
    %c0_i32_1 = arith.constant 0 : i32
    return %arg0, %c0_i32, %c0_i32_0 : i32, i32, i32
  }
  func.func @transform_1(%arg0: i32) -> (i32, i32) {
    %c0_i32 = arith.constant 0 : i32
    %c0_i32_0 = arith.constant 0 : i32
    %c0_i32_1 = arith.constant 0 : i32
    return %c0_i32, %c0_i32_0 : i32, i32
  }
  func.func @transform_2(%arg0: i32) -> (i32, i32) {
    %c0_i32 = arith.constant 0 : i32
    %c0_i32_0 = arith.constant 0 : i32
    %c0_i32_1 = arith.constant 0 : i32
    return %c0_i32, %c0_i32_0 : i32, i32
  }
  func.func @transform_3(%arg0: i32) -> (i32, i32) {
    %c0_i32 = arith.constant 0 : i32
    %c0_i32_0 = arith.constant 0 : i32
    %c0_i32_1 = arith.constant 0 : i32
    return %c0_i32, %c0_i32_0 : i32, i32
  }
  func.func @transform_4(%arg0: i32) -> (i32, i32) {
    %c0_i32 = arith.constant 0 : i32
    %c0_i32_0 = arith.constant 0 : i32
    %c0_i32_1 = arith.constant 0 : i32
    return %c0_i32, %c0_i32_0 : i32, i32
  }
  func.func @transform_5(%arg0: i32) -> (i32, i32) {
    %c0_i32 = arith.constant 0 : i32
    %c0_i32_0 = arith.constant 0 : i32
    %c0_i32_1 = arith.constant 0 : i32
    return %c0_i32, %c0_i32_0 : i32, i32
  }
  func.func @transform_6(%arg0: i32) -> (i32, i32, i32) {
    %c0_i32 = arith.constant 0 : i32
    %c0_i32_0 = arith.constant 0 : i32
    %c0_i32_1 = arith.constant 0 : i32
    return %arg0, %c0_i32, %c0_i32_0 : i32, i32, i32
  }
}

</mosaic_0001>

<llo_original>
// kernel: tpu_custom_call.1
$region0: #{tpu_custom_call.1}
  #allocation0 [shape = 'u32[]', space=smem, size = 0x4, offset = 0x4, fixed_abs, tag = 'smem constant byte address 0x4 - core index']
  #allocation1 [shape = 'u32[144,128]{1,0:T(1,128)}', space=vmem, size = 0x12000, scoped, tag = 'internal scratch']
  %s0 = inlined_call_operand.vmem [shape: f32[2,22,1280], index: 0, kind: input, shape index: {}]
  %s1 = inlined_call_operand.vmem [shape: f32[288,22], index: 1, kind: input, shape index: {}]
  %s2 = inlined_call_operand.vmem [shape: f32[24,640], index: 2, kind: input, shape index: {}]
  %s3 = inlined_call_operand.vmem [shape: f32[640,42], index: 3, kind: input, shape index: {}]
  %s4 = inlined_call_operand.vmem [shape: f32[96,42], index: 4, kind: input, shape index: {}]
  %s5 = inlined_call_operand.vmem [shape: f32[4,1], index: 5, kind: input, shape index: {}]
  %s6 = inlined_call_operand.vmem [shape: f32[2,4,2], index: 6, kind: output, shape index: {}]
  %s7 = sld [smem:[#allocation0]]
  $region57: #{tpu_custom_call.1} parent=0
    _
  %s9 = ssub.s32 1, %s7
  %s10 = scalar_select 0, %s9, %s7
  loop: start=0, step=1, limit=4
  $region2: #{tpu_custom_call.1} parent=0 // loop_pre_header
    _
  $region3: #{tpu_custom_call.1} parent=0 // loop_header
    %s12 = sphi 0, %s16
    %p13 = scmp.ge.s32.totalorder %s12, 4
    %s22 = sphi 0, %s24
    %s25 = sphi 0, %s22
    %s26 = sphi 0, %s25
    %s42 = sphi 0, %s26
    %s46 = sphi 0, %s46
    %s48 = sphi 0, %s46
    %s49 = sphi 0, %s48
    %s63 = sphi 0, %s49
    %s67 = sphi 0, %s67
    %s69 = sphi 0, %s67
    %s70 = sphi 0, %s69
    %s84 = sphi 0, %s70
    %s88 = sphi 0, %s88
    %s90 = sphi 0, %s88
    %s91 = sphi 0, %s90
    %s105 = sphi 0, %s91
    %s109 = sphi 0, %s109
    %s111 = sphi 0, %s109
    %s112 = sphi 0, %s111
    %s126 = sphi 0, %s112
    %s130 = sphi 0, %s130
    %s132 = sphi 0, %s130
    %s133 = sphi 0, %s132
    %s147 = sphi 0, %s133
    %s153 = sphi 0, %s155
    %s156 = sphi 0, %s153
    %s157 = sphi 0, %s156
    %s173 = sphi 0, %s157
  $region4: #{tpu_custom_call.1} parent=0 // loop_header_branch
    %15 = sbr.rel (%p13) target = $region8
  $region5: #{tpu_custom_call.1} parent=0 // loop_body
    %s17 = ssub.s32 %s12, 1
    %s18 = ssub.s32 %s12, 2
    %s19 = sadd.s32 %s12, 1
    %s20 = ssub.s32 %s12, %s19
    %p21 = scmp.eq.s32.totalorder %s20, 0
    %s23 = sadd.s32 %s22, 1
    %s24 = scalar_select %p21, %s22, %s23
    %p27 = pneg %p21
    %p28 = scmp.eq.s32.totalorder %s12, 1
    %p29 = por %p27, %p28
    %p30 = scmp.ne.s32.totalorder %s22, %s25
    %p31 = scmp.eq.s32.totalorder %s12, 0
    %p32 = por %p30, %p31
    %p33 = scmp.ne.s32.totalorder %s22, %s25
    %p34 = scmp.eq.s32.totalorder %s17, 1
    %p35 = por %p33, %p34
    %p36 = scmp.ne.s32.totalorder %s25, %s26
    %p37 = scmp.eq.s32.totalorder %s17, 0
    %p38 = por %p36, %p37
    %p39 = scmp.ne.s32.totalorder %s25, %s26
    %p40 = scmp.eq.s32.totalorder %s18, 1
    %p41 = por %p39, %p40
    %p43 = scmp.ne.s32.totalorder %s26, %s42
    %p44 = scmp.eq.s32.totalorder %s18, 0
    %p45 = por %p43, %p44
    %s47 = sadd.s32 %s46, 1
    %p50 = scmp.eq.s32.totalorder %s12, 1
    %p51 = scmp.ne.s32.totalorder %s46, %s48
    %p52 = scmp.eq.s32.totalorder %s12, 0
    %p53 = por %p51, %p52
    %p54 = scmp.ne.s32.totalorder %s46, %s48
    %p55 = scmp.eq.s32.totalorder %s17, 1
    %p56 = por %p54, %p55
    %p57 = scmp.ne.s32.totalorder %s48, %s49
    %p58 = scmp.eq.s32.totalorder %s17, 0
    %p59 = por %p57, %p58
    %p60 = scmp.ne.s32.totalorder %s48, %s49
    %p61 = scmp.eq.s32.totalorder %s18, 1
    %p62 = por %p60, %p61
    %p64 = scmp.ne.s32.totalorder %s49, %s63
    %p65 = scmp.eq.s32.totalorder %s18, 0
    %p66 = por %p64, %p65
    %s68 = sadd.s32 %s67, 1
    %p71 = scmp.eq.s32.totalorder %s12, 1
    %p72 = scmp.ne.s32.totalorder %s67, %s69
    %p73 = scmp.eq.s32.totalorder %s12, 0
    %p74 = por %p72, %p73
    %p75 = scmp.ne.s32.totalorder %s67, %s69
    %p76 = scmp.eq.s32.totalorder %s17, 1
    %p77 = por %p75, %p76
    %p78 = scmp.ne.s32.totalorder %s69, %s70
    %p79 = scmp.eq.s32.totalorder %s17, 0
    %p80 = por %p78, %p79
    %p81 = scmp.ne.s32.totalorder %s69, %s70
    %p82 = scmp.eq.s32.totalorder %s18, 1
    %p83 = por %p81, %p82
    %p85 = scmp.ne.s32.totalorder %s70, %s84
    %p86 = scmp.eq.s32.totalorder %s18, 0
    %p87 = por %p85, %p86
    %s89 = sadd.s32 %s88, 1
    %p92 = scmp.eq.s32.totalorder %s12, 1
    %p93 = scmp.ne.s32.totalorder %s88, %s90
    %p94 = scmp.eq.s32.totalorder %s12, 0
    %p95 = por %p93, %p94
    %p96 = scmp.ne.s32.totalorder %s88, %s90
    %p97 = scmp.eq.s32.totalorder %s17, 1
    %p98 = por %p96, %p97
    %p99 = scmp.ne.s32.totalorder %s90, %s91
    %p100 = scmp.eq.s32.totalorder %s17, 0
    %p101 = por %p99, %p100
    %p102 = scmp.ne.s32.totalorder %s90, %s91
    %p103 = scmp.eq.s32.totalorder %s18, 1
    %p104 = por %p102, %p103
    %p106 = scmp.ne.s32.totalorder %s91, %s105
    %p107 = scmp.eq.s32.totalorder %s18, 0
    %p108 = por %p106, %p107
    %s110 = sadd.s32 %s109, 1
    %p113 = scmp.eq.s32.totalorder %s12, 1
    %p114 = scmp.ne.s32.totalorder %s109, %s111
    %p115 = scmp.eq.s32.totalorder %s12, 0
    %p116 = por %p114, %p115
    %p117 = scmp.ne.s32.totalorder %s109, %s111
    %p118 = scmp.eq.s32.totalorder %s17, 1
    %p119 = por %p117, %p118
    %p120 = scmp.ne.s32.totalorder %s111, %s112
    %p121 = scmp.eq.s32.totalorder %s17, 0
    %p122 = por %p120, %p121
    %p123 = scmp.ne.s32.totalorder %s111, %s112
    %p124 = scmp.eq.s32.totalorder %s18, 1
    %p125 = por %p123, %p124
    %p127 = scmp.ne.s32.totalorder %s112, %s126
    %p128 = scmp.eq.s32.totalorder %s18, 0
    %p129 = por %p127, %p128
    %s131 = sadd.s32 %s130, 1
    %p134 = scmp.eq.s32.totalorder %s12, 1
    %p135 = scmp.ne.s32.totalorder %s130, %s132
    %p136 = scmp.eq.s32.totalorder %s12, 0
    %p137 = por %p135, %p136
    %p138 = scmp.ne.s32.totalorder %s130, %s132
    %p139 = scmp.eq.s32.totalorder %s17, 1
    %p140 = por %p138, %p139
    %p141 = scmp.ne.s32.totalorder %s132, %s133
    %p142 = scmp.eq.s32.totalorder %s17, 0
    %p143 = por %p141, %p142
    %p144 = scmp.ne.s32.totalorder %s132, %s133
    %p145 = scmp.eq.s32.totalorder %s18, 1
    %p146 = por %p144, %p145
    %p148 = scmp.ne.s32.totalorder %s133, %s147
    %p149 = scmp.eq.s32.totalorder %s18, 0
    %p150 = por %p148, %p149
    %s151 = ssub.s32 %s12, %s19
    %p152 = scmp.eq.s32.totalorder %s151, 0
    %s154 = sadd.s32 %s153, 1
    %s155 = scalar_select %p152, %s153, %s154
    %p158 = pneg %p152
    %p159 = scmp.eq.s32.totalorder %s12, 1
    %p160 = por %p158, %p159
    %p161 = scmp.ne.s32.totalorder %s153, %s156
    %p162 = scmp.eq.s32.totalorder %s12, 0
    %p163 = por %p161, %p162
    %p164 = scmp.ne.s32.totalorder %s153, %s156
    %p165 = scmp.eq.s32.totalorder %s17, 1
    %p166 = por %p164, %p165
    %p167 = scmp.ne.s32.totalorder %s156, %s157
    %p168 = scmp.eq.s32.totalorder %s17, 0
    %p169 = por %p167, %p168
    %p170 = scmp.ne.s32.totalorder %s156, %s157
    %p171 = scmp.eq.s32.totalorder %s18, 1
    %p172 = por %p170, %p171
    %p174 = scmp.ne.s32.totalorder %s157, %s173
    %p175 = scmp.eq.s32.totalorder %s18, 0
    %p176 = por %p174, %p175
    %p177 = scmp.le.s32.totalorder 1, %s12
    %p178 = scmp.lt.s32.totalorder %s12, 3
    %p179 = pnand %p177, %p178
    %p180 = pneg %p179
    // Predicated region
    $region9: #{tpu_custom_call.1} parent=5 // pred_check
      _
    $region10: #{tpu_custom_call.1} parent=5 // pred_check_branch
      %182 = sbr.rel (%p179) target = $region12
    $region11: #{tpu_custom_call.1} parent=5 // pred_region
      %s183 = ssub.s32 %s12, 1
      // Predicated region
      $region13: #{tpu_custom_call.1} parent=11 // pred_check
        %p184 = pneg %p59
      $region14: #{tpu_custom_call.1} parent=11 // pred_check_branch
        %186 = sbr.rel (%p184) target = $region16
      $region15: #{tpu_custom_call.1} parent=11 // pred_region
        _
      $region16: #{tpu_custom_call.1} parent=11 // pred_fallthru
        _
      // Predicated region
      $region17: #{tpu_custom_call.1} parent=11 // pred_check
        %p187 = pneg %p80
      $region18: #{tpu_custom_call.1} parent=11 // pred_check_branch
        %189 = sbr.rel (%p187) target = $region20
      $region19: #{tpu_custom_call.1} parent=11 // pred_region
        _
      $region20: #{tpu_custom_call.1} parent=11 // pred_fallthru
        _
      // Predicated region
      $region21: #{tpu_custom_call.1} parent=11 // pred_check
        %p190 = pneg %p101
      $region22: #{tpu_custom_call.1} parent=11 // pred_check_branch
        %192 = sbr.rel (%p190) target = $region24
      $region23: #{tpu_custom_call.1} parent=11 // pred_region
        _
      $region24: #{tpu_custom_call.1} parent=11 // pred_fallthru
        _
      // Predicated region
      $region25: #{tpu_custom_call.1} parent=11 // pred_check
        %p193 = pneg %p122
      $region26: #{tpu_custom_call.1} parent=11 // pred_check_branch
        %195 = sbr.rel (%p193) target = $region28
      $region27: #{tpu_custom_call.1} parent=11 // pred_region
        _
      $region28: #{tpu_custom_call.1} parent=11 // pred_fallthru
        _
      // Predicated region
      $region29: #{tpu_custom_call.1} parent=11 // pred_check
        %p196 = pneg %p143
      $region30: #{tpu_custom_call.1} parent=11 // pred_check_branch
        %198 = sbr.rel (%p196) target = $region32
      $region31: #{tpu_custom_call.1} parent=11 // pred_region
        _
      $region32: #{tpu_custom_call.1} parent=11 // pred_fallthru
        _
    $region12: #{tpu_custom_call.1} parent=5 // pred_fallthru
      _
    %p199 = scmp.lt.s32.totalorder %s12, 2
    // Predicated region
    $region33: #{tpu_custom_call.1} parent=5 // pred_check
      %p200 = pneg %p199
    $region34: #{tpu_custom_call.1} parent=5 // pred_check_branch
      %202 = sbr.rel (%p200) target = $region36
    $region35: #{tpu_custom_call.1} parent=5 // pred_region
      // Predicated region
      $region37: #{tpu_custom_call.1} parent=35 // pred_check
        %p203 = pneg %p32
      $region38: #{tpu_custom_call.1} parent=35 // pred_check_branch
        %205 = sbr.rel (%p203) target = $region40
      $region39: #{tpu_custom_call.1} parent=35 // pred_region
        %p206 = scmp.lt.s32.totalorder %s12, 1
        %s207 = scalar_select %p206, %s12, 1
        %s208 = smul.addr %s207, 30
        %s209 = smul.addr %s208, 8
        %s210 = scalar_lea.vmem %s0, %s209
      $region40: #{tpu_custom_call.1} parent=35 // pred_fallthru
        _
    $region36: #{tpu_custom_call.1} parent=5 // pred_fallthru
      _
    %p211 = scmp.le.s32.totalorder 1, %s12
    %p212 = scmp.lt.s32.totalorder %s12, 3
    %p213 = pnand %p211, %p212
    %p214 = pneg %p213
    // Predicated region
    $region41: #{tpu_custom_call.1} parent=5 // pred_check
      _
    $region42: #{tpu_custom_call.1} parent=5 // pred_check_branch
      %216 = sbr.rel (%p213) target = $region44
    $region43: #{tpu_custom_call.1} parent=5 // pred_region
      %s217 = ssub.s32 %s12, 1
      %p218 = scmp.lt.s32.totalorder %s17, 1
      %s219 = scalar_select %p218, %s17, 1
      %s220 = smul.addr %s219, 30
      %s221 = smul.addr %s220, 8
      %s222 = scalar_lea.vmem %s0, %s221
      %p223 = pneg %p38
      %p224 = pneg %p35
      %p225 = pneg %p59
      %p226 = pneg %p56
      %p227 = pneg %p80
      %p228 = pneg %p77
      %p229 = pneg %p101
      %p230 = pneg %p98
      %p231 = pneg %p122
      %p232 = pneg %p119
      %p233 = pneg %p143
      %p234 = pneg %p140
      %p235 = pneg %p169
      %p236 = pneg %p166
      %p237 = scmp.lt.s32.totalorder %s17, 1
      %s238 = scalar_select %p237, %s17, 1
      %s239 = smul.addr %s238, 4
      %s240 = scalar_lea.vmem %s6, %s239
      %p241 = scmp.lt.s32.totalorder %s17, 1
      %s242 = scalar_select %p241, %s17, 1
      %s243 = smul.addr %s242, 30
      %s244 = smul.addr %s243, 8
      %s245 = scalar_lea.vmem %s0, %s244
      %p246 = scmp.lt.s32.totalorder %s17, 1
      %s247 = scalar_select %p246, %s17, 1
      %s248 = smul.addr %s247, 4
      %s249 = scalar_lea.vmem %s6, %s248
      %v250 = vld [vmem:[%s245] sm:$0xff]
      %v251 = vld [vmem:[%s245 + $0x8] sm:$0xff]
      %v252 = vld [vmem:[%s245 + $0x10] sm:$0xff]
      %v253 = vld [vmem:[%s245 + $0x18] sm:$0xff]
      %v254 = vld [vmem:[%s245 + $0x20] sm:$0xff]
      %v255 = vld [vmem:[%s245 + $0x28] sm:$0xff]
      %v256 = vld [vmem:[%s245 + $0x30] sm:$0xff]
      %v257 = vld [vmem:[%s245 + $0x38] sm:$0xff]
      %v258 = vld [vmem:[%s245 + $0x40] sm:$0xff]
      %v259 = vld [vmem:[%s245 + $0x48] sm:$0xff]
      %v260 = vld [vmem:[%s245 + $0x50] sm:$0xff]
      %v261 = vld [vmem:[%s245 + $0x58] sm:$0xff]
      %v262 = vld [vmem:[%s245 + $0x60] sm:$0xff]
      %v263 = vld [vmem:[%s245 + $0x68] sm:$0xff]
      %v264 = vld [vmem:[%s245 + $0x70] sm:$0xff]
      %v265 = vld [vmem:[%s245 + $0x78] sm:$0xff]
      %v266 = vld [vmem:[%s245 + $0x80] sm:$0xff]
      %v267 = vld [vmem:[%s245 + $0x88] sm:$0xff]
      %v268 = vld [vmem:[%s245 + $0x90] sm:$0xff]
      %v269 = vld [vmem:[%s245 + $0x98] sm:$0xff]
      %v270 = vld [vmem:[%s245 + $0xa0] sm:$0x3f]
      %v271 = vld [vmem:[%s245 + $0xa8] sm:$0x3f]
      %v272 = vld [vmem:[%s245 + $0xb0] sm:$0x3f]
      %v273 = vld [vmem:[%s245 + $0xb8] sm:$0x3f]
      %v274 = vld [vmem:[%s245 + $0xc0] sm:$0x3f]
      %v275 = vld [vmem:[%s245 + $0xc8] sm:$0x3f]
      %v276 = vld [vmem:[%s245 + $0xd0] sm:$0x3f]
      %v277 = vld [vmem:[%s245 + $0xd8] sm:$0x3f]
      %v278 = vld [vmem:[%s245 + $0xe0] sm:$0x3f]
      %v279 = vld [vmem:[%s245 + $0xe8] sm:$0x3f]
      %v280 = vld [vmem:[%s1] sm:$0xff]
      %v281 = vld [vmem:[%s1 + $0x8] sm:$0xff]
      %v282 = vld [vmem:[%s1 + $0x10] sm:$0xff]
      %v283 = vld [vmem:[%s1 + $0x18] sm:$0xff]
      %v284 = vld [vmem:[%s1 + $0x20] sm:$0xff]
      %v285 = vld [vmem:[%s1 + $0x28] sm:$0xff]
      %v286 = vld [vmem:[%s1 + $0x30] sm:$0xff]
      %v287 = vld [vmem:[%s1 + $0x38] sm:$0xff]
      %v288 = vld [vmem:[%s1 + $0x40] sm:$0xff]
      %v289 = vld [vmem:[%s1 + $0x48] sm:$0xff]
      %v290 = vld [vmem:[%s1 + $0x50] sm:$0xff]
      %v291 = vld [vmem:[%s1 + $0x58] sm:$0xff]
      %v292 = vld [vmem:[%s1 + $0x60] sm:$0xff]
      %v293 = vld [vmem:[%s1 + $0x68] sm:$0xff]
      %v294 = vld [vmem:[%s1 + $0x70] sm:$0xff]
      %v295 = vld [vmem:[%s1 + $0x78] sm:$0xff]
      %v296 = vld [vmem:[%s1 + $0x80] sm:$0xff]
      %v297 = vld [vmem:[%s1 + $0x88] sm:$0xff]
      %v298 = vld [vmem:[%s1 + $0x90] sm:$0xff]
      %v299 = vld [vmem:[%s1 + $0x98] sm:$0xff]
      %v300 = vld [vmem:[%s1 + $0xa0] sm:$0xff]
      %v301 = vld [vmem:[%s1 + $0xa8] sm:$0xff]
      %v302 = vld [vmem:[%s1 + $0xb0] sm:$0xff]
      %v303 = vld [vmem:[%s1 + $0xb8] sm:$0xff]
      %v304 = vld [vmem:[%s1 + $0xc0] sm:$0xff]
      %v305 = vld [vmem:[%s1 + $0xc8] sm:$0xff]
      %v306 = vld [vmem:[%s1 + $0xd0] sm:$0xff]
      %v307 = vld [vmem:[%s1 + $0xd8] sm:$0xff]
      %v308 = vld [vmem:[%s1 + $0xe0] sm:$0xff]
      %v309 = vld [vmem:[%s1 + $0xe8] sm:$0xff]
      %v310 = vld [vmem:[%s1 + $0xf0] sm:$0xff]
      %v311 = vld [vmem:[%s1 + $0xf8] sm:$0xff]
      %v312 = vld [vmem:[%s1 + $0x100] sm:$0xff]
      %v313 = vld [vmem:[%s1 + $0x108] sm:$0xff]
      %v314 = vld [vmem:[%s1 + $0x110] sm:$0xff]
      %v315 = vld [vmem:[%s1 + $0x118] sm:$0xff]
      %vm316 = vcmask 179200
      %v318 = vsel %vm316, %v280, 0
      %v321 = vsel %vm316, %v281, 0
      %v324 = vsel %vm316, %v282, 0
      %v327 = vsel %vm316, %v283, 0
      %v330 = vsel %vm316, %v284, 0
      %v333 = vsel %vm316, %v285, 0
      %v336 = vsel %vm316, %v286, 0
      %v339 = vsel %vm316, %v287, 0
      %v342 = vsel %vm316, %v288, 0
      %v345 = vsel %vm316, %v289, 0
      %v348 = vsel %vm316, %v290, 0
      %v351 = vsel %vm316, %v291, 0
      %v354 = vsel %vm316, %v292, 0
      %v357 = vsel %vm316, %v293, 0
      %v360 = vsel %vm316, %v294, 0
      %v363 = vsel %vm316, %v295, 0
      %v366 = vsel %vm316, %v296, 0
      %v369 = vsel %vm316, %v297, 0
      %v372 = vsel %vm316, %v298, 0
      %v375 = vsel %vm316, %v299, 0
      %v378 = vsel %vm316, %v300, 0
      %v381 = vsel %vm316, %v301, 0
      %v384 = vsel %vm316, %v302, 0
      %v387 = vsel %vm316, %v303, 0
      %v390 = vsel %vm316, %v304, 0
      %v393 = vsel %vm316, %v305, 0
      %v396 = vsel %vm316, %v306, 0
      %v399 = vsel %vm316, %v307, 0
      %v402 = vsel %vm316, %v308, 0
      %v405 = vsel %vm316, %v309, 0
      %v408 = vsel %vm316, %v310, 0
      %v411 = vsel %vm316, %v311, 0
      %v414 = vsel %vm316, %v312, 0
      %v417 = vsel %vm316, %v313, 0
      %v420 = vsel %vm316, %v314, 0
      %v423 = vsel %vm316, %v315, 0
      %vm425 = vcmask 1045504
      %v427 = vsel %vm425, %v270, 0
      %v430 = vsel %vm425, %v271, 0
      %v433 = vsel %vm425, %v272, 0
      %v436 = vsel %vm425, %v273, 0
      %v439 = vsel %vm425, %v274, 0
      %v442 = vsel %vm425, %v275, 0
      %v445 = vsel %vm425, %v276, 0
      %v448 = vsel %vm425, %v277, 0
      %v451 = vsel %vm425, %v278, 0
      %v454 = vsel %vm425, %v279, 0
      %456 = vmatprep.subr.mxu0 %v251
      %457 = vmatpush1.msra.mxu0 %v250
      %458 = vmatprep.subr.mxu0 %v261
      %459 = vmatpush1.msra.mxu0 %v260
      %460 = vmatprep.subr.mxu0 %v430
      %461 = vmatpush1.msra.mxu0 %v427
      %462 = vmatprep.subr.mxu0 0.0
      %463 = vmatpush1.msra.mxu0 0.0
      %464 = vmatprep.subr.mxu0 0.0
      %465 = vmatpush1.msra.mxu0 0.0
      %466 = vmatprep.subr.mxu0 0.0
      %467 = vmatpush1.msra.mxu0 0.0
      %468 = vmatprep.subr.mxu0 0.0
      %469 = vmatpush1.msra.mxu0 0.0
      %470 = vmatprep.subr.mxu0 0.0
      %471 = vmatpush1.msra.mxu0 0.0
      %472 = vmatprep.subr.mxu0 0.0
      %473 = vmatpush1.msra.mxu0 0.0
      %474 = vmatprep.subr.mxu0 0.0
      %475 = vmatpush1.msra.mxu0 0.0
      %476 = vmatprep.subr.mxu0 0.0
      %477 = vmatpush1.msra.mxu0 0.0
      %478 = vmatprep.subr.mxu0 0.0
      %479 = vmatpush1.msra.mxu0 0.0
      %480 = vmatprep.subr.mxu0 0.0
      %481 = vmatpush1.msra.mxu0 0.0
      %482 = vmatprep.subr.mxu0 0.0
      %483 = vmatpush1.msra.mxu0 0.0
      %484 = vmatprep.subr.mxu0 0.0
      %485 = vmatpush1.msra.mxu0 0.0
      %486 = vmatprep.subr.mxu0 0.0
      %487 = vmatpush1.msra.mxu0 0.0
      %488 = vmatprep.subr.mxu0 0.0
      %489 = vmatpush1.msra.mxu0 0.0
      %490 = vmatprep.subr.mxu0 0.0
      %491 = vmatpush1.msra.mxu0 0.0
      %492 = vmatprep.subr.mxu0 0.0
      %493 = vmatpush1.msra.mxu0 0.0
      %494 = vmatprep.subr.mxu0 0.0
      %495 = vmatpush1.msra.mxu0 0.0
      %496 = vmatprep.subr.mxu0 0.0
      %497 = vmatpush1.msra.mxu0 0.0
      %498 = vmatprep.subr.mxu0 0.0
      %499 = vmatpush1.msra.mxu0 0.0
      %500 = vmatprep.subr.mxu0 0.0
      %501 = vmatpush1.msra.mxu0 0.0
      %502 = vmatprep.subr.mxu0 0.0
      %503 = vmatpush1.msra.mxu0 0.0
      %504 = vmatprep.subr.mxu0 0.0
      %505 = vmatpush1.msra.mxu0 0.0
      %506 = vmatprep.subr.mxu0 0.0
      %507 = vmatpush1.msra.mxu0 0.0
      %508 = vmatprep.subr.mxu0 0.0
      %509 = vmatpush1.msra.mxu0 0.0
      %510 = vmatprep.subr.mxu0 0.0
      %511 = vmatpush1.msra.mxu0 0.0
      %512 = vmatprep.subr.mxu0 0.0
      %513 = vmatpush1.msra.mxu0 0.0
      %514 = vmatprep.subr.mxu0 0.0
      %515 = vmatpush1.msra.mxu0 0.0
      %516 = vmatprep.subr.mxu0 0.0
      %517 = vmatpush1.msra.mxu0 0.0
      %518 = vmatprep.subr.mxu0 0.0
      %519 = vmatpush1.msra.mxu0 0.0
      %520 = vmatprep.mubr.f32.mxu0 0.0
      %521 = vmatmul.mubr.f32.gmra.mrb[0].mxu0 %v318
      %v522 = vpop.f32.mrb[0].mxu0
      %v523 = vadd.f32 0.0, %v522
      %v524 = vpop.f32.mrb[0].mxu0
      %v525 = vadd.f32 0.0, %v524
      %526 = vmatprep.mubr.f32.mxu0 0.0
      %527 = vmatmul.mubr.f32.gmra.mrb[0].mxu0 %v321
      %v528 = vpop.f32.mrb[0].mxu0
      %v529 = vadd.f32 0.0, %v528
      %v530 = vpop.f32.mrb[0].mxu0
      %v531 = vadd.f32 0.0, %v530
      %532 = vmatprep.mubr.f32.mxu0 0.0
      %533 = vmatmul.mubr.f32.gmra.mrb[0].mxu0 %v324
      %v534 = vpop.f32.mrb[0].mxu0
      %v535 = vadd.f32 0.0, %v534
      %v536 = vpop.f32.mrb[0].mxu0
      %v537 = vadd.f32 0.0, %v536
      %538 = vmatprep.mubr.f32.mxu0 0.0
      %539 = vmatmul.mubr.f32.gmra.mrb[0].mxu0 %v327
      %v540 = vpop.f32.mrb[0].mxu0
      %v541 = vadd.f32 0.0, %v540
      %v542 = vpop.f32.mrb[0].mxu0
      %v543 = vadd.f32 0.0, %v542
      %544 = vmatprep.mubr.f32.mxu0 0.0
      %545 = vmatmul.mubr.f32.gmra.mrb[0].mxu0 %v330
      %v546 = vpop.f32.mrb[0].mxu0
      %v547 = vadd.f32 0.0, %v546
      %v548 = vpop.f32.mrb[0].mxu0
      %v549 = vadd.f32 0.0, %v548
      %550 = vmatprep.mubr.f32.mxu0 0.0
      %551 = vmatmul.mubr.f32.gmra.mrb[0].mxu0 %v333
      %v552 = vpop.f32.mrb[0].mxu0
      %v553 = vadd.f32 0.0, %v552
      %v554 = vpop.f32.mrb[0].mxu0
      %v555 = vadd.f32 0.0, %v554
      %556 = vmatprep.mubr.f32.mxu0 0.0
      %557 = vmatmul.mubr.f32.gmra.mrb[0].mxu0 %v336
      %v558 = vpop.f32.mrb[0].mxu0
      %v559 = vadd.f32 0.0, %v558
      %v560 = vpop.f32.mrb[0].mxu0
      %v561 = vadd.f32 0.0, %v560
      %562 = vmatprep.mubr.f32.mxu0 0.0
      %563 = vmatmul.mubr.f32.gmra.mrb[0].mxu0 %v339
      %v564 = vpop.f32.mrb[0].mxu0
      %v565 = vadd.f32 0.0, %v564
      %v566 = vpop.f32.mrb[0].mxu0
      %v567 = vadd.f32 0.0, %v566
      %568 = vmatprep.mubr.f32.mxu0 0.0
      %569 = vmatmul.mubr.f32.gmra.mrb[0].mxu0 %v342
      %v570 = vpop.f32.mrb[0].mxu0
      %v571 = vadd.f32 0.0, %v570
      %v572 = vpop.f32.mrb[0].mxu0
      %v573 = vadd.f32 0.0, %v572
      %574 = vmatprep.mubr.f32.mxu0 0.0
      %575 = vmatmul.mubr.f32.gmra.mrb[0].mxu0 %v345
      %v576 = vpop.f32.mrb[0].mxu0
      %v577 = vadd.f32 0.0, %v576
      %v578 = vpop.f32.mrb[0].mxu0
      %v579 = vadd.f32 0.0, %v578
      %580 = vmatprep.mubr.f32.mxu0 0.0
      %581 = vmatmul.mubr.f32.gmra.mrb[0].mxu0 %v348
      %v582 = vpop.f32.mrb[0].mxu0
      %v583 = vadd.f32 0.0, %v582
      %v584 = vpop.f32.mrb[0].mxu0
      %v585 = vadd.f32 0.0, %v584
      %586 = vmatprep.mubr.f32.mxu0 0.0
      %587 = vmatmul.mubr.f32.gmra.mrb[0].mxu0 %v351
      %v588 = vpop.f32.mrb[0].mxu0
      %v589 = vadd.f32 0.0, %v588
      %v590 = vpop.f32.mrb[0].mxu0
      %v591 = vadd.f32 0.0, %v590
      %592 = vmatprep.mubr.f32.mxu0 0.0
      %593 = vmatmul.mubr.f32.gmra.mrb[0].mxu0 %v354
      %v594 = vpop.f32.mrb[0].mxu0
      %v595 = vadd.f32 0.0, %v594
      %v596 = vpop.f32.mrb[0].mxu0
      %v597 = vadd.f32 0.0, %v596
      %598 = vmatprep.mubr.f32.mxu0 0.0
      %599 = vmatmul.mubr.f32.gmra.mrb[0].mxu0 %v357
      %v600 = vpop.f32.mrb[0].mxu0
      %v601 = vadd.f32 0.0, %v600
      %v602 = vpop.f32.mrb[0].mxu0
      %v603 = vadd.f32 0.0, %v602
      %604 = vmatprep.mubr.f32.mxu0 0.0
      %605 = vmatmul.mubr.f32.gmra.mrb[0].mxu0 %v360
      %v606 = vpop.f32.mrb[0].mxu0
      %v607 = vadd.f32 0.0, %v606
      %v608 = vpop.f32.mrb[0].mxu0
      %v609 = vadd.f32 0.0, %v608
      %610 = vmatprep.mubr.f32.mxu0 0.0
      %611 = vmatmul.mubr.f32.gmra.mrb[0].mxu0 %v363
      %v612 = vpop.f32.mrb[0].mxu0
      %v613 = vadd.f32 0.0, %v612
      %v614 = vpop.f32.mrb[0].mxu0
      %v615 = vadd.f32 0.0, %v614
      %616 = vmatprep.mubr.f32.mxu0 0.0
      %617 = vmatmul.mubr.f32.gmra.mrb[0].mxu0 %v366
      %v618 = vpop.f32.mrb[0].mxu0
      %v619 = vadd.f32 0.0, %v618
      %v620 = vpop.f32.mrb[0].mxu0
      %v621 = vadd.f32 0.0, %v620
      %622 = vmatprep.mubr.f32.mxu0 0.0
      %623 = vmatmul.mubr.f32.gmra.mrb[0].mxu0 %v369
      %v624 = vpop.f32.mrb[0].mxu0
      %v625 = vadd.f32 0.0, %v624
      %v626 = vpop.f32.mrb[0].mxu0
      %v627 = vadd.f32 0.0, %v626
      %628 = vmatprep.mubr.f32.mxu0 0.0
      %629 = vmatmul.mubr.f32.gmra.mrb[0].mxu0 %v372
      %v630 = vpop.f32.mrb[0].mxu0
      %v631 = vadd.f32 0.0, %v630
      %v632 = vpop.f32.mrb[0].mxu0
      %v633 = vadd.f32 0.0, %v632
      %634 = vmatprep.mubr.f32.mxu0 0.0
      %635 = vmatmul.mubr.f32.gmra.mrb[0].mxu0 %v375
      %v636 = vpop.f32.mrb[0].mxu0
      %v637 = vadd.f32 0.0, %v636
      %v638 = vpop.f32.mrb[0].mxu0
      %v639 = vadd.f32 0.0, %v638
      %640 = vmatprep.mubr.f32.mxu0 0.0
      %641 = vmatmul.mubr.f32.gmra.mrb[0].mxu0 %v378
      %v642 = vpop.f32.mrb[0].mxu0
      %v643 = vadd.f32 0.0, %v642
      %v644 = vpop.f32.mrb[0].mxu0
      %v645 = vadd.f32 0.0, %v644
      %646 = vmatprep.mubr.f32.mxu0 0.0
      %647 = vmatmul.mubr.f32.gmra.mrb[0].mxu0 %v381
      %v648 = vpop.f32.mrb[0].mxu0
      %v649 = vadd.f32 0.0, %v648
      %v650 = vpop.f32.mrb[0].mxu0
      %v651 = vadd.f32 0.0, %v650
      %652 = vmatprep.mubr.f32.mxu0 0.0
      %653 = vmatmul.mubr.f32.gmra.mrb[0].mxu0 %v384
      %v654 = vpop.f32.mrb[0].mxu0
      %v655 = vadd.f32 0.0, %v654
      %v656 = vpop.f32.mrb[0].mxu0
      %v657 = vadd.f32 0.0, %v656
      %658 = vmatprep.mubr.f32.mxu0 0.0
      %659 = vmatmul.mubr.f32.gmra.mrb[0].mxu0 %v387
      %v660 = vpop.f32.mrb[0].mxu0
      %v661 = vadd.f32 0.0, %v660
      %v662 = vpop.f32.mrb[0].mxu0
      %v663 = vadd.f32 0.0, %v662
      %664 = vmatprep.mubr.f32.mxu0 0.0
      %665 = vmatmul.mubr.f32.gmra.mrb[0].mxu0 %v390
      %v666 = vpop.f32.mrb[0].mxu0
      %v667 = vadd.f32 0.0, %v666
      %v668 = vpop.f32.mrb[0].mxu0
      %v669 = vadd.f32 0.0, %v668
      %670 = vmatprep.mubr.f32.mxu0 0.0
      %671 = vmatmul.mubr.f32.gmra.mrb[0].mxu0 %v393
      %v672 = vpop.f32.mrb[0].mxu0
      %v673 = vadd.f32 0.0, %v672
      %v674 = vpop.f32.mrb[0].mxu0
      %v675 = vadd.f32 0.0, %v674
      %676 = vmatprep.mubr.f32.mxu0 0.0
      %677 = vmatmul.mubr.f32.gmra.mrb[0].mxu0 %v396
      %v678 = vpop.f32.mrb[0].mxu0
      %v679 = vadd.f32 0.0, %v678
      %v680 = vpop.f32.mrb[0].mxu0
      %v681 = vadd.f32 0.0, %v680
      %682 = vmatprep.mubr.f32.mxu0 0.0
      %683 = vmatmul.mubr.f32.gmra.mrb[0].mxu0 %v399
      %v684 = vpop.f32.mrb[0].mxu0
      %v685 = vadd.f32 0.0, %v684
      %v686 = vpop.f32.mrb[0].mxu0
      %v687 = vadd.f32 0.0, %v686
      %688 = vmatprep.mubr.f32.mxu0 0.0
      %689 = vmatmul.mubr.f32.gmra.mrb[0].mxu0 %v402
      %v690 = vpop.f32.mrb[0].mxu0
      %v691 = vadd.f32 0.0, %v690
      %v692 = vpop.f32.mrb[0].mxu0
      %v693 = vadd.f32 0.0, %v692
      %694 = vmatprep.mubr.f32.mxu0 0.0
      %695 = vmatmul.mubr.f32.gmra.mrb[0].mxu0 %v405
      %v696 = vpop.f32.mrb[0].mxu0
      %v697 = vadd.f32 0.0, %v696
      %v698 = vpop.f32.mrb[0].mxu0
      %v699 = vadd.f32 0.0, %v698
      %700 = vmatprep.mubr.f32.mxu0 0.0
      %701 = vmatmul.mubr.f32.gmra.mrb[0].mxu0 %v408
      %v702 = vpop.f32.mrb[0].mxu0
      %v703 = vadd.f32 0.0, %v702
      %v704 = vpop.f32.mrb[0].mxu0
      %v705 = vadd.f32 0.0, %v704
      %706 = vmatprep.mubr.f32.mxu0 0.0
      %707 = vmatmul.mubr.f32.gmra.mrb[0].mxu0 %v411
      %v708 = vpop.f32.mrb[0].mxu0
      %v709 = vadd.f32 0.0, %v708
      %v710 = vpop.f32.mrb[0].mxu0
      %v711 = vadd.f32 0.0, %v710
      %712 = vmatprep.mubr.f32.mxu0 0.0
      %713 = vmatmul.mubr.f32.gmra.mrb[0].mxu0 %v414
      %v714 = vpop.f32.mrb[0].mxu0
      %v715 = vadd.f32 0.0, %v714
      %v716 = vpop.f32.mrb[0].mxu0
      %v717 = vadd.f32 0.0, %v716
      %718 = vmatprep.mubr.f32.mxu0 0.0
      %719 = vmatmul.mubr.f32.gmra.mrb[0].mxu0 %v417
      %v720 = vpop.f32.mrb[0].mxu0
      %v721 = vadd.f32 0.0, %v720
      %v722 = vpop.f32.mrb[0].mxu0
      %v723 = vadd.f32 0.0, %v722
      %724 = vmatprep.mubr.f32.mxu0 0.0
      %725 = vmatmul.mubr.f32.gmra.mrb[0].mxu0 %v420
      %v726 = vpop.f32.mrb[0].mxu0
      %v727 = vadd.f32 0.0, %v726
      %v728 = vpop.f32.mrb[0].mxu0
      %v729 = vadd.f32 0.0, %v728
      %730 = vmatprep.mubr.f32.mxu0 0.0
      %731 = vmatmul.mubr.f32.gmra.mrb[0].mxu0 %v423
      %v732 = vpop.f32.mrb[0].mxu0
      %v733 = vadd.f32 0.0, %v732
      %v734 = vpop.f32.mrb[0].mxu0
      %v735 = vadd.f32 0.0, %v734
      %736 = vdwg.mxu0
      %737 = vmatprep.subr.mxu0 %v253
      %738 = vmatpush1.msra.mxu0 %v252
      %739 = vmatprep.subr.mxu0 %v263
      %740 = vmatpush1.msra.mxu0 %v262
      %741 = vmatprep.subr.mxu0 %v436
      %742 = vmatpush1.msra.mxu0 %v433
      %743 = vmatprep.subr.mxu0 0.0
      %744 = vmatpush1.msra.mxu0 0.0
      %745 = vmatprep.subr.mxu0 0.0
      %746 = vmatpush1.msra.mxu0 0.0
      %747 = vmatprep.subr.mxu0 0.0
      %748 = vmatpush1.msra.mxu0 0.0
      %749 = vmatprep.subr.mxu0 0.0
      %750 = vmatpush1.msra.mxu0 0.0
      %751 = vmatprep.subr.mxu0 0.0
      %752 = vmatpush1.msra.mxu0 0.0
      %753 = vmatprep.subr.mxu0 0.0
      %754 = vmatpush1.msra.mxu0 0.0
      %755 = vmatprep.subr.mxu0 0.0
      %756 = vmatpush1.msra.mxu0 0.0
      %757 = vmatprep.subr.mxu0 0.0
      %758 = vmatpush1.msra.mxu0 0.0
      %759 = vmatprep.subr.mxu0 0.0
      %760 = vmatpush1.msra.mxu0 0.0
      %761 = vmatprep.subr.mxu0 0.0
      %762 = vmatpush1.msra.mxu0 0.0
      %763 = vmatprep.subr.mxu0 0.0
      %764 = vmatpush1.msra.mxu0 0.0
      %765 = vmatprep.subr.mxu0 0.0
      %766 = vmatpush1.msra.mxu0 0.0
      %767 = vmatprep.subr.mxu0 0.0
      %768 = vmatpush1.msra.mxu0 0.0
      %769 = vmatprep.subr.mxu0 0.0
      %770 = vmatpush1.msra.mxu0 0.0
      %771 = vmatprep.subr.mxu0 0.0
      %772 = vmatpush1.msra.mxu0 0.0
      %773 = vmatprep.subr.mxu0 0.0
      %774 = vmatpush1.msra.mxu0 0.0
      %775 = vmatprep.subr.mxu0 0.0
      %776 = vmatpush1.msra.mxu0 0.0
      %777 = vmatprep.subr.mxu0 0.0
      %778 = vmatpush1.msra.mxu0 0.0
      %779 = vmatprep.subr.mxu0 0.0
      %780 = vmatpush1.msra.mxu0 0.0
      %781 = vmatprep.subr.mxu0 0.0
      %782 = vmatpush1.msra.mxu0 0.0
      %783 = vmatprep.subr.mxu0 0.0
      %784 = vmatpush1.msra.mxu0 0.0
      %785 = vmatprep.subr.mxu0 0.0
      %786 = vmatpush1.msra.mxu0 0.0
      %787 = vmatprep.subr.mxu0 0.0
      %788 = vmatpush1.msra.mxu0 0.0
      %789 = vmatprep.subr.mxu0 0.0
      %790 = vmatpush1.msra.mxu0 0.0
      %791 = vmatprep.subr.mxu0 0.0
      %792 = vmatpush1.msra.mxu0 0.0
      %793 = vmatprep.subr.mxu0 0.0
      %794 = vmatpush1.msra.mxu0 0.0
      %795 = vmatprep.subr.mxu0 0.0
      %796 = vmatpush1.msra.mxu0 0.0
      %797 = vmatprep.subr.mxu0 0.0
      %798 = vmatpush1.msra.mxu0 0.0
      %799 = vmatprep.subr.mxu0 0.0
      %800 = vmatpush1.msra.mxu0 0.0
      %801 = vmatprep.mubr.f32.mxu0 0.0
      %802 = vmatmul.mubr.f32.gmra.mrb[0].mxu0 %v318
      %v803 = vpop.f32.mrb[0].mxu0
      %v804 = vadd.f32 0.0, %v803
      %v805 = vpop.f32.mrb[0].mxu0
      %v806 = vadd.f32 0.0, %v805
      %807 = vmatprep.mubr.f32.mxu0 0.0
      %808 = vmatmul.mubr.f32.gmra.mrb[0].mxu0 %v321
      %v809 = vpop.f32.mrb[0].mxu0
      %v810 = vadd.f32 0.0, %v809
      %v811 = vpop.f32.mrb[0].mxu0
      %v812 = vadd.f32 0.0, %v811
      %813 = vmatprep.mubr.f32.mxu0 0.0
      %814 = vmatmul.mubr.f32.gmra.mrb[0].mxu0 %v324
      %v815 = vpop.f32.mrb[0].mxu0
      %v816 = vadd.f32 0.0, %v815
      %v817 = vpop.f32.mrb[0].mxu0
      %v818 = vadd.f32 0.0, %v817
      %819 = vmatprep.mubr.f32.mxu0 0.0
      %820 = vmatmul.mubr.f32.gmra.mrb[0].mxu0 %v327
      %v821 = vpop.f32.mrb[0].mxu0
      %v822 = vadd.f32 0.0, %v821
      %v823 = vpop.f32.mrb[0].mxu0
      %v824 = vadd.f32 0.0, %v823
      %825 = vmatprep.mubr.f32.mxu0 0.0
      %826 = vmatmul.mubr.f32.gmra.mrb[0].mxu0 %v330
      %v827 = vpop.f32.mrb[0].mxu0
      %v828 = vadd.f32 0.0, %v827
      %v829 = vpop.f32.mrb[0].mxu0
      %v830 = vadd.f32 0.0, %v829
      %831 = vmatprep.mubr.f32.mxu0 0.0
      %832 = vmatmul.mubr.f32.gmra.mrb[0].mxu0 %v333
      %v833 = vpop.f32.mrb[0].mxu0
      %v834 = vadd.f32 0.0, %v833
      %v835 = vpop.f32.mrb[0].mxu0
      %v836 = vadd.f32 0.0, %v835
      %837 = vmatprep.mubr.f32.mxu0 0.0
      %838 = vmatmul.mubr.f32.gmra.mrb[0].mxu0 %v336
      %v839 = vpop.f32.mrb[0].mxu0
      %v840 = vadd.f32 0.0, %v839
      %v841 = vpop.f32.mrb[0].mxu0
      %v842 = vadd.f32 0.0, %v841
      %843 = vmatprep.mubr.f32.mxu0 0.0
      %844 = vmatmul.mubr.f32.gmra.mrb[0].mxu0 %v339
      %v845 = vpop.f32.mrb[0].mxu0
      %v846 = vadd.f32 0.0, %v845
      %v847 = vpop.f32.mrb[0].mxu0
      %v848 = vadd.f32 0.0, %v847
      %849 = vmatprep.mubr.f32.mxu0 0.0
      %850 = vmatmul.mubr.f32.gmra.mrb[0].mxu0 %v342
      %v851 = vpop.f32.mrb[0].mxu0
      %v852 = vadd.f32 0.0, %v851
      %v853 = vpop.f32.mrb[0].mxu0
      %v854 = vadd.f32 0.0, %v853
      %855 = vmatprep.mubr.f32.mxu0 0.0
      %856 = vmatmul.mubr.f32.gmra.mrb[0].mxu0 %v345
      %v857 = vpop.f32.mrb[0].mxu0
      %v858 = vadd.f32 0.0, %v857
      %v859 = vpop.f32.mrb[0].mxu0
      %v860 = vadd.f32 0.0, %v859
      %861 = vmatprep.mubr.f32.mxu0 0.0
      %862 = vmatmul.mubr.f32.gmra.mrb[0].mxu0 %v348
      %v863 = vpop.f32.mrb[0].mxu0
      %v864 = vadd.f32 0.0, %v863
      %v865 = vpop.f32.mrb[0].mxu0
      %v866 = vadd.f32 0.0, %v865
      %867 = vmatprep.mubr.f32.mxu0 0.0
      %868 = vmatmul.mubr.f32.gmra.mrb[0].mxu0 %v351
      %v869 = vpop.f32.mrb[0].mxu0
      %v870 = vadd.f32 0.0, %v869
      %v871 = vpop.f32.mrb[0].mxu0
      %v872 = vadd.f32 0.0, %v871
      %873 = vmatprep.mubr.f32.mxu0 0.0
      %874 = vmatmul.mubr.f32.gmra.mrb[0].mxu0 %v354
      %v875 = vpop.f32.mrb[0].mxu0
      %v876 = vadd.f32 0.0, %v875
      %v877 = vpop.f32.mrb[0].mxu0
      %v878 = vadd.f32 0.0, %v877
      %879 = vmatprep.mubr.f32.mxu0 0.0
      %880 = vmatmul.mubr.f32.gmra.mrb[0].mxu0 %v357
      %v881 = vpop.f32.mrb[0].mxu0
      %v882 = vadd.f32 0.0, %v881
      %v883 = vpop.f32.mrb[0].mxu0
      %v884 = vadd.f32 0.0, %v883
      %885 = vmatprep.mubr.f32.mxu0 0.0
      %886 = vmatmul.mubr.f32.gmra.mrb[0].mxu0 %v360
      %v887 = vpop.f32.mrb[0].mxu0
      %v888 = vadd.f32 0.0, %v887
      %v889 = vpop.f32.mrb[0].mxu0
      %v890 = vadd.f32 0.0, %v889
      %891 = vmatprep.mubr.f32.mxu0 0.0
      %892 = vmatmul.mubr.f32.gmra.mrb[0].mxu0 %v363
      %v893 = vpop.f32.mrb[0].mxu0
      %v894 = vadd.f32 0.0, %v893
      %v895 = vpop.f32.mrb[0].mxu0
      %v896 = vadd.f32 0.0, %v895
      %897 = vmatprep.mubr.f32.mxu0 0.0
      %898 = vmatmul.mubr.f32.gmra.mrb[0].mxu0 %v366
      %v899 = vpop.f32.mrb[0].mxu0
      %v900 = vadd.f32 0.0, %v899
      %v901 = vpop.f32.mrb[0].mxu0
      %v902 = vadd.f32 0.0, %v901
      %903 = vmatprep.mubr.f32.mxu0 0.0
      %904 = vmatmul.mubr.f32.gmra.mrb[0].mxu0 %v369
      %v905 = vpop.f32.mrb[0].mxu0
      %v906 = vadd.f32 0.0, %v905
      %v907 = vpop.f32.mrb[0].mxu0
      %v908 = vadd.f32 0.0, %v907
      %909 = vmatprep.mubr.f32.mxu0 0.0
      %910 = vmatmul.mubr.f32.gmra.mrb[0].mxu0 %v372
      %v911 = vpop.f32.mrb[0].mxu0
      %v912 = vadd.f32 0.0, %v911
      %v913 = vpop.f32.mrb[0].mxu0
      %v914 = vadd.f32 0.0, %v913
      %915 = vmatprep.mubr.f32.mxu0 0.0
      %916 = vmatmul.mubr.f32.gmra.mrb[0].mxu0 %v375
      %v917 = vpop.f32.mrb[0].mxu0
      %v918 = vadd.f32 0.0, %v917
      %v919 = vpop.f32.mrb[0].mxu0
      %v920 = vadd.f32 0.0, %v919
      %921 = vmatprep.mubr.f32.mxu0 0.0
      %922 = vmatmul.mubr.f32.gmra.mrb[0].mxu0 %v378
      %v923 = vpop.f32.mrb[0].mxu0
      %v924 = vadd.f32 0.0, %v923
      %v925 = vpop.f32.mrb[0].mxu0
      %v926 = vadd.f32 0.0, %v925
      %927 = vmatprep.mubr.f32.mxu0 0.0
      %928 = vmatmul.mubr.f32.gmra.mrb[0].mxu0 %v381
      %v929 = vpop.f32.mrb[0].mxu0
      %v930 = vadd.f32 0.0, %v929
      %v931 = vpop.f32.mrb[0].mxu0
      %v932 = vadd.f32 0.0, %v931
      %933 = vmatprep.mubr.f32.mxu0 0.0
      %934 = vmatmul.mubr.f32.gmra.mrb[0].mxu0 %v384
      %v935 = vpop.f32.mrb[0].mxu0
      %v936 = vadd.f32 0.0, %v935
      %v937 = vpop.f32.mrb[0].mxu0
      %v938 = vadd.f32 0.0, %v937
      %939 = vmatprep.mubr.f32.mxu0 0.0
      %940 = vmatmul.mubr.f32.gmra.mrb[0].mxu0 %v387
      %v941 = vpop.f32.mrb[0].mxu0
      %v942 = vadd.f32 0.0, %v941
      %v943 = vpop.f32.mrb[0].mxu0
      %v944 = vadd.f32 0.0, %v943
      %945 = vmatprep.mubr.f32.mxu0 0.0
      %946 = vmatmul.mubr.f32.gmra.mrb[0].mxu0 %v390
      %v947 = vpop.f32.mrb[0].mxu0
      %v948 = vadd.f32 0.0, %v947
      %v949 = vpop.f32.mrb[0].mxu0
      %v950 = vadd.f32 0.0, %v949
      %951 = vmatprep.mubr.f32.mxu0 0.0
      %952 = vmatmul.mubr.f32.gmra.mrb[0].mxu0 %v393
      %v953 = vpop.f32.mrb[0].mxu0
      %v954 = vadd.f32 0.0, %v953
      %v955 = vpop.f32.mrb[0].mxu0
      %v956 = vadd.f32 0.0, %v955
      %957 = vmatprep.mubr.f32.mxu0 0.0
      %958 = vmatmul.mubr.f32.gmra.mrb[0].mxu0 %v396
      %v959 = vpop.f32.mrb[0].mxu0
      %v960 = vadd.f32 0.0, %v959
      %v961 = vpop.f32.mrb[0].mxu0
      %v962 = vadd.f32 0.0, %v961
      %963 = vmatprep.mubr.f32.mxu0 0.0
      %964 = vmatmul.mubr.f32.gmra.mrb[0].mxu0 %v399
      %v965 = vpop.f32.mrb[0].mxu0
      %v966 = vadd.f32 0.0, %v965
      %v967 = vpop.f32.mrb[0].mxu0
      %v968 = vadd.f32 0.0, %v967
      %969 = vmatprep.mubr.f32.mxu0 0.0
      %970 = vmatmul.mubr.f32.gmra.mrb[0].mxu0 %v402
      %v971 = vpop.f32.mrb[0].mxu0
      %v972 = vadd.f32 0.0, %v971
      %v973 = vpop.f32.mrb[0].mxu0
      %v974 = vadd.f32 0.0, %v973
      %975 = vmatprep.mubr.f32.mxu0 0.0
      %976 = vmatmul.mubr.f32.gmra.mrb[0].mxu0 %v405
      %v977 = vpop.f32.mrb[0].mxu0
      %v978 = vadd.f32 0.0, %v977
      %v979 = vpop.f32.mrb[0].mxu0
      %v980 = vadd.f32 0.0, %v979
      %981 = vmatprep.mubr.f32.mxu0 0.0
      %982 = vmatmul.mubr.f32.gmra.mrb[0].mxu0 %v408
      %v983 = vpop.f32.mrb[0].mxu0
      %v984 = vadd.f32 0.0, %v983
      %v985 = vpop.f32.mrb[0].mxu0
      %v986 = vadd.f32 0.0, %v985
      %987 = vmatprep.mubr.f32.mxu0 0.0
      %988 = vmatmul.mubr.f32.gmra.mrb[0].mxu0 %v411
      %v989 = vpop.f32.mrb[0].mxu0
      %v990 = vadd.f32 0.0, %v989
      %v991 = vpop.f32.mrb[0].mxu0
      %v992 = vadd.f32 0.0, %v991
      %993 = vmatprep.mubr.f32.mxu0 0.0
      %994 = vmatmul.mubr.f32.gmra.mrb[0].mxu0 %v414
      %v995 = vpop.f32.mrb[0].mxu0
      %v996 = vadd.f32 0.0, %v995
      %v997 = vpop.f32.mrb[0].mxu0
      %v998 = vadd.f32 0.0, %v997
      %999 = vmatprep.mubr.f32.mxu0 0.0
      %1000 = vmatmul.mubr.f32.gmra.mrb[0].mxu0 %v417
      %v1001 = vpop.f32.mrb[0].mxu0
      %v1002 = vadd.f32 0.0, %v1001
      %v1003 = vpop.f32.mrb[0].mxu0
      %v1004 = vadd.f32 0.0, %v1003
      %1005 = vmatprep.mubr.f32.mxu0 0.0
      %1006 = vmatmul.mubr.f32.gmra.mrb[0].mxu0 %v420
      %v1007 = vpop.f32.mrb[0].mxu0
      %v1008 = vadd.f32 0.0, %v1007
      %v1009 = vpop.f32.mrb[0].mxu0
      %v1010 = vadd.f32 0.0, %v1009
      %1011 = vmatprep.mubr.f32.mxu0 0.0
      %1012 = vmatmul.mubr.f32.gmra.mrb[0].mxu0 %v423
      %v1013 = vpop.f32.mrb[0].mxu0
      %v1014 = vadd.f32 0.0, %v1013
      %v1015 = vpop.f32.mrb[0].mxu0
      %v1016 = vadd.f32 0.0, %v1015
      %1017 = vdwg.mxu0
      %1018 = vmatprep.subr.mxu0 %v255
      %1019 = vmatpush1.msra.mxu0 %v254
      %1020 = vmatprep.subr.mxu0 %v265
      %1021 = vmatpush1.msra.mxu0 %v264
      %1022 = vmatprep.subr.mxu0 %v442
      %1023 = vmatpush1.msra.mxu0 %v439
      %1024 = vmatprep.subr.mxu0 0.0
      %1025 = vmatpush1.msra.mxu0 0.0
      %1026 = vmatprep.subr.mxu0 0.0
      %1027 = vmatpush1.msra.mxu0 0.0
      %1028 = vmatprep.subr.mxu0 0.0
      %1029 = vmatpush1.msra.mxu0 0.0
      %1030 = vmatprep.subr.mxu0 0.0
      %1031 = vmatpush1.msra.mxu0 0.0
      %1032 = vmatprep.subr.mxu0 0.0
      %1033 = vmatpush1.msra.mxu0 0.0
      %1034 = vmatprep.subr.mxu0 0.0
      %1035 = vmatpush1.msra.mxu0 0.0
      %1036 = vmatprep.subr.mxu0 0.0
      %1037 = vmatpush1.msra.mxu0 0.0
      %1038 = vmatprep.subr.mxu0 0.0
      %1039 = vmatpush1.msra.mxu0 0.0
      %1040 = vmatprep.subr.mxu0 0.0
      %1041 = vmatpush1.msra.mxu0 0.0
      %1042 = vmatprep.subr.mxu0 0.0
      %1043 = vmatpush1.msra.mxu0 0.0
      %1044 = vmatprep.subr.mxu0 0.0
      %1045 = vmatpush1.msra.mxu0 0.0
      %1046 = vmatprep.subr.mxu0 0.0
      %1047 = vmatpush1.msra.mxu0 0.0
      %1048 = vmatprep.subr.mxu0 0.0
      %1049 = vmatpush1.msra.mxu0 0.0
      %1050 = vmatprep.subr.mxu0 0.0
      %1051 = vmatpush1.msra.mxu0 0.0
      %1052 = vmatprep.subr.mxu0 0.0
      %1053 = vmatpush1.msra.mxu0 0.0
      %1054 = vmatprep.subr.mxu0 0.0
      %1055 = vmatpush1.msra.mxu0 0.0
      %1056 = vmatprep.subr.mxu0 0.0
      %1057 = vmatpush1.msra.mxu0 0.0
      %1058 = vmatprep.subr.mxu0 0.0
      %1059 = vmatpush1.msra.mxu0 0.0
      %1060 = vmatprep.subr.mxu0 0.0
      %1061 = vmatpush1.msra.mxu0 0.0
      %1062 = vmatprep.subr.mxu0 0.0
      %1063 = vmatpush1.msra.mxu0 0.0
      %1064 = vmatprep.subr.mxu0 0.0
      %1065 = vmatpush1.msra.mxu0 0.0
      %1066 = vmatprep.subr.mxu0 0.0
      %1067 = vmatpush1.msra.mxu0 0.0
      %1068 = vmatprep.subr.mxu0 0.0
      %1069 = vmatpush1.msra.mxu0 0.0
      %1070 = vmatprep.subr.mxu0 0.0
      %1071 = vmatpush1.msra.mxu0 0.0
      %1072 = vmatprep.subr.mxu0 0.0
      %1073 = vmatpush1.msra.mxu0 0.0
      %1074 = vmatprep.subr.mxu0 0.0
      %1075 = vmatpush1.msra.mxu0 0.0
      %1076 = vmatprep.subr.mxu0 0.0
      %1077 = vmatpush1.msra.mxu0 0.0
      %1078 = vmatprep.subr.mxu0 0.0
      %1079 = vmatpush1.msra.mxu0 0.0
      %1080 = vmatprep.subr.mxu0 0.0
      %1081 = vmatpush1.msra.mxu0 0.0
      %1082 = vmatprep.mubr.f32.mxu0 0.0
      %1083 = vmatmul.mubr.f32.gmra.mrb[0].mxu0 %v318
      %v1084 = vpop.f32.mrb[0].mxu0
      %v1085 = vadd.f32 0.0, %v1084
      %v1086 = vpop.f32.mrb[0].mxu0
      %v1087 = vadd.f32 0.0, %v1086
      %1088 = vmatprep.mubr.f32.mxu0 0.0
      %1089 = vmatmul.mubr.f32.gmra.mrb[0].mxu0 %v321
      %v1090 = vpop.f32.mrb[0].mxu0
      %v1091 = vadd.f32 0.0, %v1090
      %v1092 = vpop.f32.mrb[0].mxu0
      %v1093 = vadd.f32 0.0, %v1092
      %1094 = vmatprep.mubr.f32.mxu0 0.0
      %1095 = vmatmul.mubr.f32.gmra.mrb[0].mxu0 %v324
      %v1096 = vpop.f32.mrb[0].mxu0
      %v1097 = vadd.f32 0.0, %v1096
      %v1098 = vpop.f32.mrb[0].mxu0
      %v1099 = vadd.f32 0.0, %v1098
      %1100 = vmatprep.mubr.f32.mxu0 0.0
      %1101 = vmatmul.mubr.f32.gmra.mrb[0].mxu0 %v327
      %v1102 = vpop.f32.mrb[0].mxu0
      %v1103 = vadd.f32 0.0, %v1102
      %v1104 = vpop.f32.mrb[0].mxu0
      %v1105 = vadd.f32 0.0, %v1104
      %1106 = vmatprep.mubr.f32.mxu0 0.0
      %1107 = vmatmul.mubr.f32.gmra.mrb[0].mxu0 %v330
      %v1108 = vpop.f32.mrb[0].mxu0
      %v1109 = vadd.f32 0.0, %v1108
      %v1110 = vpop.f32.mrb[0].mxu0
      %v1111 = vadd.f32 0.0, %v1110
      %1112 = vmatprep.mubr.f32.mxu0 0.0
      %1113 = vmatmul.mubr.f32.gmra.mrb[0].mxu0 %v333
      %v1114 = vpop.f32.mrb[0].mxu0
      %v1115 = vadd.f32 0.0, %v1114
      %v1116 = vpop.f32.mrb[0].mxu0
      %v1117 = vadd.f32 0.0, %v1116
      %1118 = vmatprep.mubr.f32.mxu0 0.0
      %1119 = vmatmul.mubr.f32.gmra.mrb[0].mxu0 %v336
      %v1120 = vpop.f32.mrb[0].mxu0
      %v1121 = vadd.f32 0.0, %v1120
      %v1122 = vpop.f32.mrb[0].mxu0
      %v1123 = vadd.f32 0.0, %v1122
      %1124 = vmatprep.mubr.f32.mxu0 0.0
      %1125 = vmatmul.mubr.f32.gmra.mrb[0].mxu0 %v339
      %v1126 = vpop.f32.mrb[0].mxu0
      %v1127 = vadd.f32 0.0, %v1126
      %v1128 = vpop.f32.mrb[0].mxu0
      %v1129 = vadd.f32 0.0, %v1128
      %1130 = vmatprep.mubr.f32.mxu0 0.0
      %1131 = vmatmul.mubr.f32.gmra.mrb[0].mxu0 %v342
      %v1132 = vpop.f32.mrb[0].mxu0
      %v1133 = vadd.f32 0.0, %v1132
      %v1134 = vpop.f32.mrb[0].mxu0
      %v1135 = vadd.f32 0.0, %v1134
      %1136 = vmatprep.mubr.f32.mxu0 0.0
      %1137 = vmatmul.mubr.f32.gmra.mrb[0].mxu0 %v345
      %v1138 = vpop.f32.mrb[0].mxu0
      %v1139 = vadd.f32 0.0, %v1138
      %v1140 = vpop.f32.mrb[0].mxu0
      %v1141 = vadd.f32 0.0, %v1140
      %1142 = vmatprep.mubr.f32.mxu0 0.0
      %1143 = vmatmul.mubr.f32.gmra.mrb[0].mxu0 %v348
      %v1144 = vpop.f32.mrb[0].mxu0
      %v1145 = vadd.f32 0.0, %v1144
      %v1146 = vpop.f32.mrb[0].mxu0
      %v1147 = vadd.f32 0.0, %v1146
      %1148 = vmatprep.mubr.f32.mxu0 0.0
      %1149 = vmatmul.mubr.f32.gmra.mrb[0].mxu0 %v351
      %v1150 = vpop.f32.mrb[0].mxu0
      %v1151 = vadd.f32 0.0, %v1150
      %v1152 = vpop.f32.mrb[0].mxu0
      %v1153 = vadd.f32 0.0, %v1152
      %1154 = vmatprep.mubr.f32.mxu0 0.0
      %1155 = vmatmul.mubr.f32.gmra.mrb[0].mxu0 %v354
      %v1156 = vpop.f32.mrb[0].mxu0
      %v1157 = vadd.f32 0.0, %v1156
      %v1158 = vpop.f32.mrb[0].mxu0
      %v1159 = vadd.f32 0.0, %v1158
      %1160 = vmatprep.mubr.f32.mxu0 0.0
      %1161 = vmatmul.mubr.f32.gmra.mrb[0].mxu0 %v357
      %v1162 = vpop.f32.mrb[0].mxu0
      %v1163 = vadd.f32 0.0, %v1162
      %v1164 = vpop.f32.mrb[0].mxu0
      %v1165 = vadd.f32 0.0, %v1164
      %1166 = vmatprep.mubr.f32.mxu0 0.0
      %1167 = vmatmul.mubr.f32.gmra.mrb[0].mxu0 %v360
      %v1168 = vpop.f32.mrb[0].mxu0
      %v1169 = vadd.f32 0.0, %v1168
      %v1170 = vpop.f32.mrb[0].mxu0
      %v1171 = vadd.f32 0.0, %v1170
      %1172 = vmatprep.mubr.f32.mxu0 0.0
      %1173 = vmatmul.mubr.f32.gmra.mrb[0].mxu0 %v363
      %v1174 = vpop.f32.mrb[0].mxu0
      %v1175 = vadd.f32 0.0, %v1174
      %v1176 = vpop.f32.mrb[0].mxu0
      %v1177 = vadd.f32 0.0, %v1176
      %1178 = vmatprep.mubr.f32.mxu0 0.0
      %1179 = vmatmul.mubr.f32.gmra.mrb[0].mxu0 %v366
      %v1180 = vpop.f32.mrb[0].mxu0
      %v1181 = vadd.f32 0.0, %v1180
      %v1182 = vpop.f32.mrb[0].mxu0
      %v1183 = vadd.f32 0.0, %v1182
      %1184 = vmatprep.mubr.f32.mxu0 0.0
      %1185 = vmatmul.mubr.f32.gmra.mrb[0].mxu0 %v369
      %v1186 = vpop.f32.mrb[0].mxu0
      %v1187 = vadd.f32 0.0, %v1186
      %v1188 = vpop.f32.mrb[0].mxu0
      %v1189 = vadd.f32 0.0, %v1188
      %1190 = vmatprep.mubr.f32.mxu0 0.0
      %1191 = vmatmul.mubr.f32.gmra.mrb[0].mxu0 %v372
      %v1192 = vpop.f32.mrb[0].mxu0
      %v1193 = vadd.f32 0.0, %v1192
      %v1194 = vpop.f32.mrb[0].mxu0
      %v1195 = vadd.f32 0.0, %v1194
      %1196 = vmatprep.mubr.f32.mxu0 0.0
      %1197 = vmatmul.mubr.f32.gmra.mrb[0].mxu0 %v375
      %v1198 = vpop.f32.mrb[0].mxu0
      %v1199 = vadd.f32 0.0, %v1198
      %v1200 = vpop.f32.mrb[0].mxu0
      %v1201 = vadd.f32 0.0, %v1200
      %1202 = vmatprep.mubr.f32.mxu0 0.0
      %1203 = vmatmul.mubr.f32.gmra.mrb[0].mxu0 %v378
      %v1204 = vpop.f32.mrb[0].mxu0
      %v1205 = vadd.f32 0.0, %v1204
      %v1206 = vpop.f32.mrb[0].mxu0
      %v1207 = vadd.f32 0.0, %v1206
      %1208 = vmatprep.mubr.f32.mxu0 0.0
      %1209 = vmatmul.mubr.f32.gmra.mrb[0].mxu0 %v381
      %v1210 = vpop.f32.mrb[0].mxu0
      %v1211 = vadd.f32 0.0, %v1210
      %v1212 = vpop.f32.mrb[0].mxu0
      %v1213 = vadd.f32 0.0, %v1212
      %1214 = vmatprep.mubr.f32.mxu0 0.0
      %1215 = vmatmul.mubr.f32.gmra.mrb[0].mxu0 %v384
      %v1216 = vpop.f32.mrb[0].mxu0
      %v1217 = vadd.f32 0.0, %v1216
      %v1218 = vpop.f32.mrb[0].mxu0
      %v1219 = vadd.f32 0.0, %v1218
      %1220 = vmatprep.mubr.f32.mxu0 0.0
      %1221 = vmatmul.mubr.f32.gmra.mrb[0].mxu0 %v387
      %v1222 = vpop.f32.mrb[0].mxu0
      %v1223 = vadd.f32 0.0, %v1222
      %v1224 = vpop.f32.mrb[0].mxu0
      %v1225 = vadd.f32 0.0, %v1224
      %1226 = vmatprep.mubr.f32.mxu0 0.0
      %1227 = vmatmul.mubr.f32.gmra.mrb[0].mxu0 %v390
      %v1228 = vpop.f32.mrb[0].mxu0
      %v1229 = vadd.f32 0.0, %v1228
      %v1230 = vpop.f32.mrb[0].mxu0
      %v1231 = vadd.f32 0.0, %v1230
      %1232 = vmatprep.mubr.f32.mxu0 0.0
      %1233 = vmatmul.mubr.f32.gmra.mrb[0].mxu0 %v393
      %v1234 = vpop.f32.mrb[0].mxu0
      %v1235 = vadd.f32 0.0, %v1234
      %v1236 = vpop.f32.mrb[0].mxu0
      %v1237 = vadd.f32 0.0, %v1236
      %1238 = vmatprep.mubr.f32.mxu0 0.0
      %1239 = vmatmul.mubr.f32.gmra.mrb[0].mxu0 %v396
      %v1240 = vpop.f32.mrb[0].mxu0
      %v1241 = vadd.f32 0.0, %v1240
      %v1242 = vpop.f32.mrb[0].mxu0
      %v1243 = vadd.f32 0.0, %v1242
      %1244 = vmatprep.mubr.f32.mxu0 0.0
      %1245 = vmatmul.mubr.f32.gmra.mrb[0].mxu0 %v399
      %v1246 = vpop.f32.mrb[0].mxu0
      %v1247 = vadd.f32 0.0, %v1246
      %v1248 = vpop.f32.mrb[0].mxu0
      %v1249 = vadd.f32 0.0, %v1248
      %1250 = vmatprep.mubr.f32.mxu0 0.0
      %1251 = vmatmul.mubr.f32.gmra.mrb[0].mxu0 %v402
      %v1252 = vpop.f32.mrb[0].mxu0
      %v1253 = vadd.f32 0.0, %v1252
      %v1254 = vpop.f32.mrb[0].mxu0
      %v1255 = vadd.f32 0.0, %v1254
      %1256 = vmatprep.mubr.f32.mxu0 0.0
      %1257 = vmatmul.mubr.f32.gmra.mrb[0].mxu0 %v405
      %v1258 = vpop.f32.mrb[0].mxu0
      %v1259 = vadd.f32 0.0, %v1258
      %v1260 = vpop.f32.mrb[0].mxu0
      %v1261 = vadd.f32 0.0, %v1260
      %1262 = vmatprep.mubr.f32.mxu0 0.0
      %1263 = vmatmul.mubr.f32.gmra.mrb[0].mxu0 %v408
      %v1264 = vpop.f32.mrb[0].mxu0
      %v1265 = vadd.f32 0.0, %v1264
      %v1266 = vpop.f32.mrb[0].mxu0
      %v1267 = vadd.f32 0.0, %v1266
      %1268 = vmatprep.mubr.f32.mxu0 0.0
      %1269 = vmatmul.mubr.f32.gmra.mrb[0].mxu0 %v411
      %v1270 = vpop.f32.mrb[0].mxu0
      %v1271 = vadd.f32 0.0, %v1270
      %v1272 = vpop.f32.mrb[0].mxu0
      %v1273 = vadd.f32 0.0, %v1272
      %1274 = vmatprep.mubr.f32.mxu0 0.0
      %1275 = vmatmul.mubr.f32.gmra.mrb[0].mxu0 %v414
      %v1276 = vpop.f32.mrb[0].mxu0
      %v1277 = vadd.f32 0.0, %v1276
      %v1278 = vpop.f32.mrb[0].mxu0
      %v1279 = vadd.f32 0.0, %v1278
      %1280 = vmatprep.mubr.f32.mxu0 0.0
      %1281 = vmatmul.mubr.f32.gmra.mrb[0].mxu0 %v417
      %v1282 = vpop.f32.mrb[0].mxu0
      %v1283 = vadd.f32 0.0, %v1282
      %v1284 = vpop.f32.mrb[0].mxu0
      %v1285 = vadd.f32 0.0, %v1284
      %1286 = vmatprep.mubr.f32.mxu0 0.0
      %1287 = vmatmul.mubr.f32.gmra.mrb[0].mxu0 %v420
      %v1288 = vpop.f32.mrb[0].mxu0
      %v1289 = vadd.f32 0.0, %v1288
      %v1290 = vpop.f32.mrb[0].mxu0
      %v1291 = vadd.f32 0.0, %v1290
      %1292 = vmatprep.mubr.f32.mxu0 0.0
      %1293 = vmatmul.mubr.f32.gmra.mrb[0].mxu0 %v423
      %v1294 = vpop.f32.mrb[0].mxu0
      %v1295 = vadd.f32 0.0, %v1294
      %v1296 = vpop.f32.mrb[0].mxu0
      %v1297 = vadd.f32 0.0, %v1296
      %1298 = vdwg.mxu0
      %1299 = vmatprep.subr.mxu0 %v257
      %1300 = vmatpush1.msra.mxu0 %v256
      %1301 = vmatprep.subr.mxu0 %v267
      %1302 = vmatpush1.msra.mxu0 %v266
      %1303 = vmatprep.subr.mxu0 %v448
      %1304 = vmatpush1.msra.mxu0 %v445
      %1305 = vmatprep.subr.mxu0 0.0
      %1306 = vmatpush1.msra.mxu0 0.0
      %1307 = vmatprep.subr.mxu0 0.0
      %1308 = vmatpush1.msra.mxu0 0.0
      %1309 = vmatprep.subr.mxu0 0.0
      %1310 = vmatpush1.msra.mxu0 0.0
      %1311 = vmatprep.subr.mxu0 0.0
      %1312 = vmatpush1.msra.mxu0 0.0
      %1313 = vmatprep.subr.mxu0 0.0
      %1314 = vmatpush1.msra.mxu0 0.0
      %1315 = vmatprep.subr.mxu0 0.0
      %1316 = vmatpush1.msra.mxu0 0.0
      %1317 = vmatprep.subr.mxu0 0.0
      %1318 = vmatpush1.msra.mxu0 0.0
      %1319 = vmatprep.subr.mxu0 0.0
      %1320 = vmatpush1.msra.mxu0 0.0
      %1321 = vmatprep.subr.mxu0 0.0
      %1322 = vmatpush1.msra.mxu0 0.0
      %1323 = vmatprep.subr.mxu0 0.0
      %1324 = vmatpush1.msra.mxu0 0.0
      %1325 = vmatprep.subr.mxu0 0.0
      %1326 = vmatpush1.msra.mxu0 0.0
      %1327 = vmatprep.subr.mxu0 0.0
      %1328 = vmatpush1.msra.mxu0 0.0
      %1329 = vmatprep.subr.mxu0 0.0
      %1330 = vmatpush1.msra.mxu0 0.0
      %1331 = vmatprep.subr.mxu0 0.0
      %1332 = vmatpush1.msra.mxu0 0.0
      %1333 = vmatprep.subr.mxu0 0.0
      %1334 = vmatpush1.msra.mxu0 0.0
      %1335 = vmatprep.subr.mxu0 0.0
      %1336 = vmatpush1.msra.mxu0 0.0
      %1337 = vmatprep.subr.mxu0 0.0
      %1338 = vmatpush1.msra.mxu0 0.0
      %1339 = vmatprep.subr.mxu0 0.0
      %1340 = vmatpush1.msra.mxu0 0.0
      %1341 = vmatprep.subr.mxu0 0.0
      %1342 = vmatpush1.msra.mxu0 0.0
      %1343 = vmatprep.subr.mxu0 0.0
      %1344 = vmatpush1.msra.mxu0 0.0
      %1345 = vmatprep.subr.mxu0 0.0
      %1346 = vmatpush1.msra.mxu0 0.0
      %1347 = vmatprep.subr.mxu0 0.0
      %1348 = vmatpush1.msra.mxu0 0.0
      %1349 = vmatprep.subr.mxu0 0.0
      %1350 = vmatpush1.msra.mxu0 0.0
      %1351 = vmatprep.subr.mxu0 0.0
      %1352 = vmatpush1.msra.mxu0 0.0
      %1353 = vmatprep.subr.mxu0 0.0
      %1354 = vmatpush1.msra.mxu0 0.0
      %1355 = vmatprep.subr.mxu0 0.0
      %1356 = vmatpush1.msra.mxu0 0.0
      %1357 = vmatprep.subr.mxu0 0.0
      %1358 = vmatpush1.msra.mxu0 0.0
      %1359 = vmatprep.subr.mxu0 0.0
      %1360 = vmatpush1.msra.mxu0 0.0
      %1361 = vmatprep.subr.mxu0 0.0
      %1362 = vmatpush1.msra.mxu0 0.0
      %1363 = vmatprep.mubr.f32.mxu0 0.0
      %1364 = vmatmul.mubr.f32.gmra.mrb[0].mxu0 %v318
      %v1365 = vpop.f32.mrb[0].mxu0
      %v1366 = vadd.f32 0.0, %v1365
      %v1367 = vpop.f32.mrb[0].mxu0
      %v1368 = vadd.f32 0.0, %v1367
      %1369 = vmatprep.mubr.f32.mxu0 0.0
      %1370 = vmatmul.mubr.f32.gmra.mrb[0].mxu0 %v321
      %v1371 = vpop.f32.mrb[0].mxu0
      %v1372 = vadd.f32 0.0, %v1371
      %v1373 = vpop.f32.mrb[0].mxu0
      %v1374 = vadd.f32 0.0, %v1373
      %1375 = vmatprep.mubr.f32.mxu0 0.0
      %1376 = vmatmul.mubr.f32.gmra.mrb[0].mxu0 %v324
      %v1377 = vpop.f32.mrb[0].mxu0
      %v1378 = vadd.f32 0.0, %v1377
      %v1379 = vpop.f32.mrb[0].mxu0
      %v1380 = vadd.f32 0.0, %v1379
      %1381 = vmatprep.mubr.f32.mxu0 0.0
      %1382 = vmatmul.mubr.f32.gmra.mrb[0].mxu0 %v327
      %v1383 = vpop.f32.mrb[0].mxu0
      %v1384 = vadd.f32 0.0, %v1383
      %v1385 = vpop.f32.mrb[0].mxu0
      %v1386 = vadd.f32 0.0, %v1385
      %1387 = vmatprep.mubr.f32.mxu0 0.0
      %1388 = vmatmul.mubr.f32.gmra.mrb[0].mxu0 %v330
      %v1389 = vpop.f32.mrb[0].mxu0
      %v1390 = vadd.f32 0.0, %v1389
      %v1391 = vpop.f32.mrb[0].mxu0
      %v1392 = vadd.f32 0.0, %v1391
      %1393 = vmatprep.mubr.f32.mxu0 0.0
      %1394 = vmatmul.mubr.f32.gmra.mrb[0].mxu0 %v333
      %v1395 = vpop.f32.mrb[0].mxu0
      %v1396 = vadd.f32 0.0, %v1395
      %v1397 = vpop.f32.mrb[0].mxu0
      %v1398 = vadd.f32 0.0, %v1397
      %1399 = vmatprep.mubr.f32.mxu0 0.0
      %1400 = vmatmul.mubr.f32.gmra.mrb[0].mxu0 %v336
      %v1401 = vpop.f32.mrb[0].mxu0
      %v1402 = vadd.f32 0.0, %v1401
      %v1403 = vpop.f32.mrb[0].mxu0
      %v1404 = vadd.f32 0.0, %v1403
      %1405 = vmatprep.mubr.f32.mxu0 0.0
      %1406 = vmatmul.mubr.f32.gmra.mrb[0].mxu0 %v339
      %v1407 = vpop.f32.mrb[0].mxu0
      %v1408 = vadd.f32 0.0, %v1407
      %v1409 = vpop.f32.mrb[0].mxu0
      %v1410 = vadd.f32 0.0, %v1409
      %1411 = vmatprep.mubr.f32.mxu0 0.0
      %1412 = vmatmul.mubr.f32.gmra.mrb[0].mxu0 %v342
      %v1413 = vpop.f32.mrb[0].mxu0
      %v1414 = vadd.f32 0.0, %v1413
      %v1415 = vpop.f32.mrb[0].mxu0
      %v1416 = vadd.f32 0.0, %v1415
      %1417 = vmatprep.mubr.f32.mxu0 0.0
      %1418 = vmatmul.mubr.f32.gmra.mrb[0].mxu0 %v345
      %v1419 = vpop.f32.mrb[0].mxu0
      %v1420 = vadd.f32 0.0, %v1419
      %v1421 = vpop.f32.mrb[0].mxu0
      %v1422 = vadd.f32 0.0, %v1421
      %1423 = vmatprep.mubr.f32.mxu0 0.0
      %1424 = vmatmul.mubr.f32.gmra.mrb[0].mxu0 %v348
      %v1425 = vpop.f32.mrb[0].mxu0
      %v1426 = vadd.f32 0.0, %v1425
      %v1427 = vpop.f32.mrb[0].mxu0
      %v1428 = vadd.f32 0.0, %v1427
      %1429 = vmatprep.mubr.f32.mxu0 0.0
      %1430 = vmatmul.mubr.f32.gmra.mrb[0].mxu0 %v351
      %v1431 = vpop.f32.mrb[0].mxu0
      %v1432 = vadd.f32 0.0, %v1431
      %v1433 = vpop.f32.mrb[0].mxu0
      %v1434 = vadd.f32 0.0, %v1433
      %1435 = vmatprep.mubr.f32.mxu0 0.0
      %1436 = vmatmul.mubr.f32.gmra.mrb[0].mxu0 %v354
      %v1437 = vpop.f32.mrb[0].mxu0
      %v1438 = vadd.f32 0.0, %v1437
      %v1439 = vpop.f32.mrb[0].mxu0
      %v1440 = vadd.f32 0.0, %v1439
      %1441 = vmatprep.mubr.f32.mxu0 0.0
      %1442 = vmatmul.mubr.f32.gmra.mrb[0].mxu0 %v357
      %v1443 = vpop.f32.mrb[0].mxu0
      %v1444 = vadd.f32 0.0, %v1443
      %v1445 = vpop.f32.mrb[0].mxu0
      %v1446 = vadd.f32 0.0, %v1445
      %1447 = vmatprep.mubr.f32.mxu0 0.0
      %1448 = vmatmul.mubr.f32.gmra.mrb[0].mxu0 %v360
      %v1449 = vpop.f32.mrb[0].mxu0
      %v1450 = vadd.f32 0.0, %v1449
      %v1451 = vpop.f32.mrb[0].mxu0
      %v1452 = vadd.f32 0.0, %v1451
      %1453 = vmatprep.mubr.f32.mxu0 0.0
      %1454 = vmatmul.mubr.f32.gmra.mrb[0].mxu0 %v363
      %v1455 = vpop.f32.mrb[0].mxu0
      %v1456 = vadd.f32 0.0, %v1455
      %v1457 = vpop.f32.mrb[0].mxu0
      %v1458 = vadd.f32 0.0, %v1457
      %1459 = vmatprep.mubr.f32.mxu0 0.0
      %1460 = vmatmul.mubr.f32.gmra.mrb[0].mxu0 %v366
      %v1461 = vpop.f32.mrb[0].mxu0
      %v1462 = vadd.f32 0.0, %v1461
      %v1463 = vpop.f32.mrb[0].mxu0
      %v1464 = vadd.f32 0.0, %v1463
      %1465 = vmatprep.mubr.f32.mxu0 0.0
      %1466 = vmatmul.mubr.f32.gmra.mrb[0].mxu0 %v369
      %v1467 = vpop.f32.mrb[0].mxu0
      %v1468 = vadd.f32 0.0, %v1467
      %v1469 = vpop.f32.mrb[0].mxu0
      %v1470 = vadd.f32 0.0, %v1469
      %1471 = vmatprep.mubr.f32.mxu0 0.0
      %1472 = vmatmul.mubr.f32.gmra.mrb[0].mxu0 %v372
      %v1473 = vpop.f32.mrb[0].mxu0
      %v1474 = vadd.f32 0.0, %v1473
      %v1475 = vpop.f32.mrb[0].mxu0
      %v1476 = vadd.f32 0.0, %v1475
      %1477 = vmatprep.mubr.f32.mxu0 0.0
      %1478 = vmatmul.mubr.f32.gmra.mrb[0].mxu0 %v375
      %v1479 = vpop.f32.mrb[0].mxu0
      %v1480 = vadd.f32 0.0, %v1479
      %v1481 = vpop.f32.mrb[0].mxu0
      %v1482 = vadd.f32 0.0, %v1481
      %1483 = vmatprep.mubr.f32.mxu0 0.0
      %1484 = vmatmul.mubr.f32.gmra.mrb[0].mxu0 %v378
      %v1485 = vpop.f32.mrb[0].mxu0
      %v1486 = vadd.f32 0.0, %v1485
      %v1487 = vpop.f32.mrb[0].mxu0
      %v1488 = vadd.f32 0.0, %v1487
      %1489 = vmatprep.mubr.f32.mxu0 0.0
      %1490 = vmatmul.mubr.f32.gmra.mrb[0].mxu0 %v381
      %v1491 = vpop.f32.mrb[0].mxu0
      %v1492 = vadd.f32 0.0, %v1491
      %v1493 = vpop.f32.mrb[0].mxu0
      %v1494 = vadd.f32 0.0, %v1493
      %1495 = vmatprep.mubr.f32.mxu0 0.0
      %1496 = vmatmul.mubr.f32.gmra.mrb[0].mxu0 %v384
      %v1497 = vpop.f32.mrb[0].mxu0
      %v1498 = vadd.f32 0.0, %v1497
      %v1499 = vpop.f32.mrb[0].mxu0
      %v1500 = vadd.f32 0.0, %v1499
      %1501 = vmatprep.mubr.f32.mxu0 0.0
      %1502 = vmatmul.mubr.f32.gmra.mrb[0].mxu0 %v387
      %v1503 = vpop.f32.mrb[0].mxu0
      %v1504 = vadd.f32 0.0, %v1503
      %v1505 = vpop.f32.mrb[0].mxu0
      %v1506 = vadd.f32 0.0, %v1505
      %1507 = vmatprep.mubr.f32.mxu0 0.0
      %1508 = vmatmul.mubr.f32.gmra.mrb[0].mxu0 %v390
      %v1509 = vpop.f32.mrb[0].mxu0
      %v1510 = vadd.f32 0.0, %v1509
      %v1511 = vpop.f32.mrb[0].mxu0
      %v1512 = vadd.f32 0.0, %v1511
      %1513 = vmatprep.mubr.f32.mxu0 0.0
      %1514 = vmatmul.mubr.f32.gmra.mrb[0].mxu0 %v393
      %v1515 = vpop.f32.mrb[0].mxu0
      %v1516 = vadd.f32 0.0, %v1515
      %v1517 = vpop.f32.mrb[0].mxu0
      %v1518 = vadd.f32 0.0, %v1517
      %1519 = vmatprep.mubr.f32.mxu0 0.0
      %1520 = vmatmul.mubr.f32.gmra.mrb[0].mxu0 %v396
      %v1521 = vpop.f32.mrb[0].mxu0
      %v1522 = vadd.f32 0.0, %v1521
      %v1523 = vpop.f32.mrb[0].mxu0
      %v1524 = vadd.f32 0.0, %v1523
      %1525 = vmatprep.mubr.f32.mxu0 0.0
      %1526 = vmatmul.mubr.f32.gmra.mrb[0].mxu0 %v399
      %v1527 = vpop.f32.mrb[0].mxu0
      %v1528 = vadd.f32 0.0, %v1527
      %v1529 = vpop.f32.mrb[0].mxu0
      %v1530 = vadd.f32 0.0, %v1529
      %1531 = vmatprep.mubr.f32.mxu0 0.0
      %1532 = vmatmul.mubr.f32.gmra.mrb[0].mxu0 %v402
      %v1533 = vpop.f32.mrb[0].mxu0
      %v1534 = vadd.f32 0.0, %v1533
      %v1535 = vpop.f32.mrb[0].mxu0
      %v1536 = vadd.f32 0.0, %v1535
      %1537 = vmatprep.mubr.f32.mxu0 0.0
      %1538 = vmatmul.mubr.f32.gmra.mrb[0].mxu0 %v405
      %v1539 = vpop.f32.mrb[0].mxu0
      %v1540 = vadd.f32 0.0, %v1539
      %v1541 = vpop.f32.mrb[0].mxu0
      %v1542 = vadd.f32 0.0, %v1541
      %1543 = vmatprep.mubr.f32.mxu0 0.0
      %1544 = vmatmul.mubr.f32.gmra.mrb[0].mxu0 %v408
      %v1545 = vpop.f32.mrb[0].mxu0
      %v1546 = vadd.f32 0.0, %v1545
      %v1547 = vpop.f32.mrb[0].mxu0
      %v1548 = vadd.f32 0.0, %v1547
      %1549 = vmatprep.mubr.f32.mxu0 0.0
      %1550 = vmatmul.mubr.f32.gmra.mrb[0].mxu0 %v411
      %v1551 = vpop.f32.mrb[0].mxu0
      %v1552 = vadd.f32 0.0, %v1551
      %v1553 = vpop.f32.mrb[0].mxu0
      %v1554 = vadd.f32 0.0, %v1553
      %1555 = vmatprep.mubr.f32.mxu0 0.0
      %1556 = vmatmul.mubr.f32.gmra.mrb[0].mxu0 %v414
      %v1557 = vpop.f32.mrb[0].mxu0
      %v1558 = vadd.f32 0.0, %v1557
      %v1559 = vpop.f32.mrb[0].mxu0
      %v1560 = vadd.f32 0.0, %v1559
      %1561 = vmatprep.mubr.f32.mxu0 0.0
      %1562 = vmatmul.mubr.f32.gmra.mrb[0].mxu0 %v417
      %v1563 = vpop.f32.mrb[0].mxu0
      %v1564 = vadd.f32 0.0, %v1563
      %v1565 = vpop.f32.mrb[0].mxu0
      %v1566 = vadd.f32 0.0, %v1565
      %1567 = vmatprep.mubr.f32.mxu0 0.0
      %1568 = vmatmul.mubr.f32.gmra.mrb[0].mxu0 %v420
      %v1569 = vpop.f32.mrb[0].mxu0
      %v1570 = vadd.f32 0.0, %v1569
      %v1571 = vpop.f32.mrb[0].mxu0
      %v1572 = vadd.f32 0.0, %v1571
      %1573 = vmatprep.mubr.f32.mxu0 0.0
      %1574 = vmatmul.mubr.f32.gmra.mrb[0].mxu0 %v423
      %v1575 = vpop.f32.mrb[0].mxu0
      %v1576 = vadd.f32 0.0, %v1575
      %v1577 = vpop.f32.mrb[0].mxu0
      %v1578 = vadd.f32 0.0, %v1577
      %1579 = vdwg.mxu0
      %1580 = vmatprep.subr.mxu0 %v259
      %1581 = vmatpush1.msra.mxu0 %v258
      %1582 = vmatprep.subr.mxu0 %v269
      %1583 = vmatpush1.msra.mxu0 %v268
      %1584 = vmatprep.subr.mxu0 %v454
      %1585 = vmatpush1.msra.mxu0 %v451
      %1586 = vmatprep.subr.mxu0 0.0
      %1587 = vmatpush1.msra.mxu0 0.0
      %1588 = vmatprep.subr.mxu0 0.0
      %1589 = vmatpush1.msra.mxu0 0.0
      %1590 = vmatprep.subr.mxu0 0.0
      %1591 = vmatpush1.msra.mxu0 0.0
      %1592 = vmatprep.subr.mxu0 0.0
      %1593 = vmatpush1.msra.mxu0 0.0
      %1594 = vmatprep.subr.mxu0 0.0
      %1595 = vmatpush1.msra.mxu0 0.0
      %1596 = vmatprep.subr.mxu0 0.0
      %1597 = vmatpush1.msra.mxu0 0.0
      %1598 = vmatprep.subr.mxu0 0.0
      %1599 = vmatpush1.msra.mxu0 0.0
      %1600 = vmatprep.subr.mxu0 0.0
      %1601 = vmatpush1.msra.mxu0 0.0
      %1602 = vmatprep.subr.mxu0 0.0
      %1603 = vmatpush1.msra.mxu0 0.0
      %1604 = vmatprep.subr.mxu0 0.0
      %1605 = vmatpush1.msra.mxu0 0.0
      %1606 = vmatprep.subr.mxu0 0.0
      %1607 = vmatpush1.msra.mxu0 0.0
      %1608 = vmatprep.subr.mxu0 0.0
      %1609 = vmatpush1.msra.mxu0 0.0
      %1610 = vmatprep.subr.mxu0 0.0
      %1611 = vmatpush1.msra.mxu0 0.0
      %1612 = vmatprep.subr.mxu0 0.0
      %1613 = vmatpush1.msra.mxu0 0.0
      %1614 = vmatprep.subr.mxu0 0.0
      %1615 = vmatpush1.msra.mxu0 0.0
      %1616 = vmatprep.subr.mxu0 0.0
      %1617 = vmatpush1.msra.mxu0 0.0
      %1618 = vmatprep.subr.mxu0 0.0
      %1619 = vmatpush1.msra.mxu0 0.0
      %1620 = vmatprep.subr.mxu0 0.0
      %1621 = vmatpush1.msra.mxu0 0.0
      %1622 = vmatprep.subr.mxu0 0.0
      %1623 = vmatpush1.msra.mxu0 0.0
      %1624 = vmatprep.subr.mxu0 0.0
      %1625 = vmatpush1.msra.mxu0 0.0
      %1626 = vmatprep.subr.mxu0 0.0
      %1627 = vmatpush1.msra.mxu0 0.0
      %1628 = vmatprep.subr.mxu0 0.0
      %1629 = vmatpush1.msra.mxu0 0.0
      %1630 = vmatprep.subr.mxu0 0.0
      %1631 = vmatpush1.msra.mxu0 0.0
      %1632 = vmatprep.subr.mxu0 0.0
      %1633 = vmatpush1.msra.mxu0 0.0
      %1634 = vmatprep.subr.mxu0 0.0
      %1635 = vmatpush1.msra.mxu0 0.0
      %1636 = vmatprep.subr.mxu0 0.0
      %1637 = vmatpush1.msra.mxu0 0.0
      %1638 = vmatprep.subr.mxu0 0.0
      %1639 = vmatpush1.msra.mxu0 0.0
      %1640 = vmatprep.subr.mxu0 0.0
      %1641 = vmatpush1.msra.mxu0 0.0
      %1642 = vmatprep.subr.mxu0 0.0
      %1643 = vmatpush1.msra.mxu0 0.0
      %1644 = vmatprep.mubr.f32.mxu0 0.0
      %1645 = vmatmul.mubr.f32.gmra.mrb[0].mxu0 %v318
      %v1646 = vpop.f32.mrb[0].mxu0
      %v1647 = vadd.f32 0.0, %v1646
      %v1648 = vpop.f32.mrb[0].mxu0
      %v1649 = vadd.f32 0.0, %v1648
      %1650 = vmatprep.mubr.f32.mxu0 0.0
      %1651 = vmatmul.mubr.f32.gmra.mrb[0].mxu0 %v321
      %v1652 = vpop.f32.mrb[0].mxu0
      %v1653 = vadd.f32 0.0, %v1652
      %v1654 = vpop.f32.mrb[0].mxu0
      %v1655 = vadd.f32 0.0, %v1654
      %1656 = vmatprep.mubr.f32.mxu0 0.0
      %1657 = vmatmul.mubr.f32.gmra.mrb[0].mxu0 %v324
      %v1658 = vpop.f32.mrb[0].mxu0
      %v1659 = vadd.f32 0.0, %v1658
      %v1660 = vpop.f32.mrb[0].mxu0
      %v1661 = vadd.f32 0.0, %v1660
      %1662 = vmatprep.mubr.f32.mxu0 0.0
      %1663 = vmatmul.mubr.f32.gmra.mrb[0].mxu0 %v327
      %v1664 = vpop.f32.mrb[0].mxu0
      %v1665 = vadd.f32 0.0, %v1664
      %v1666 = vpop.f32.mrb[0].mxu0
      %v1667 = vadd.f32 0.0, %v1666
      %1668 = vmatprep.mubr.f32.mxu0 0.0
      %1669 = vmatmul.mubr.f32.gmra.mrb[0].mxu0 %v330
      %v1670 = vpop.f32.mrb[0].mxu0
      %v1671 = vadd.f32 0.0, %v1670
      %v1672 = vpop.f32.mrb[0].mxu0
      %v1673 = vadd.f32 0.0, %v1672
      %1674 = vmatprep.mubr.f32.mxu0 0.0
      %1675 = vmatmul.mubr.f32.gmra.mrb[0].mxu0 %v333
      %v1676 = vpop.f32.mrb[0].mxu0
      %v1677 = vadd.f32 0.0, %v1676
      %v1678 = vpop.f32.mrb[0].mxu0
      %v1679 = vadd.f32 0.0, %v1678
      %1680 = vmatprep.mubr.f32.mxu0 0.0
      %1681 = vmatmul.mubr.f32.gmra.mrb[0].mxu0 %v336
      %v1682 = vpop.f32.mrb[0].mxu0
      %v1683 = vadd.f32 0.0, %v1682
      %v1684 = vpop.f32.mrb[0].mxu0
      %v1685 = vadd.f32 0.0, %v1684
      %1686 = vmatprep.mubr.f32.mxu0 0.0
      %1687 = vmatmul.mubr.f32.gmra.mrb[0].mxu0 %v339
      %v1688 = vpop.f32.mrb[0].mxu0
      %v1689 = vadd.f32 0.0, %v1688
      %v1690 = vpop.f32.mrb[0].mxu0
      %v1691 = vadd.f32 0.0, %v1690
      %1692 = vmatprep.mubr.f32.mxu0 0.0
      %1693 = vmatmul.mubr.f32.gmra.mrb[0].mxu0 %v342
      %v1694 = vpop.f32.mrb[0].mxu0
      %v1695 = vadd.f32 0.0, %v1694
      %v1696 = vpop.f32.mrb[0].mxu0
      %v1697 = vadd.f32 0.0, %v1696
      %1698 = vmatprep.mubr.f32.mxu0 0.0
      %1699 = vmatmul.mubr.f32.gmra.mrb[0].mxu0 %v345
      %v1700 = vpop.f32.mrb[0].mxu0
      %v1701 = vadd.f32 0.0, %v1700
      %v1702 = vpop.f32.mrb[0].mxu0
      %v1703 = vadd.f32 0.0, %v1702
      %1704 = vmatprep.mubr.f32.mxu0 0.0
      %1705 = vmatmul.mubr.f32.gmra.mrb[0].mxu0 %v348
      %v1706 = vpop.f32.mrb[0].mxu0
      %v1707 = vadd.f32 0.0, %v1706
      %v1708 = vpop.f32.mrb[0].mxu0
      %v1709 = vadd.f32 0.0, %v1708
      %1710 = vmatprep.mubr.f32.mxu0 0.0
      %1711 = vmatmul.mubr.f32.gmra.mrb[0].mxu0 %v351
      %v1712 = vpop.f32.mrb[0].mxu0
      %v1713 = vadd.f32 0.0, %v1712
      %v1714 = vpop.f32.mrb[0].mxu0
      %v1715 = vadd.f32 0.0, %v1714
      %1716 = vmatprep.mubr.f32.mxu0 0.0
      %1717 = vmatmul.mubr.f32.gmra.mrb[0].mxu0 %v354
      %v1718 = vpop.f32.mrb[0].mxu0
      %v1719 = vadd.f32 0.0, %v1718
      %v1720 = vpop.f32.mrb[0].mxu0
      %v1721 = vadd.f32 0.0, %v1720
      %1722 = vmatprep.mubr.f32.mxu0 0.0
      %1723 = vmatmul.mubr.f32.gmra.mrb[0].mxu0 %v357
      %v1724 = vpop.f32.mrb[0].mxu0
      %v1725 = vadd.f32 0.0, %v1724
      %v1726 = vpop.f32.mrb[0].mxu0
      %v1727 = vadd.f32 0.0, %v1726
      %1728 = vmatprep.mubr.f32.mxu0 0.0
      %1729 = vmatmul.mubr.f32.gmra.mrb[0].mxu0 %v360
      %v1730 = vpop.f32.mrb[0].mxu0
      %v1731 = vadd.f32 0.0, %v1730
      %v1732 = vpop.f32.mrb[0].mxu0
      %v1733 = vadd.f32 0.0, %v1732
      %1734 = vmatprep.mubr.f32.mxu0 0.0
      %1735 = vmatmul.mubr.f32.gmra.mrb[0].mxu0 %v363
      %v1736 = vpop.f32.mrb[0].mxu0
      %v1737 = vadd.f32 0.0, %v1736
      %v1738 = vpop.f32.mrb[0].mxu0
      %v1739 = vadd.f32 0.0, %v1738
      %1740 = vmatprep.mubr.f32.mxu0 0.0
      %1741 = vmatmul.mubr.f32.gmra.mrb[0].mxu0 %v366
      %v1742 = vpop.f32.mrb[0].mxu0
      %v1743 = vadd.f32 0.0, %v1742
      %v1744 = vpop.f32.mrb[0].mxu0
      %v1745 = vadd.f32 0.0, %v1744
      %1746 = vmatprep.mubr.f32.mxu0 0.0
      %1747 = vmatmul.mubr.f32.gmra.mrb[0].mxu0 %v369
      %v1748 = vpop.f32.mrb[0].mxu0
      %v1749 = vadd.f32 0.0, %v1748
      %v1750 = vpop.f32.mrb[0].mxu0
      %v1751 = vadd.f32 0.0, %v1750
      %1752 = vmatprep.mubr.f32.mxu0 0.0
      %1753 = vmatmul.mubr.f32.gmra.mrb[0].mxu0 %v372
      %v1754 = vpop.f32.mrb[0].mxu0
      %v1755 = vadd.f32 0.0, %v1754
      %v1756 = vpop.f32.mrb[0].mxu0
      %v1757 = vadd.f32 0.0, %v1756
      %1758 = vmatprep.mubr.f32.mxu0 0.0
      %1759 = vmatmul.mubr.f32.gmra.mrb[0].mxu0 %v375
      %v1760 = vpop.f32.mrb[0].mxu0
      %v1761 = vadd.f32 0.0, %v1760
      %v1762 = vpop.f32.mrb[0].mxu0
      %v1763 = vadd.f32 0.0, %v1762
      %1764 = vmatprep.mubr.f32.mxu0 0.0
      %1765 = vmatmul.mubr.f32.gmra.mrb[0].mxu0 %v378
      %v1766 = vpop.f32.mrb[0].mxu0
      %v1767 = vadd.f32 0.0, %v1766
      %v1768 = vpop.f32.mrb[0].mxu0
      %v1769 = vadd.f32 0.0, %v1768
      %1770 = vmatprep.mubr.f32.mxu0 0.0
      %1771 = vmatmul.mubr.f32.gmra.mrb[0].mxu0 %v381
      %v1772 = vpop.f32.mrb[0].mxu0
      %v1773 = vadd.f32 0.0, %v1772
      %v1774 = vpop.f32.mrb[0].mxu0
      %v1775 = vadd.f32 0.0, %v1774
      %1776 = vmatprep.mubr.f32.mxu0 0.0
      %1777 = vmatmul.mubr.f32.gmra.mrb[0].mxu0 %v384
      %v1778 = vpop.f32.mrb[0].mxu0
      %v1779 = vadd.f32 0.0, %v1778
      %v1780 = vpop.f32.mrb[0].mxu0
      %v1781 = vadd.f32 0.0, %v1780
      %1782 = vmatprep.mubr.f32.mxu0 0.0
      %1783 = vmatmul.mubr.f32.gmra.mrb[0].mxu0 %v387
      %v1784 = vpop.f32.mrb[0].mxu0
      %v1785 = vadd.f32 0.0, %v1784
      %v1786 = vpop.f32.mrb[0].mxu0
      %v1787 = vadd.f32 0.0, %v1786
      %1788 = vmatprep.mubr.f32.mxu0 0.0
      %1789 = vmatmul.mubr.f32.gmra.mrb[0].mxu0 %v390
      %v1790 = vpop.f32.mrb[0].mxu0
      %v1791 = vadd.f32 0.0, %v1790
      %v1792 = vpop.f32.mrb[0].mxu0
      %v1793 = vadd.f32 0.0, %v1792
      %1794 = vmatprep.mubr.f32.mxu0 0.0
      %1795 = vmatmul.mubr.f32.gmra.mrb[0].mxu0 %v393
      %v1796 = vpop.f32.mrb[0].mxu0
      %v1797 = vadd.f32 0.0, %v1796
      %v1798 = vpop.f32.mrb[0].mxu0
      %v1799 = vadd.f32 0.0, %v1798
      %1800 = vmatprep.mubr.f32.mxu0 0.0
      %1801 = vmatmul.mubr.f32.gmra.mrb[0].mxu0 %v396
      %v1802 = vpop.f32.mrb[0].mxu0
      %v1803 = vadd.f32 0.0, %v1802
      %v1804 = vpop.f32.mrb[0].mxu0
      %v1805 = vadd.f32 0.0, %v1804
      %1806 = vmatprep.mubr.f32.mxu0 0.0
      %1807 = vmatmul.mubr.f32.gmra.mrb[0].mxu0 %v399
      %v1808 = vpop.f32.mrb[0].mxu0
      %v1809 = vadd.f32 0.0, %v1808
      %v1810 = vpop.f32.mrb[0].mxu0
      %v1811 = vadd.f32 0.0, %v1810
      %1812 = vmatprep.mubr.f32.mxu0 0.0
      %1813 = vmatmul.mubr.f32.gmra.mrb[0].mxu0 %v402
      %v1814 = vpop.f32.mrb[0].mxu0
      %v1815 = vadd.f32 0.0, %v1814
      %v1816 = vpop.f32.mrb[0].mxu0
      %v1817 = vadd.f32 0.0, %v1816
      %1818 = vmatprep.mubr.f32.mxu0 0.0
      %1819 = vmatmul.mubr.f32.gmra.mrb[0].mxu0 %v405
      %v1820 = vpop.f32.mrb[0].mxu0
      %v1821 = vadd.f32 0.0, %v1820
      %v1822 = vpop.f32.mrb[0].mxu0
      %v1823 = vadd.f32 0.0, %v1822
      %1824 = vmatprep.mubr.f32.mxu0 0.0
      %1825 = vmatmul.mubr.f32.gmra.mrb[0].mxu0 %v408
      %v1826 = vpop.f32.mrb[0].mxu0
      %v1827 = vadd.f32 0.0, %v1826
      %v1828 = vpop.f32.mrb[0].mxu0
      %v1829 = vadd.f32 0.0, %v1828
      %1830 = vmatprep.mubr.f32.mxu0 0.0
      %1831 = vmatmul.mubr.f32.gmra.mrb[0].mxu0 %v411
      %v1832 = vpop.f32.mrb[0].mxu0
      %v1833 = vadd.f32 0.0, %v1832
      %v1834 = vpop.f32.mrb[0].mxu0
      %v1835 = vadd.f32 0.0, %v1834
      %1836 = vmatprep.mubr.f32.mxu0 0.0
      %1837 = vmatmul.mubr.f32.gmra.mrb[0].mxu0 %v414
      %v1838 = vpop.f32.mrb[0].mxu0
      %v1839 = vadd.f32 0.0, %v1838
      %v1840 = vpop.f32.mrb[0].mxu0
      %v1841 = vadd.f32 0.0, %v1840
      %1842 = vmatprep.mubr.f32.mxu0 0.0
      %1843 = vmatmul.mubr.f32.gmra.mrb[0].mxu0 %v417
      %v1844 = vpop.f32.mrb[0].mxu0
      %v1845 = vadd.f32 0.0, %v1844
      %v1846 = vpop.f32.mrb[0].mxu0
      %v1847 = vadd.f32 0.0, %v1846
      %1848 = vmatprep.mubr.f32.mxu0 0.0
      %1849 = vmatmul.mubr.f32.gmra.mrb[0].mxu0 %v420
      %v1850 = vpop.f32.mrb[0].mxu0
      %v1851 = vadd.f32 0.0, %v1850
      %v1852 = vpop.f32.mrb[0].mxu0
      %v1853 = vadd.f32 0.0, %v1852
      %1854 = vmatprep.mubr.f32.mxu0 0.0
      %1855 = vmatmul.mubr.f32.gmra.mrb[0].mxu0 %v423
      %v1856 = vpop.f32.mrb[0].mxu0
      %v1857 = vadd.f32 0.0, %v1856
      %v1858 = vpop.f32.mrb[0].mxu0
      %v1859 = vadd.f32 0.0, %v1858
      %1860 = vdwg.mxu0
      %1861 = vrot.lane.b32.xlu0 %v541, 127
      %v1862 = vpop.permute.xlu0 %1861
      %1863 = vrot.lane.b32.xlu0 %v547, 127
      %v1864 = vpop.permute.xlu0 %1863
      %1865 = vrot.lane.b32.xlu0 %v553, 127
      %v1866 = vpop.permute.xlu0 %1865
      %1867 = vrot.lane.b32.xlu0 %v543, 127
      %v1868 = vpop.permute.xlu0 %1867
      %1869 = vrot.lane.b32.xlu0 %v549, 127
      %v1870 = vpop.permute.xlu0 %1869
      %1871 = vrot.lane.b32.xlu0 %v555, 127
      %v1872 = vpop.permute.xlu0 %1871
      %1873 = vrot.lane.b32.xlu0 %v822, 127
      %v1874 = vpop.permute.xlu0 %1873
      %1875 = vrot.lane.b32.xlu0 %v828, 127
      %v1876 = vpop.permute.xlu0 %1875
      %1877 = vrot.lane.b32.xlu0 %v834, 127
      %v1878 = vpop.permute.xlu0 %1877
      %1879 = vrot.lane.b32.xlu0 %v824, 127
      %v1880 = vpop.permute.xlu0 %1879
      %1881 = vrot.lane.b32.xlu0 %v830, 127
      %v1882 = vpop.permute.xlu0 %1881
      %1883 = vrot.lane.b32.xlu0 %v836, 127
      %v1884 = vpop.permute.xlu0 %1883
      %1885 = vrot.lane.b32.xlu0 %v1103, 127
      %v1886 = vpop.permute.xlu0 %1885
      %1887 = vrot.lane.b32.xlu0 %v1109, 127
      %v1888 = vpop.permute.xlu0 %1887
      %1889 = vrot.lane.b32.xlu0 %v1115, 127
      %v1890 = vpop.permute.xlu0 %1889
      %1891 = vrot.lane.b32.xlu0 %v1105, 127
      %v1892 = vpop.permute.xlu0 %1891
      %1893 = vrot.lane.b32.xlu0 %v1111, 127
      %v1894 = vpop.permute.xlu0 %1893
      %1895 = vrot.lane.b32.xlu0 %v1117, 127
      %v1896 = vpop.permute.xlu0 %1895
      %1897 = vrot.lane.b32.xlu0 %v1384, 127
      %v1898 = vpop.permute.xlu0 %1897
      %1899 = vrot.lane.b32.xlu0 %v1390, 127
      %v1900 = vpop.permute.xlu0 %1899
      %1901 = vrot.lane.b32.xlu0 %v1396, 127
      %v1902 = vpop.permute.xlu0 %1901
      %1903 = vrot.lane.b32.xlu0 %v1386, 127
      %v1904 = vpop.permute.xlu0 %1903
      %1905 = vrot.lane.b32.xlu0 %v1392, 127
      %v1906 = vpop.permute.xlu0 %1905
      %1907 = vrot.lane.b32.xlu0 %v1398, 127
      %v1908 = vpop.permute.xlu0 %1907
      %1909 = vrot.lane.b32.xlu0 %v1665, 127
      %v1910 = vpop.permute.xlu0 %1909
      %1911 = vrot.lane.b32.xlu0 %v1671, 127
      %v1912 = vpop.permute.xlu0 %1911
      %1913 = vrot.lane.b32.xlu0 %v1677, 127
      %v1914 = vpop.permute.xlu0 %1913
      %1915 = vrot.lane.b32.xlu0 %v1667, 127
      %v1916 = vpop.permute.xlu0 %1915
      %1917 = vrot.lane.b32.xlu0 %v1673, 127
      %v1918 = vpop.permute.xlu0 %1917
      %1919 = vrot.lane.b32.xlu0 %v1679, 127
      %v1920 = vpop.permute.xlu0 %1919
      %v1921 = vlaneseq
      %v1922 = vand.u32 %v1921, 127
      %vm1923 = vcmp.lt.s32.totalorder %v1922, 127
      %v1924 = vsel %vm1923, %v1910, %v1916
      %v1925 = vsel %vm1923, %v1912, %v1918
      %v1926 = vsel %vm1923, %v1914, %v1920
      %v1927 = vsel %vm1923, %v1904, %v1910
      %v1928 = vsel %vm1923, %v1906, %v1912
      %v1929 = vsel %vm1923, %v1908, %v1914
      %v1930 = vsel %vm1923, %v1898, %v1904
      %v1931 = vsel %vm1923, %v1900, %v1906
      %v1932 = vsel %vm1923, %v1902, %v1908
      %v1933 = vsel %vm1923, %v1892, %v1898
      %v1934 = vsel %vm1923, %v1894, %v1900
      %v1935 = vsel %vm1923, %v1896, %v1902
      %v1936 = vsel %vm1923, %v1886, %v1892
      %v1937 = vsel %vm1923, %v1888, %v1894
      %v1938 = vsel %vm1923, %v1890, %v1896
      %v1939 = vsel %vm1923, %v1880, %v1886
      %v1940 = vsel %vm1923, %v1882, %v1888
      %v1941 = vsel %vm1923, %v1884, %v1890
      %v1942 = vsel %vm1923, %v1874, %v1880
      %v1943 = vsel %vm1923, %v1876, %v1882
      %v1944 = vsel %vm1923, %v1878, %v1884
      %v1945 = vsel %vm1923, %v1868, %v1874
      %v1946 = vsel %vm1923, %v1870, %v1876
      %v1947 = vsel %vm1923, %v1872, %v1878
      %v1948 = vsel %vm1923, %v1862, %v1868
      %v1949 = vsel %vm1923, %v1864, %v1870
      %v1950 = vsel %vm1923, %v1866, %v1872
      %v1951 = vsel %vm1923, %v1916, %v1862
      %v1952 = vsel %vm1923, %v1918, %v1864
      %v1953 = vsel %vm1923, %v1920, %v1866
      %v1954 = vadd.f32 %v523, %v1948
      %v1955 = vadd.f32 %v525, %v1945
      %v1956 = vadd.f32 %v804, %v1942
      %v1957 = vadd.f32 %v806, %v1939
      %v1958 = vadd.f32 %v1085, %v1936
      %v1959 = vadd.f32 %v1087, %v1933
      %v1960 = vadd.f32 %v1366, %v1930
      %v1961 = vadd.f32 %v1368, %v1927
      %v1962 = vadd.f32 %v1647, %v1924
      %v1963 = vadd.f32 %v1649, %v1951
      %v1964 = vadd.f32 %v529, %v1949
      %v1965 = vadd.f32 %v531, %v1946
      %v1966 = vadd.f32 %v810, %v1943
      %v1967 = vadd.f32 %v812, %v1940
      %v1968 = vadd.f32 %v1091, %v1937
      %v1969 = vadd.f32 %v1093, %v1934
      %v1970 = vadd.f32 %v1372, %v1931
      %v1971 = vadd.f32 %v1374, %v1928
      %v1972 = vadd.f32 %v1653, %v1925
      %v1973 = vadd.f32 %v1655, %v1952
      %v1974 = vadd.f32 %v535, %v1950
      %v1975 = vadd.f32 %v537, %v1947
      %v1976 = vadd.f32 %v816, %v1944
      %v1977 = vadd.f32 %v818, %v1941
      %v1978 = vadd.f32 %v1097, %v1938
      %v1979 = vadd.f32 %v1099, %v1935
      %v1980 = vadd.f32 %v1378, %v1932
      %v1981 = vadd.f32 %v1380, %v1929
      %v1982 = vadd.f32 %v1659, %v1926
      %v1983 = vadd.f32 %v1661, %v1953
      %1984 = vrot.lane.b32.xlu0 %v559, 126
      %v1985 = vpop.permute.xlu0 %1984
      %1986 = vrot.lane.b32.xlu0 %v565, 126
      %v1987 = vpop.permute.xlu0 %1986
      %1988 = vrot.lane.b32.xlu0 %v571, 126
      %v1989 = vpop.permute.xlu0 %1988
      %1990 = vrot.lane.b32.xlu0 %v561, 126
      %v1991 = vpop.permute.xlu0 %1990
      %1992 = vrot.lane.b32.xlu0 %v567, 126
      %v1993 = vpop.permute.xlu0 %1992
      %1994 = vrot.lane.b32.xlu0 %v573, 126
      %v1995 = vpop.permute.xlu0 %1994
      %1996 = vrot.lane.b32.xlu0 %v840, 126
      %v1997 = vpop.permute.xlu0 %1996
      %1998 = vrot.lane.b32.xlu0 %v846, 126
      %v1999 = vpop.permute.xlu0 %1998
      %2000 = vrot.lane.b32.xlu0 %v852, 126
      %v2001 = vpop.permute.xlu0 %2000
      %2002 = vrot.lane.b32.xlu0 %v842, 126
      %v2003 = vpop.permute.xlu0 %2002
      %2004 = vrot.lane.b32.xlu0 %v848, 126
      %v2005 = vpop.permute.xlu0 %2004
      %2006 = vrot.lane.b32.xlu0 %v854, 126
      %v2007 = vpop.permute.xlu0 %2006
      %2008 = vrot.lane.b32.xlu0 %v1121, 126
      %v2009 = vpop.permute.xlu0 %2008
      %2010 = vrot.lane.b32.xlu0 %v1127, 126
      %v2011 = vpop.permute.xlu0 %2010
      %2012 = vrot.lane.b32.xlu0 %v1133, 126
      %v2013 = vpop.permute.xlu0 %2012
      %2014 = vrot.lane.b32.xlu0 %v1123, 126
      %v2015 = vpop.permute.xlu0 %2014
      %2016 = vrot.lane.b32.xlu0 %v1129, 126
      %v2017 = vpop.permute.xlu0 %2016
      %2018 = vrot.lane.b32.xlu0 %v1135, 126
      %v2019 = vpop.permute.xlu0 %2018
      %2020 = vrot.lane.b32.xlu0 %v1402, 126
      %v2021 = vpop.permute.xlu0 %2020
      %2022 = vrot.lane.b32.xlu0 %v1408, 126
      %v2023 = vpop.permute.xlu0 %2022
      %2024 = vrot.lane.b32.xlu0 %v1414, 126
      %v2025 = vpop.permute.xlu0 %2024
      %2026 = vrot.lane.b32.xlu0 %v1404, 126
      %v2027 = vpop.permute.xlu0 %2026
      %2028 = vrot.lane.b32.xlu0 %v1410, 126
      %v2029 = vpop.permute.xlu0 %2028
      %2030 = vrot.lane.b32.xlu0 %v1416, 126
      %v2031 = vpop.permute.xlu0 %2030
      %2032 = vrot.lane.b32.xlu0 %v1683, 126
      %v2033 = vpop.permute.xlu0 %2032
      %2034 = vrot.lane.b32.xlu0 %v1689, 126
      %v2035 = vpop.permute.xlu0 %2034
      %2036 = vrot.lane.b32.xlu0 %v1695, 126
      %v2037 = vpop.permute.xlu0 %2036
      %2038 = vrot.lane.b32.xlu0 %v1685, 126
      %v2039 = vpop.permute.xlu0 %2038
      %2040 = vrot.lane.b32.xlu0 %v1691, 126
      %v2041 = vpop.permute.xlu0 %2040
      %2042 = vrot.lane.b32.xlu0 %v1697, 126
      %v2043 = vpop.permute.xlu0 %2042
      %vm2044 = vcmp.lt.s32.totalorder %v1922, 126
      %v2045 = vsel %vm2044, %v2033, %v2039
      %v2046 = vsel %vm2044, %v2035, %v2041
      %v2047 = vsel %vm2044, %v2037, %v2043
      %v2048 = vsel %vm2044, %v2027, %v2033
      %v2049 = vsel %vm2044, %v2029, %v2035
      %v2050 = vsel %vm2044, %v2031, %v2037
      %v2051 = vsel %vm2044, %v2021, %v2027
      %v2052 = vsel %vm2044, %v2023, %v2029
      %v2053 = vsel %vm2044, %v2025, %v2031
      %v2054 = vsel %vm2044, %v2015, %v2021
      %v2055 = vsel %vm2044, %v2017, %v2023
      %v2056 = vsel %vm2044, %v2019, %v2025
      %v2057 = vsel %vm2044, %v2009, %v2015
      %v2058 = vsel %vm2044, %v2011, %v2017
      %v2059 = vsel %vm2044, %v2013, %v2019
      %v2060 = vsel %vm2044, %v2003, %v2009
      %v2061 = vsel %vm2044, %v2005, %v2011
      %v2062 = vsel %vm2044, %v2007, %v2013
      %v2063 = vsel %vm2044, %v1997, %v2003
      %v2064 = vsel %vm2044, %v1999, %v2005
      %v2065 = vsel %vm2044, %v2001, %v2007
      %v2066 = vsel %vm2044, %v1991, %v1997
      %v2067 = vsel %vm2044, %v1993, %v1999
      %v2068 = vsel %vm2044, %v1995, %v2001
      %v2069 = vsel %vm2044, %v1985, %v1991
      %v2070 = vsel %vm2044, %v1987, %v1993
      %v2071 = vsel %vm2044, %v1989, %v1995
      %v2072 = vsel %vm2044, %v2039, %v1985
      %v2073 = vsel %vm2044, %v2041, %v1987
      %v2074 = vsel %vm2044, %v2043, %v1989
      %v2075 = vadd.f32 %v1954, %v2069
      %v2076 = vadd.f32 %v1955, %v2066
      %v2077 = vadd.f32 %v1956, %v2063
      %v2078 = vadd.f32 %v1957, %v2060
      %v2079 = vadd.f32 %v1958, %v2057
      %v2080 = vadd.f32 %v1959, %v2054
      %v2081 = vadd.f32 %v1960, %v2051
      %v2082 = vadd.f32 %v1961, %v2048
      %v2083 = vadd.f32 %v1962, %v2045
      %v2084 = vadd.f32 %v1963, %v2072
      %v2085 = vadd.f32 %v1964, %v2070
      %v2086 = vadd.f32 %v1965, %v2067
      %v2087 = vadd.f32 %v1966, %v2064
      %v2088 = vadd.f32 %v1967, %v2061
      %v2089 = vadd.f32 %v1968, %v2058
      %v2090 = vadd.f32 %v1969, %v2055
      %v2091 = vadd.f32 %v1970, %v2052
      %v2092 = vadd.f32 %v1971, %v2049
      %v2093 = vadd.f32 %v1972, %v2046
      %v2094 = vadd.f32 %v1973, %v2073
      %v2095 = vadd.f32 %v1974, %v2071
      %v2096 = vadd.f32 %v1975, %v2068
      %v2097 = vadd.f32 %v1976, %v2065
      %v2098 = vadd.f32 %v1977, %v2062
      %v2099 = vadd.f32 %v1978, %v2059
      %v2100 = vadd.f32 %v1979, %v2056
      %v2101 = vadd.f32 %v1980, %v2053
      %v2102 = vadd.f32 %v1981, %v2050
      %v2103 = vadd.f32 %v1982, %v2047
      %v2104 = vadd.f32 %v1983, %v2074
      %2105 = vrot.lane.b32.xlu0 %v577, 125
      %v2106 = vpop.permute.xlu0 %2105
      %2107 = vrot.lane.b32.xlu0 %v583, 125
      %v2108 = vpop.permute.xlu0 %2107
      %2109 = vrot.lane.b32.xlu0 %v589, 125
      %v2110 = vpop.permute.xlu0 %2109
      %2111 = vrot.lane.b32.xlu0 %v579, 125
      %v2112 = vpop.permute.xlu0 %2111
      %2113 = vrot.lane.b32.xlu0 %v585, 125
      %v2114 = vpop.permute.xlu0 %2113
      %2115 = vrot.lane.b32.xlu0 %v591, 125
      %v2116 = vpop.permute.xlu0 %2115
      %2117 = vrot.lane.b32.xlu0 %v858, 125
      %v2118 = vpop.permute.xlu0 %2117
      %2119 = vrot.lane.b32.xlu0 %v864, 125
      %v2120 = vpop.permute.xlu0 %2119
      %2121 = vrot.lane.b32.xlu0 %v870, 125
      %v2122 = vpop.permute.xlu0 %2121
      %2123 = vrot.lane.b32.xlu0 %v860, 125
      %v2124 = vpop.permute.xlu0 %2123
      %2125 = vrot.lane.b32.xlu0 %v866, 125
      %v2126 = vpop.permute.xlu0 %2125
      %2127 = vrot.lane.b32.xlu0 %v872, 125
      %v2128 = vpop.permute.xlu0 %2127
      %2129 = vrot.lane.b32.xlu0 %v1139, 125
      %v2130 = vpop.permute.xlu0 %2129
      %2131 = vrot.lane.b32.xlu0 %v1145, 125
      %v2132 = vpop.permute.xlu0 %2131
      %2133 = vrot.lane.b32.xlu0 %v1151, 125
      %v2134 = vpop.permute.xlu0 %2133
      %2135 = vrot.lane.b32.xlu0 %v1141, 125
      %v2136 = vpop.permute.xlu0 %2135
      %2137 = vrot.lane.b32.xlu0 %v1147, 125
      %v2138 = vpop.permute.xlu0 %2137
      %2139 = vrot.lane.b32.xlu0 %v1153, 125
      %v2140 = vpop.permute.xlu0 %2139
      %2141 = vrot.lane.b32.xlu0 %v1420, 125
      %v2142 = vpop.permute.xlu0 %2141
      %2143 = vrot.lane.b32.xlu0 %v1426, 125
      %v2144 = vpop.permute.xlu0 %2143
      %2145 = vrot.lane.b32.xlu0 %v1432, 125
      %v2146 = vpop.permute.xlu0 %2145
      %2147 = vrot.lane.b32.xlu0 %v1422, 125
      %v2148 = vpop.permute.xlu0 %2147
      %2149 = vrot.lane.b32.xlu0 %v1428, 125
      %v2150 = vpop.permute.xlu0 %2149
      %2151 = vrot.lane.b32.xlu0 %v1434, 125
      %v2152 = vpop.permute.xlu0 %2151
      %2153 = vrot.lane.b32.xlu0 %v1701, 125
      %v2154 = vpop.permute.xlu0 %2153
      %2155 = vrot.lane.b32.xlu0 %v1707, 125
      %v2156 = vpop.permute.xlu0 %2155
      %2157 = vrot.lane.b32.xlu0 %v1713, 125
      %v2158 = vpop.permute.xlu0 %2157
      %2159 = vrot.lane.b32.xlu0 %v1703, 125
      %v2160 = vpop.permute.xlu0 %2159
      %2161 = vrot.lane.b32.xlu0 %v1709, 125
      %v2162 = vpop.permute.xlu0 %2161
      %2163 = vrot.lane.b32.xlu0 %v1715, 125
      %v2164 = vpop.permute.xlu0 %2163
      %vm2165 = vcmp.lt.s32.totalorder %v1922, 125
      %v2166 = vsel %vm2165, %v2154, %v2160
      %v2167 = vsel %vm2165, %v2156, %v2162
      %v2168 = vsel %vm2165, %v2158, %v2164
      %v2169 = vsel %vm2165, %v2148, %v2154
      %v2170 = vsel %vm2165, %v2150, %v2156
      %v2171 = vsel %vm2165, %v2152, %v2158
      %v2172 = vsel %vm2165, %v2142, %v2148
      %v2173 = vsel %vm2165, %v2144, %v2150
      %v2174 = vsel %vm2165, %v2146, %v2152
      %v2175 = vsel %vm2165, %v2136, %v2142
      %v2176 = vsel %vm2165, %v2138, %v2144
      %v2177 = vsel %vm2165, %v2140, %v2146
      %v2178 = vsel %vm2165, %v2130, %v2136
      %v2179 = vsel %vm2165, %v2132, %v2138
      %v2180 = vsel %vm2165, %v2134, %v2140
      %v2181 = vsel %vm2165, %v2124, %v2130
      %v2182 = vsel %vm2165, %v2126, %v2132
      %v2183 = vsel %vm2165, %v2128, %v2134
      %v2184 = vsel %vm2165, %v2118, %v2124
      %v2185 = vsel %vm2165, %v2120, %v2126
      %v2186 = vsel %vm2165, %v2122, %v2128
      %v2187 = vsel %vm2165, %v2112, %v2118
      %v2188 = vsel %vm2165, %v2114, %v2120
      %v2189 = vsel %vm2165, %v2116, %v2122
      %v2190 = vsel %vm2165, %v2106, %v2112
      %v2191 = vsel %vm2165, %v2108, %v2114
      %v2192 = vsel %vm2165, %v2110, %v2116
      %v2193 = vsel %vm2165, %v2160, %v2106
      %v2194 = vsel %vm2165, %v2162, %v2108
      %v2195 = vsel %vm2165, %v2164, %v2110
      %v2196 = vadd.f32 %v2075, %v2190
      %v2197 = vadd.f32 %v2076, %v2187
      %v2198 = vadd.f32 %v2077, %v2184
      %v2199 = vadd.f32 %v2078, %v2181
      %v2200 = vadd.f32 %v2079, %v2178
      %v2201 = vadd.f32 %v2080, %v2175
      %v2202 = vadd.f32 %v2081, %v2172
      %v2203 = vadd.f32 %v2082, %v2169
      %v2204 = vadd.f32 %v2083, %v2166
      %v2205 = vadd.f32 %v2084, %v2193
      %v2206 = vadd.f32 %v2085, %v2191
      %v2207 = vadd.f32 %v2086, %v2188
      %v2208 = vadd.f32 %v2087, %v2185
      %v2209 = vadd.f32 %v2088, %v2182
      %v2210 = vadd.f32 %v2089, %v2179
      %v2211 = vadd.f32 %v2090, %v2176
      %v2212 = vadd.f32 %v2091, %v2173
      %v2213 = vadd.f32 %v2092, %v2170
      %v2214 = vadd.f32 %v2093, %v2167
      %v2215 = vadd.f32 %v2094, %v2194
      %v2216 = vadd.f32 %v2095, %v2192
      %v2217 = vadd.f32 %v2096, %v2189
      %v2218 = vadd.f32 %v2097, %v2186
      %v2219 = vadd.f32 %v2098, %v2183
      %v2220 = vadd.f32 %v2099, %v2180
      %v2221 = vadd.f32 %v2100, %v2177
      %v2222 = vadd.f32 %v2101, %v2174
      %v2223 = vadd.f32 %v2102, %v2171
      %v2224 = vadd.f32 %v2103, %v2168
      %v2225 = vadd.f32 %v2104, %v2195
      %2226 = vrot.lane.b32.xlu0 %v595, 124
      %v2227 = vpop.permute.xlu0 %2226
      %2228 = vrot.lane.b32.xlu0 %v601, 124
      %v2229 = vpop.permute.xlu0 %2228
      %2230 = vrot.lane.b32.xlu0 %v607, 124
      %v2231 = vpop.permute.xlu0 %2230
      %2232 = vrot.lane.b32.xlu0 %v597, 124
      %v2233 = vpop.permute.xlu0 %2232
      %2234 = vrot.lane.b32.xlu0 %v603, 124
      %v2235 = vpop.permute.xlu0 %2234
      %2236 = vrot.lane.b32.xlu0 %v609, 124
      %v2237 = vpop.permute.xlu0 %2236
      %2238 = vrot.lane.b32.xlu0 %v876, 124
      %v2239 = vpop.permute.xlu0 %2238
      %2240 = vrot.lane.b32.xlu0 %v882, 124
      %v2241 = vpop.permute.xlu0 %2240
      %2242 = vrot.lane.b32.xlu0 %v888, 124
      %v2243 = vpop.permute.xlu0 %2242
      %2244 = vrot.lane.b32.xlu0 %v878, 124
      %v2245 = vpop.permute.xlu0 %2244
      %2246 = vrot.lane.b32.xlu0 %v884, 124
      %v2247 = vpop.permute.xlu0 %2246
      %2248 = vrot.lane.b32.xlu0 %v890, 124
      %v2249 = vpop.permute.xlu0 %2248
      %2250 = vrot.lane.b32.xlu0 %v1157, 124
      %v2251 = vpop.permute.xlu0 %2250
      %2252 = vrot.lane.b32.xlu0 %v1163, 124
      %v2253 = vpop.permute.xlu0 %2252
      %2254 = vrot.lane.b32.xlu0 %v1169, 124
      %v2255 = vpop.permute.xlu0 %2254
      %2256 = vrot.lane.b32.xlu0 %v1159, 124
      %v2257 = vpop.permute.xlu0 %2256
      %2258 = vrot.lane.b32.xlu0 %v1165, 124
      %v2259 = vpop.permute.xlu0 %2258
      %2260 = vrot.lane.b32.xlu0 %v1171, 124
      %v2261 = vpop.permute.xlu0 %2260
      %2262 = vrot.lane.b32.xlu0 %v1438, 124
      %v2263 = vpop.permute.xlu0 %2262
      %2264 = vrot.lane.b32.xlu0 %v1444, 124
      %v2265 = vpop.permute.xlu0 %2264
      %2266 = vrot.lane.b32.xlu0 %v1450, 124
      %v2267 = vpop.permute.xlu0 %2266
      %2268 = vrot.lane.b32.xlu0 %v1440, 124
      %v2269 = vpop.permute.xlu0 %2268
      %2270 = vrot.lane.b32.xlu0 %v1446, 124
      %v2271 = vpop.permute.xlu0 %2270
      %2272 = vrot.lane.b32.xlu0 %v1452, 124
      %v2273 = vpop.permute.xlu0 %2272
      %2274 = vrot.lane.b32.xlu0 %v1719, 124
      %v2275 = vpop.permute.xlu0 %2274
      %2276 = vrot.lane.b32.xlu0 %v1725, 124
      %v2277 = vpop.permute.xlu0 %2276
      %2278 = vrot.lane.b32.xlu0 %v1731, 124
      %v2279 = vpop.permute.xlu0 %2278
      %2280 = vrot.lane.b32.xlu0 %v1721, 124
      %v2281 = vpop.permute.xlu0 %2280
      %2282 = vrot.lane.b32.xlu0 %v1727, 124
      %v2283 = vpop.permute.xlu0 %2282
      %2284 = vrot.lane.b32.xlu0 %v1733, 124
      %v2285 = vpop.permute.xlu0 %2284
      %vm2286 = vcmp.lt.s32.totalorder %v1922, 124
      %v2287 = vsel %vm2286, %v2275, %v2281
      %v2288 = vsel %vm2286, %v2277, %v2283
      %v2289 = vsel %vm2286, %v2279, %v2285
      %v2290 = vsel %vm2286, %v2269, %v2275
      %v2291 = vsel %vm2286, %v2271, %v2277
      %v2292 = vsel %vm2286, %v2273, %v2279
      %v2293 = vsel %vm2286, %v2263, %v2269
      %v2294 = vsel %vm2286, %v2265, %v2271
      %v2295 = vsel %vm2286, %v2267, %v2273
      %v2296 = vsel %vm2286, %v2257, %v2263
      %v2297 = vsel %vm2286, %v2259, %v2265
      %v2298 = vsel %vm2286, %v2261, %v2267
      %v2299 = vsel %vm2286, %v2251, %v2257
      %v2300 = vsel %vm2286, %v2253, %v2259
      %v2301 = vsel %vm2286, %v2255, %v2261
      %v2302 = vsel %vm2286, %v2245, %v2251
      %v2303 = vsel %vm2286, %v2247, %v2253
      %v2304 = vsel %vm2286, %v2249, %v2255
      %v2305 = vsel %vm2286, %v2239, %v2245
      %v2306 = vsel %vm2286, %v2241, %v2247
      %v2307 = vsel %vm2286, %v2243, %v2249
      %v2308 = vsel %vm2286, %v2233, %v2239
      %v2309 = vsel %vm2286, %v2235, %v2241
      %v2310 = vsel %vm2286, %v2237, %v2243
      %v2311 = vsel %vm2286, %v2227, %v2233
      %v2312 = vsel %vm2286, %v2229, %v2235
      %v2313 = vsel %vm2286, %v2231, %v2237
      %v2314 = vsel %vm2286, %v2281, %v2227
      %v2315 = vsel %vm2286, %v2283, %v2229
      %v2316 = vsel %vm2286, %v2285, %v2231
      %v2317 = vadd.f32 %v2196, %v2311
      %v2318 = vadd.f32 %v2197, %v2308
      %v2319 = vadd.f32 %v2198, %v2305
      %v2320 = vadd.f32 %v2199, %v2302
      %v2321 = vadd.f32 %v2200, %v2299
      %v2322 = vadd.f32 %v2201, %v2296
      %v2323 = vadd.f32 %v2202, %v2293
      %v2324 = vadd.f32 %v2203, %v2290
      %v2325 = vadd.f32 %v2204, %v2287
      %v2326 = vadd.f32 %v2205, %v2314
      %v2327 = vadd.f32 %v2206, %v2312
      %v2328 = vadd.f32 %v2207, %v2309
      %v2329 = vadd.f32 %v2208, %v2306
      %v2330 = vadd.f32 %v2209, %v2303
      %v2331 = vadd.f32 %v2210, %v2300
      %v2332 = vadd.f32 %v2211, %v2297
      %v2333 = vadd.f32 %v2212, %v2294
      %v2334 = vadd.f32 %v2213, %v2291
      %v2335 = vadd.f32 %v2214, %v2288
      %v2336 = vadd.f32 %v2215, %v2315
      %v2337 = vadd.f32 %v2216, %v2313
      %v2338 = vadd.f32 %v2217, %v2310
      %v2339 = vadd.f32 %v2218, %v2307
      %v2340 = vadd.f32 %v2219, %v2304
      %v2341 = vadd.f32 %v2220, %v2301
      %v2342 = vadd.f32 %v2221, %v2298
      %v2343 = vadd.f32 %v2222, %v2295
      %v2344 = vadd.f32 %v2223, %v2292
      %v2345 = vadd.f32 %v2224, %v2289
      %v2346 = vadd.f32 %v2225, %v2316
      %2347 = vrot.lane.b32.xlu0 %v613, 123
      %v2348 = vpop.permute.xlu0 %2347
      %2349 = vrot.lane.b32.xlu0 %v619, 123
      %v2350 = vpop.permute.xlu0 %2349
      %2351 = vrot.lane.b32.xlu0 %v625, 123
      %v2352 = vpop.permute.xlu0 %2351
      %2353 = vrot.lane.b32.xlu0 %v615, 123
      %v2354 = vpop.permute.xlu0 %2353
      %2355 = vrot.lane.b32.xlu0 %v621, 123
      %v2356 = vpop.permute.xlu0 %2355
      %2357 = vrot.lane.b32.xlu0 %v627, 123
      %v2358 = vpop.permute.xlu0 %2357
      %2359 = vrot.lane.b32.xlu0 %v894, 123
      %v2360 = vpop.permute.xlu0 %2359
      %2361 = vrot.lane.b32.xlu0 %v900, 123
      %v2362 = vpop.permute.xlu0 %2361
      %2363 = vrot.lane.b32.xlu0 %v906, 123
      %v2364 = vpop.permute.xlu0 %2363
      %2365 = vrot.lane.b32.xlu0 %v896, 123
      %v2366 = vpop.permute.xlu0 %2365
      %2367 = vrot.lane.b32.xlu0 %v902, 123
      %v2368 = vpop.permute.xlu0 %2367
      %2369 = vrot.lane.b32.xlu0 %v908, 123
      %v2370 = vpop.permute.xlu0 %2369
      %2371 = vrot.lane.b32.xlu0 %v1175, 123
      %v2372 = vpop.permute.xlu0 %2371
      %2373 = vrot.lane.b32.xlu0 %v1181, 123
      %v2374 = vpop.permute.xlu0 %2373
      %2375 = vrot.lane.b32.xlu0 %v1187, 123
      %v2376 = vpop.permute.xlu0 %2375
      %2377 = vrot.lane.b32.xlu0 %v1177, 123
      %v2378 = vpop.permute.xlu0 %2377
      %2379 = vrot.lane.b32.xlu0 %v1183, 123
      %v2380 = vpop.permute.xlu0 %2379
      %2381 = vrot.lane.b32.xlu0 %v1189, 123
      %v2382 = vpop.permute.xlu0 %2381
      %2383 = vrot.lane.b32.xlu0 %v1456, 123
      %v2384 = vpop.permute.xlu0 %2383
      %2385 = vrot.lane.b32.xlu0 %v1462, 123
      %v2386 = vpop.permute.xlu0 %2385
      %2387 = vrot.lane.b32.xlu0 %v1468, 123
      %v2388 = vpop.permute.xlu0 %2387
      %2389 = vrot.lane.b32.xlu0 %v1458, 123
      %v2390 = vpop.permute.xlu0 %2389
      %2391 = vrot.lane.b32.xlu0 %v1464, 123
      %v2392 = vpop.permute.xlu0 %2391
      %2393 = vrot.lane.b32.xlu0 %v1470, 123
      %v2394 = vpop.permute.xlu0 %2393
      %2395 = vrot.lane.b32.xlu0 %v1737, 123
      %v2396 = vpop.permute.xlu0 %2395
      %2397 = vrot.lane.b32.xlu0 %v1743, 123
      %v2398 = vpop.permute.xlu0 %2397
      %2399 = vrot.lane.b32.xlu0 %v1749, 123
      %v2400 = vpop.permute.xlu0 %2399
      %2401 = vrot.lane.b32.xlu0 %v1739, 123
      %v2402 = vpop.permute.xlu0 %2401
      %2403 = vrot.lane.b32.xlu0 %v1745, 123
      %v2404 = vpop.permute.xlu0 %2403
      %2405 = vrot.lane.b32.xlu0 %v1751, 123
      %v2406 = vpop.permute.xlu0 %2405
      %vm2407 = vcmp.lt.s32.totalorder %v1922, 123
      %v2408 = vsel %vm2407, %v2396, %v2402
      %v2409 = vsel %vm2407, %v2398, %v2404
      %v2410 = vsel %vm2407, %v2400, %v2406
      %v2411 = vsel %vm2407, %v2390, %v2396
      %v2412 = vsel %vm2407, %v2392, %v2398
      %v2413 = vsel %vm2407, %v2394, %v2400
      %v2414 = vsel %vm2407, %v2384, %v2390
      %v2415 = vsel %vm2407, %v2386, %v2392
      %v2416 = vsel %vm2407, %v2388, %v2394
      %v2417 = vsel %vm2407, %v2378, %v2384
      %v2418 = vsel %vm2407, %v2380, %v2386
      %v2419 = vsel %vm2407, %v2382, %v2388
      %v2420 = vsel %vm2407, %v2372, %v2378
      %v2421 = vsel %vm2407, %v2374, %v2380
      %v2422 = vsel %vm2407, %v2376, %v2382
      %v2423 = vsel %vm2407, %v2366, %v2372
      %v2424 = vsel %vm2407, %v2368, %v2374
      %v2425 = vsel %vm2407, %v2370, %v2376
      %v2426 = vsel %vm2407, %v2360, %v2366
      %v2427 = vsel %vm2407, %v2362, %v2368
      %v2428 = vsel %vm2407, %v2364, %v2370
      %v2429 = vsel %vm2407, %v2354, %v2360
      %v2430 = vsel %vm2407, %v2356, %v2362
      %v2431 = vsel %vm2407, %v2358, %v2364
      %v2432 = vsel %vm2407, %v2348, %v2354
      %v2433 = vsel %vm2407, %v2350, %v2356
      %v2434 = vsel %vm2407, %v2352, %v2358
      %v2435 = vsel %vm2407, %v2402, %v2348
      %v2436 = vsel %vm2407, %v2404, %v2350
      %v2437 = vsel %vm2407, %v2406, %v2352
      %v2438 = vadd.f32 %v2317, %v2432
      %v2439 = vadd.f32 %v2318, %v2429
      %v2440 = vadd.f32 %v2319, %v2426
      %v2441 = vadd.f32 %v2320, %v2423
      %v2442 = vadd.f32 %v2321, %v2420
      %v2443 = vadd.f32 %v2322, %v2417
      %v2444 = vadd.f32 %v2323, %v2414
      %v2445 = vadd.f32 %v2324, %v2411
      %v2446 = vadd.f32 %v2325, %v2408
      %v2447 = vadd.f32 %v2326, %v2435
      %v2448 = vadd.f32 %v2327, %v2433
      %v2449 = vadd.f32 %v2328, %v2430
      %v2450 = vadd.f32 %v2329, %v2427
      %v2451 = vadd.f32 %v2330, %v2424
      %v2452 = vadd.f32 %v2331, %v2421
      %v2453 = vadd.f32 %v2332, %v2418
      %v2454 = vadd.f32 %v2333, %v2415
      %v2455 = vadd.f32 %v2334, %v2412
      %v2456 = vadd.f32 %v2335, %v2409
      %v2457 = vadd.f32 %v2336, %v2436
      %v2458 = vadd.f32 %v2337, %v2434
      %v2459 = vadd.f32 %v2338, %v2431
      %v2460 = vadd.f32 %v2339, %v2428
      %v2461 = vadd.f32 %v2340, %v2425
      %v2462 = vadd.f32 %v2341, %v2422
      %v2463 = vadd.f32 %v2342, %v2419
      %v2464 = vadd.f32 %v2343, %v2416
      %v2465 = vadd.f32 %v2344, %v2413
      %v2466 = vadd.f32 %v2345, %v2410
      %v2467 = vadd.f32 %v2346, %v2437
      %2468 = vrot.lane.b32.xlu0 %v631, 122
      %v2469 = vpop.permute.xlu0 %2468
      %2470 = vrot.lane.b32.xlu0 %v637, 122
      %v2471 = vpop.permute.xlu0 %2470
      %2472 = vrot.lane.b32.xlu0 %v643, 122
      %v2473 = vpop.permute.xlu0 %2472
      %2474 = vrot.lane.b32.xlu0 %v633, 122
      %v2475 = vpop.permute.xlu0 %2474
      %2476 = vrot.lane.b32.xlu0 %v639, 122
      %v2477 = vpop.permute.xlu0 %2476
      %2478 = vrot.lane.b32.xlu0 %v645, 122
      %v2479 = vpop.permute.xlu0 %2478
      %2480 = vrot.lane.b32.xlu0 %v912, 122
      %v2481 = vpop.permute.xlu0 %2480
      %2482 = vrot.lane.b32.xlu0 %v918, 122
      %v2483 = vpop.permute.xlu0 %2482
      %2484 = vrot.lane.b32.xlu0 %v924, 122
      %v2485 = vpop.permute.xlu0 %2484
      %2486 = vrot.lane.b32.xlu0 %v914, 122
      %v2487 = vpop.permute.xlu0 %2486
      %2488 = vrot.lane.b32.xlu0 %v920, 122
      %v2489 = vpop.permute.xlu0 %2488
      %2490 = vrot.lane.b32.xlu0 %v926, 122
      %v2491 = vpop.permute.xlu0 %2490
      %2492 = vrot.lane.b32.xlu0 %v1193, 122
      %v2493 = vpop.permute.xlu0 %2492
      %2494 = vrot.lane.b32.xlu0 %v1199, 122
      %v2495 = vpop.permute.xlu0 %2494
      %2496 = vrot.lane.b32.xlu0 %v1205, 122
      %v2497 = vpop.permute.xlu0 %2496
      %2498 = vrot.lane.b32.xlu0 %v1195, 122
      %v2499 = vpop.permute.xlu0 %2498
      %2500 = vrot.lane.b32.xlu0 %v1201, 122
      %v2501 = vpop.permute.xlu0 %2500
      %2502 = vrot.lane.b32.xlu0 %v1207, 122
      %v2503 = vpop.permute.xlu0 %2502
      %2504 = vrot.lane.b32.xlu0 %v1474, 122
      %v2505 = vpop.permute.xlu0 %2504
      %2506 = vrot.lane.b32.xlu0 %v1480, 122
      %v2507 = vpop.permute.xlu0 %2506
      %2508 = vrot.lane.b32.xlu0 %v1486, 122
      %v2509 = vpop.permute.xlu0 %2508
      %2510 = vrot.lane.b32.xlu0 %v1476, 122
      %v2511 = vpop.permute.xlu0 %2510
      %2512 = vrot.lane.b32.xlu0 %v1482, 122
      %v2513 = vpop.permute.xlu0 %2512
      %2514 = vrot.lane.b32.xlu0 %v1488, 122
      %v2515 = vpop.permute.xlu0 %2514
      %2516 = vrot.lane.b32.xlu0 %v1755, 122
      %v2517 = vpop.permute.xlu0 %2516
      %2518 = vrot.lane.b32.xlu0 %v1761, 122
      %v2519 = vpop.permute.xlu0 %2518
      %2520 = vrot.lane.b32.xlu0 %v1767, 122
      %v2521 = vpop.permute.xlu0 %2520
      %2522 = vrot.lane.b32.xlu0 %v1757, 122
      %v2523 = vpop.permute.xlu0 %2522
      %2524 = vrot.lane.b32.xlu0 %v1763, 122
      %v2525 = vpop.permute.xlu0 %2524
      %2526 = vrot.lane.b32.xlu0 %v1769, 122
      %v2527 = vpop.permute.xlu0 %2526
      %vm2528 = vcmp.lt.s32.totalorder %v1922, 122
      %v2529 = vsel %vm2528, %v2517, %v2523
      %v2530 = vsel %vm2528, %v2519, %v2525
      %v2531 = vsel %vm2528, %v2521, %v2527
      %v2532 = vsel %vm2528, %v2511, %v2517
      %v2533 = vsel %vm2528, %v2513, %v2519
      %v2534 = vsel %vm2528, %v2515, %v2521
      %v2535 = vsel %vm2528, %v2505, %v2511
      %v2536 = vsel %vm2528, %v2507, %v2513
      %v2537 = vsel %vm2528, %v2509, %v2515
      %v2538 = vsel %vm2528, %v2499, %v2505
      %v2539 = vsel %vm2528, %v2501, %v2507
      %v2540 = vsel %vm2528, %v2503, %v2509
      %v2541 = vsel %vm2528, %v2493, %v2499
      %v2542 = vsel %vm2528, %v2495, %v2501
      %v2543 = vsel %vm2528, %v2497, %v2503
      %v2544 = vsel %vm2528, %v2487, %v2493
      %v2545 = vsel %vm2528, %v2489, %v2495
      %v2546 = vsel %vm2528, %v2491, %v2497
      %v2547 = vsel %vm2528, %v2481, %v2487
      %v2548 = vsel %vm2528, %v2483, %v2489
      %v2549 = vsel %vm2528, %v2485, %v2491
      %v2550 = vsel %vm2528, %v2475, %v2481
      %v2551 = vsel %vm2528, %v2477, %v2483
      %v2552 = vsel %vm2528, %v2479, %v2485
      %v2553 = vsel %vm2528, %v2469, %v2475
      %v2554 = vsel %vm2528, %v2471, %v2477
      %v2555 = vsel %vm2528, %v2473, %v2479
      %v2556 = vsel %vm2528, %v2523, %v2469
      %v2557 = vsel %vm2528, %v2525, %v2471
      %v2558 = vsel %vm2528, %v2527, %v2473
      %v2559 = vadd.f32 %v2438, %v2553
      %v2560 = vadd.f32 %v2439, %v2550
      %v2561 = vadd.f32 %v2440, %v2547
      %v2562 = vadd.f32 %v2441, %v2544
      %v2563 = vadd.f32 %v2442, %v2541
      %v2564 = vadd.f32 %v2443, %v2538
      %v2565 = vadd.f32 %v2444, %v2535
      %v2566 = vadd.f32 %v2445, %v2532
      %v2567 = vadd.f32 %v2446, %v2529
      %v2568 = vadd.f32 %v2447, %v2556
      %v2569 = vadd.f32 %v2448, %v2554
      %v2570 = vadd.f32 %v2449, %v2551
      %v2571 = vadd.f32 %v2450, %v2548
      %v2572 = vadd.f32 %v2451, %v2545
      %v2573 = vadd.f32 %v2452, %v2542
      %v2574 = vadd.f32 %v2453, %v2539
      %v2575 = vadd.f32 %v2454, %v2536
      %v2576 = vadd.f32 %v2455, %v2533
      %v2577 = vadd.f32 %v2456, %v2530
      %v2578 = vadd.f32 %v2457, %v2557
      %v2579 = vadd.f32 %v2458, %v2555
      %v2580 = vadd.f32 %v2459, %v2552
      %v2581 = vadd.f32 %v2460, %v2549
      %v2582 = vadd.f32 %v2461, %v2546
      %v2583 = vadd.f32 %v2462, %v2543
      %v2584 = vadd.f32 %v2463, %v2540
      %v2585 = vadd.f32 %v2464, %v2537
      %v2586 = vadd.f32 %v2465, %v2534
      %v2587 = vadd.f32 %v2466, %v2531
      %v2588 = vadd.f32 %v2467, %v2558
      %2589 = vrot.lane.b32.xlu0 %v649, 121
      %v2590 = vpop.permute.xlu0 %2589
      %2591 = vrot.lane.b32.xlu0 %v655, 121
      %v2592 = vpop.permute.xlu0 %2591
      %2593 = vrot.lane.b32.xlu0 %v661, 121
      %v2594 = vpop.permute.xlu0 %2593
      %2595 = vrot.lane.b32.xlu0 %v651, 121
      %v2596 = vpop.permute.xlu0 %2595
      %2597 = vrot.lane.b32.xlu0 %v657, 121
      %v2598 = vpop.permute.xlu0 %2597
      %2599 = vrot.lane.b32.xlu0 %v663, 121
      %v2600 = vpop.permute.xlu0 %2599
      %2601 = vrot.lane.b32.xlu0 %v930, 121
      %v2602 = vpop.permute.xlu0 %2601
      %2603 = vrot.lane.b32.xlu0 %v936, 121
      %v2604 = vpop.permute.xlu0 %2603
      %2605 = vrot.lane.b32.xlu0 %v942, 121
      %v2606 = vpop.permute.xlu0 %2605
      %2607 = vrot.lane.b32.xlu0 %v932, 121
      %v2608 = vpop.permute.xlu0 %2607
      %2609 = vrot.lane.b32.xlu0 %v938, 121
      %v2610 = vpop.permute.xlu0 %2609
      %2611 = vrot.lane.b32.xlu0 %v944, 121
      %v2612 = vpop.permute.xlu0 %2611
      %2613 = vrot.lane.b32.xlu0 %v1211, 121
      %v2614 = vpop.permute.xlu0 %2613
      %2615 = vrot.lane.b32.xlu0 %v1217, 121
      %v2616 = vpop.permute.xlu0 %2615
      %2617 = vrot.lane.b32.xlu0 %v1223, 121
      %v2618 = vpop.permute.xlu0 %2617
      %2619 = vrot.lane.b32.xlu0 %v1213, 121
      %v2620 = vpop.permute.xlu0 %2619
      %2621 = vrot.lane.b32.xlu0 %v1219, 121
      %v2622 = vpop.permute.xlu0 %2621
      %2623 = vrot.lane.b32.xlu0 %v1225, 121
      %v2624 = vpop.permute.xlu0 %2623
      %2625 = vrot.lane.b32.xlu0 %v1492, 121
      %v2626 = vpop.permute.xlu0 %2625
      %2627 = vrot.lane.b32.xlu0 %v1498, 121
      %v2628 = vpop.permute.xlu0 %2627
      %2629 = vrot.lane.b32.xlu0 %v1504, 121
      %v2630 = vpop.permute.xlu0 %2629
      %2631 = vrot.lane.b32.xlu0 %v1494, 121
      %v2632 = vpop.permute.xlu0 %2631
      %2633 = vrot.lane.b32.xlu0 %v1500, 121
      %v2634 = vpop.permute.xlu0 %2633
      %2635 = vrot.lane.b32.xlu0 %v1506, 121
      %v2636 = vpop.permute.xlu0 %2635
      %2637 = vrot.lane.b32.xlu0 %v1773, 121
      %v2638 = vpop.permute.xlu0 %2637
      %2639 = vrot.lane.b32.xlu0 %v1779, 121
      %v2640 = vpop.permute.xlu0 %2639
      %2641 = vrot.lane.b32.xlu0 %v1785, 121
      %v2642 = vpop.permute.xlu0 %2641
      %2643 = vrot.lane.b32.xlu0 %v1775, 121
      %v2644 = vpop.permute.xlu0 %2643
      %2645 = vrot.lane.b32.xlu0 %v1781, 121
      %v2646 = vpop.permute.xlu0 %2645
      %2647 = vrot.lane.b32.xlu0 %v1787, 121
      %v2648 = vpop.permute.xlu0 %2647
      %vm2649 = vcmp.lt.s32.totalorder %v1922, 121
      %v2650 = vsel %vm2649, %v2638, %v2644
      %v2651 = vsel %vm2649, %v2640, %v2646
      %v2652 = vsel %vm2649, %v2642, %v2648
      %v2653 = vsel %vm2649, %v2632, %v2638
      %v2654 = vsel %vm2649, %v2634, %v2640
      %v2655 = vsel %vm2649, %v2636, %v2642
      %v2656 = vsel %vm2649, %v2626, %v2632
      %v2657 = vsel %vm2649, %v2628, %v2634
      %v2658 = vsel %vm2649, %v2630, %v2636
      %v2659 = vsel %vm2649, %v2620, %v2626
      %v2660 = vsel %vm2649, %v2622, %v2628
      %v2661 = vsel %vm2649, %v2624, %v2630
      %v2662 = vsel %vm2649, %v2614, %v2620
      %v2663 = vsel %vm2649, %v2616, %v2622
      %v2664 = vsel %vm2649, %v2618, %v2624
      %v2665 = vsel %vm2649, %v2608, %v2614
      %v2666 = vsel %vm2649, %v2610, %v2616
      %v2667 = vsel %vm2649, %v2612, %v2618
      %v2668 = vsel %vm2649, %v2602, %v2608
      %v2669 = vsel %vm2649, %v2604, %v2610
      %v2670 = vsel %vm2649, %v2606, %v2612
      %v2671 = vsel %vm2649, %v2596, %v2602
      %v2672 = vsel %vm2649, %v2598, %v2604
      %v2673 = vsel %vm2649, %v2600, %v2606
      %v2674 = vsel %vm2649, %v2590, %v2596
      %v2675 = vsel %vm2649, %v2592, %v2598
      %v2676 = vsel %vm2649, %v2594, %v2600
      %v2677 = vsel %vm2649, %v2644, %v2590
      %v2678 = vsel %vm2649, %v2646, %v2592
      %v2679 = vsel %vm2649, %v2648, %v2594
      %v2680 = vadd.f32 %v2559, %v2674
      %v2681 = vadd.f32 %v2560, %v2671
      %v2682 = vadd.f32 %v2561, %v2668
      %v2683 = vadd.f32 %v2562, %v2665
      %v2684 = vadd.f32 %v2563, %v2662
      %v2685 = vadd.f32 %v2564, %v2659
      %v2686 = vadd.f32 %v2565, %v2656
      %v2687 = vadd.f32 %v2566, %v2653
      %v2688 = vadd.f32 %v2567, %v2650
      %v2689 = vadd.f32 %v2568, %v2677
      %v2690 = vadd.f32 %v2569, %v2675
      %v2691 = vadd.f32 %v2570, %v2672
      %v2692 = vadd.f32 %v2571, %v2669
      %v2693 = vadd.f32 %v2572, %v2666
      %v2694 = vadd.f32 %v2573, %v2663
      %v2695 = vadd.f32 %v2574, %v2660
      %v2696 = vadd.f32 %v2575, %v2657
      %v2697 = vadd.f32 %v2576, %v2654
      %v2698 = vadd.f32 %v2577, %v2651
      %v2699 = vadd.f32 %v2578, %v2678
      %v2700 = vadd.f32 %v2579, %v2676
      %v2701 = vadd.f32 %v2580, %v2673
      %v2702 = vadd.f32 %v2581, %v2670
      %v2703 = vadd.f32 %v2582, %v2667
      %v2704 = vadd.f32 %v2583, %v2664
      %v2705 = vadd.f32 %v2584, %v2661
      %v2706 = vadd.f32 %v2585, %v2658
      %v2707 = vadd.f32 %v2586, %v2655
      %v2708 = vadd.f32 %v2587, %v2652
      %v2709 = vadd.f32 %v2588, %v2679
      %2710 = vrot.lane.b32.xlu0 %v667, 120
      %v2711 = vpop.permute.xlu0 %2710
      %2712 = vrot.lane.b32.xlu0 %v673, 120
      %v2713 = vpop.permute.xlu0 %2712
      %2714 = vrot.lane.b32.xlu0 %v679, 120
      %v2715 = vpop.permute.xlu0 %2714
      %2716 = vrot.lane.b32.xlu0 %v669, 120
      %v2717 = vpop.permute.xlu0 %2716
      %2718 = vrot.lane.b32.xlu0 %v675, 120
      %v2719 = vpop.permute.xlu0 %2718
      %2720 = vrot.lane.b32.xlu0 %v681, 120
      %v2721 = vpop.permute.xlu0 %2720
      %2722 = vrot.lane.b32.xlu0 %v948, 120
      %v2723 = vpop.permute.xlu0 %2722
      %2724 = vrot.lane.b32.xlu0 %v954, 120
      %v2725 = vpop.permute.xlu0 %2724
      %2726 = vrot.lane.b32.xlu0 %v960, 120
      %v2727 = vpop.permute.xlu0 %2726
      %2728 = vrot.lane.b32.xlu0 %v950, 120
      %v2729 = vpop.permute.xlu0 %2728
      %2730 = vrot.lane.b32.xlu0 %v956, 120
      %v2731 = vpop.permute.xlu0 %2730
      %2732 = vrot.lane.b32.xlu0 %v962, 120
      %v2733 = vpop.permute.xlu0 %2732
      %2734 = vrot.lane.b32.xlu0 %v1229, 120
      %v2735 = vpop.permute.xlu0 %2734
      %2736 = vrot.lane.b32.xlu0 %v1235, 120
      %v2737 = vpop.permute.xlu0 %2736
      %2738 = vrot.lane.b32.xlu0 %v1241, 120
      %v2739 = vpop.permute.xlu0 %2738
      %2740 = vrot.lane.b32.xlu0 %v1231, 120
      %v2741 = vpop.permute.xlu0 %2740
      %2742 = vrot.lane.b32.xlu0 %v1237, 120
      %v2743 = vpop.permute.xlu0 %2742
      %2744 = vrot.lane.b32.xlu0 %v1243, 120
      %v2745 = vpop.permute.xlu0 %2744
      %2746 = vrot.lane.b32.xlu0 %v1510, 120
      %v2747 = vpop.permute.xlu0 %2746
      %2748 = vrot.lane.b32.xlu0 %v1516, 120
      %v2749 = vpop.permute.xlu0 %2748
      %2750 = vrot.lane.b32.xlu0 %v1522, 120
      %v2751 = vpop.permute.xlu0 %2750
      %2752 = vrot.lane.b32.xlu0 %v1512, 120
      %v2753 = vpop.permute.xlu0 %2752
      %2754 = vrot.lane.b32.xlu0 %v1518, 120
      %v2755 = vpop.permute.xlu0 %2754
      %2756 = vrot.lane.b32.xlu0 %v1524, 120
      %v2757 = vpop.permute.xlu0 %2756
      %2758 = vrot.lane.b32.xlu0 %v1791, 120
      %v2759 = vpop.permute.xlu0 %2758
      %2760 = vrot.lane.b32.xlu0 %v1797, 120
      %v2761 = vpop.permute.xlu0 %2760
      %2762 = vrot.lane.b32.xlu0 %v1803, 120
      %v2763 = vpop.permute.xlu0 %2762
      %2764 = vrot.lane.b32.xlu0 %v1793, 120
      %v2765 = vpop.permute.xlu0 %2764
      %2766 = vrot.lane.b32.xlu0 %v1799, 120
      %v2767 = vpop.permute.xlu0 %2766
      %2768 = vrot.lane.b32.xlu0 %v1805, 120
      %v2769 = vpop.permute.xlu0 %2768
      %vm2770 = vcmp.lt.s32.totalorder %v1922, 120
      %v2771 = vsel %vm2770, %v2759, %v2765
      %v2772 = vsel %vm2770, %v2761, %v2767
      %v2773 = vsel %vm2770, %v2763, %v2769
      %v2774 = vsel %vm2770, %v2753, %v2759
      %v2775 = vsel %vm2770, %v2755, %v2761
      %v2776 = vsel %vm2770, %v2757, %v2763
      %v2777 = vsel %vm2770, %v2747, %v2753
      %v2778 = vsel %vm2770, %v2749, %v2755
      %v2779 = vsel %vm2770, %v2751, %v2757
      %v2780 = vsel %vm2770, %v2741, %v2747
      %v2781 = vsel %vm2770, %v2743, %v2749
      %v2782 = vsel %vm2770, %v2745, %v2751
      %v2783 = vsel %vm2770, %v2735, %v2741
      %v2784 = vsel %vm2770, %v2737, %v2743
      %v2785 = vsel %vm2770, %v2739, %v2745
      %v2786 = vsel %vm2770, %v2729, %v2735
      %v2787 = vsel %vm2770, %v2731, %v2737
      %v2788 = vsel %vm2770, %v2733, %v2739
      %v2789 = vsel %vm2770, %v2723, %v2729
      %v2790 = vsel %vm2770, %v2725, %v2731
      %v2791 = vsel %vm2770, %v2727, %v2733
      %v2792 = vsel %vm2770, %v2717, %v2723
      %v2793 = vsel %vm2770, %v2719, %v2725
      %v2794 = vsel %vm2770, %v2721, %v2727
      %v2795 = vsel %vm2770, %v2711, %v2717
      %v2796 = vsel %vm2770, %v2713, %v2719
      %v2797 = vsel %vm2770, %v2715, %v2721
      %v2798 = vsel %vm2770, %v2765, %v2711
      %v2799 = vsel %vm2770, %v2767, %v2713
      %v2800 = vsel %vm2770, %v2769, %v2715
      %v2801 = vadd.f32 %v2680, %v2795
      %v2802 = vadd.f32 %v2681, %v2792
      %v2803 = vadd.f32 %v2682, %v2789
      %v2804 = vadd.f32 %v2683, %v2786
      %v2805 = vadd.f32 %v2684, %v2783
      %v2806 = vadd.f32 %v2685, %v2780
      %v2807 = vadd.f32 %v2686, %v2777
      %v2808 = vadd.f32 %v2687, %v2774
      %v2809 = vadd.f32 %v2688, %v2771
      %v2810 = vadd.f32 %v2689, %v2798
      %v2811 = vadd.f32 %v2690, %v2796
      %v2812 = vadd.f32 %v2691, %v2793
      %v2813 = vadd.f32 %v2692, %v2790
      %v2814 = vadd.f32 %v2693, %v2787
      %v2815 = vadd.f32 %v2694, %v2784
      %v2816 = vadd.f32 %v2695, %v2781
      %v2817 = vadd.f32 %v2696, %v2778
      %v2818 = vadd.f32 %v2697, %v2775
      %v2819 = vadd.f32 %v2698, %v2772
      %v2820 = vadd.f32 %v2699, %v2799
      %v2821 = vadd.f32 %v2700, %v2797
      %v2822 = vadd.f32 %v2701, %v2794
      %v2823 = vadd.f32 %v2702, %v2791
      %v2824 = vadd.f32 %v2703, %v2788
      %v2825 = vadd.f32 %v2704, %v2785
      %v2826 = vadd.f32 %v2705, %v2782
      %v2827 = vadd.f32 %v2706, %v2779
      %v2828 = vadd.f32 %v2707, %v2776
      %v2829 = vadd.f32 %v2708, %v2773
      %v2830 = vadd.f32 %v2709, %v2800
      %2831 = vrot.lane.b32.xlu0 %v685, 119
      %v2832 = vpop.permute.xlu0 %2831
      %2833 = vrot.lane.b32.xlu0 %v691, 119
      %v2834 = vpop.permute.xlu0 %2833
      %2835 = vrot.lane.b32.xlu0 %v697, 119
      %v2836 = vpop.permute.xlu0 %2835
      %2837 = vrot.lane.b32.xlu0 %v687, 119
      %v2838 = vpop.permute.xlu0 %2837
      %2839 = vrot.lane.b32.xlu0 %v693, 119
      %v2840 = vpop.permute.xlu0 %2839
      %2841 = vrot.lane.b32.xlu0 %v699, 119
      %v2842 = vpop.permute.xlu0 %2841
      %2843 = vrot.lane.b32.xlu0 %v966, 119
      %v2844 = vpop.permute.xlu0 %2843
      %2845 = vrot.lane.b32.xlu0 %v972, 119
      %v2846 = vpop.permute.xlu0 %2845
      %2847 = vrot.lane.b32.xlu0 %v978, 119
      %v2848 = vpop.permute.xlu0 %2847
      %2849 = vrot.lane.b32.xlu0 %v968, 119
      %v2850 = vpop.permute.xlu0 %2849
      %2851 = vrot.lane.b32.xlu0 %v974, 119
      %v2852 = vpop.permute.xlu0 %2851
      %2853 = vrot.lane.b32.xlu0 %v980, 119
      %v2854 = vpop.permute.xlu0 %2853
      %2855 = vrot.lane.b32.xlu0 %v1247, 119
      %v2856 = vpop.permute.xlu0 %2855
      %2857 = vrot.lane.b32.xlu0 %v1253, 119
      %v2858 = vpop.permute.xlu0 %2857
      %2859 = vrot.lane.b32.xlu0 %v1259, 119
      %v2860 = vpop.permute.xlu0 %2859
      %2861 = vrot.lane.b32.xlu0 %v1249, 119
      %v2862 = vpop.permute.xlu0 %2861
      %2863 = vrot.lane.b32.xlu0 %v1255, 119
      %v2864 = vpop.permute.xlu0 %2863
      %2865 = vrot.lane.b32.xlu0 %v1261, 119
      %v2866 = vpop.permute.xlu0 %2865
      %2867 = vrot.lane.b32.xlu0 %v1528, 119
      %v2868 = vpop.permute.xlu0 %2867
      %2869 = vrot.lane.b32.xlu0 %v1534, 119
      %v2870 = vpop.permute.xlu0 %2869
      %2871 = vrot.lane.b32.xlu0 %v1540, 119
      %v2872 = vpop.permute.xlu0 %2871
      %2873 = vrot.lane.b32.xlu0 %v1530, 119
      %v2874 = vpop.permute.xlu0 %2873
      %2875 = vrot.lane.b32.xlu0 %v1536, 119
      %v2876 = vpop.permute.xlu0 %2875
      %2877 = vrot.lane.b32.xlu0 %v1542, 119
      %v2878 = vpop.permute.xlu0 %2877
      %2879 = vrot.lane.b32.xlu0 %v1809, 119
      %v2880 = vpop.permute.xlu0 %2879
      %2881 = vrot.lane.b32.xlu0 %v1815, 119
      %v2882 = vpop.permute.xlu0 %2881
      %2883 = vrot.lane.b32.xlu0 %v1821, 119
      %v2884 = vpop.permute.xlu0 %2883
      %2885 = vrot.lane.b32.xlu0 %v1811, 119
      %v2886 = vpop.permute.xlu0 %2885
      %2887 = vrot.lane.b32.xlu0 %v1817, 119
      %v2888 = vpop.permute.xlu0 %2887
      %2889 = vrot.lane.b32.xlu0 %v1823, 119
      %v2890 = vpop.permute.xlu0 %2889
      %vm2891 = vcmp.lt.s32.totalorder %v1922, 119
      %v2892 = vsel %vm2891, %v2880, %v2886
      %v2893 = vsel %vm2891, %v2882, %v2888
      %v2894 = vsel %vm2891, %v2884, %v2890
      %v2895 = vsel %vm2891, %v2874, %v2880
      %v2896 = vsel %vm2891, %v2876, %v2882
      %v2897 = vsel %vm2891, %v2878, %v2884
      %v2898 = vsel %vm2891, %v2868, %v2874
      %v2899 = vsel %vm2891, %v2870, %v2876
      %v2900 = vsel %vm2891, %v2872, %v2878
      %v2901 = vsel %vm2891, %v2862, %v2868
      %v2902 = vsel %vm2891, %v2864, %v2870
      %v2903 = vsel %vm2891, %v2866, %v2872
      %v2904 = vsel %vm2891, %v2856, %v2862
      %v2905 = vsel %vm2891, %v2858, %v2864
      %v2906 = vsel %vm2891, %v2860, %v2866
      %v2907 = vsel %vm2891, %v2850, %v2856
      %v2908 = vsel %vm2891, %v2852, %v2858
      %v2909 = vsel %vm2891, %v2854, %v2860
      %v2910 = vsel %vm2891, %v2844, %v2850
      %v2911 = vsel %vm2891, %v2846, %v2852
      %v2912 = vsel %vm2891, %v2848, %v2854
      %v2913 = vsel %vm2891, %v2838, %v2844
      %v2914 = vsel %vm2891, %v2840, %v2846
      %v2915 = vsel %vm2891, %v2842, %v2848
      %v2916 = vsel %vm2891, %v2832, %v2838
      %v2917 = vsel %vm2891, %v2834, %v2840
      %v2918 = vsel %vm2891, %v2836, %v2842
      %v2919 = vsel %vm2891, %v2886, %v2832
      %v2920 = vsel %vm2891, %v2888, %v2834
      %v2921 = vsel %vm2891, %v2890, %v2836
      %v2922 = vadd.f32 %v2801, %v2916
      %v2923 = vadd.f32 %v2802, %v2913
      %v2924 = vadd.f32 %v2803, %v2910
      %v2925 = vadd.f32 %v2804, %v2907
      %v2926 = vadd.f32 %v2805, %v2904
      %v2927 = vadd.f32 %v2806, %v2901
      %v2928 = vadd.f32 %v2807, %v2898
      %v2929 = vadd.f32 %v2808, %v2895
      %v2930 = vadd.f32 %v2809, %v2892
      %v2931 = vadd.f32 %v2810, %v2919
      %v2932 = vadd.f32 %v2811, %v2917
      %v2933 = vadd.f32 %v2812, %v2914
      %v2934 = vadd.f32 %v2813, %v2911
      %v2935 = vadd.f32 %v2814, %v2908
      %v2936 = vadd.f32 %v2815, %v2905
      %v2937 = vadd.f32 %v2816, %v2902
      %v2938 = vadd.f32 %v2817, %v2899
      %v2939 = vadd.f32 %v2818, %v2896
      %v2940 = vadd.f32 %v2819, %v2893
      %v2941 = vadd.f32 %v2820, %v2920
      %v2942 = vadd.f32 %v2821, %v2918
      %v2943 = vadd.f32 %v2822, %v2915
      %v2944 = vadd.f32 %v2823, %v2912
      %v2945 = vadd.f32 %v2824, %v2909
      %v2946 = vadd.f32 %v2825, %v2906
      %v2947 = vadd.f32 %v2826, %v2903
      %v2948 = vadd.f32 %v2827, %v2900
      %v2949 = vadd.f32 %v2828, %v2897
      %v2950 = vadd.f32 %v2829, %v2894
      %v2951 = vadd.f32 %v2830, %v2921
      %2952 = vrot.lane.b32.xlu0 %v703, 118
      %v2953 = vpop.permute.xlu0 %2952
      %2954 = vrot.lane.b32.xlu0 %v709, 118
      %v2955 = vpop.permute.xlu0 %2954
      %2956 = vrot.lane.b32.xlu0 %v715, 118
      %v2957 = vpop.permute.xlu0 %2956
      %2958 = vrot.lane.b32.xlu0 %v705, 118
      %v2959 = vpop.permute.xlu0 %2958
      %2960 = vrot.lane.b32.xlu0 %v711, 118
      %v2961 = vpop.permute.xlu0 %2960
      %2962 = vrot.lane.b32.xlu0 %v717, 118
      %v2963 = vpop.permute.xlu0 %2962
      %2964 = vrot.lane.b32.xlu0 %v984, 118
      %v2965 = vpop.permute.xlu0 %2964
      %2966 = vrot.lane.b32.xlu0 %v990, 118
      %v2967 = vpop.permute.xlu0 %2966
      %2968 = vrot.lane.b32.xlu0 %v996, 118
      %v2969 = vpop.permute.xlu0 %2968
      %2970 = vrot.lane.b32.xlu0 %v986, 118
      %v2971 = vpop.permute.xlu0 %2970
      %2972 = vrot.lane.b32.xlu0 %v992, 118
      %v2973 = vpop.permute.xlu0 %2972
      %2974 = vrot.lane.b32.xlu0 %v998, 118
      %v2975 = vpop.permute.xlu0 %2974
      %2976 = vrot.lane.b32.xlu0 %v1265, 118
      %v2977 = vpop.permute.xlu0 %2976
      %2978 = vrot.lane.b32.xlu0 %v1271, 118
      %v2979 = vpop.permute.xlu0 %2978
      %2980 = vrot.lane.b32.xlu0 %v1277, 118
      %v2981 = vpop.permute.xlu0 %2980
      %2982 = vrot.lane.b32.xlu0 %v1267, 118
      %v2983 = vpop.permute.xlu0 %2982
      %2984 = vrot.lane.b32.xlu0 %v1273, 118
      %v2985 = vpop.permute.xlu0 %2984
      %2986 = vrot.lane.b32.xlu0 %v1279, 118
      %v2987 = vpop.permute.xlu0 %2986
      %2988 = vrot.lane.b32.xlu0 %v1546, 118
      %v2989 = vpop.permute.xlu0 %2988
      %2990 = vrot.lane.b32.xlu0 %v1552, 118
      %v2991 = vpop.permute.xlu0 %2990
      %2992 = vrot.lane.b32.xlu0 %v1558, 118
      %v2993 = vpop.permute.xlu0 %2992
      %2994 = vrot.lane.b32.xlu0 %v1548, 118
      %v2995 = vpop.permute.xlu0 %2994
      %2996 = vrot.lane.b32.xlu0 %v1554, 118
      %v2997 = vpop.permute.xlu0 %2996
      %2998 = vrot.lane.b32.xlu0 %v1560, 118
      %v2999 = vpop.permute.xlu0 %2998
      %3000 = vrot.lane.b32.xlu0 %v1827, 118
      %v3001 = vpop.permute.xlu0 %3000
      %3002 = vrot.lane.b32.xlu0 %v1833, 118
      %v3003 = vpop.permute.xlu0 %3002
      %3004 = vrot.lane.b32.xlu0 %v1839, 118
      %v3005 = vpop.permute.xlu0 %3004
      %3006 = vrot.lane.b32.xlu0 %v1829, 118
      %v3007 = vpop.permute.xlu0 %3006
      %3008 = vrot.lane.b32.xlu0 %v1835, 118
      %v3009 = vpop.permute.xlu0 %3008
      %3010 = vrot.lane.b32.xlu0 %v1841, 118
      %v3011 = vpop.permute.xlu0 %3010
      %vm3012 = vcmp.lt.s32.totalorder %v1922, 118
      %v3013 = vsel %vm3012, %v3001, %v3007
      %v3014 = vsel %vm3012, %v3003, %v3009
      %v3015 = vsel %vm3012, %v3005, %v3011
      %v3016 = vsel %vm3012, %v2995, %v3001
      %v3017 = vsel %vm3012, %v2997, %v3003
      %v3018 = vsel %vm3012, %v2999, %v3005
      %v3019 = vsel %vm3012, %v2989, %v2995
      %v3020 = vsel %vm3012, %v2991, %v2997
      %v3021 = vsel %vm3012, %v2993, %v2999
      %v3022 = vsel %vm3012, %v2983, %v2989
      %v3023 = vsel %vm3012, %v2985, %v2991
      %v3024 = vsel %vm3012, %v2987, %v2993
      %v3025 = vsel %vm3012, %v2977, %v2983
      %v3026 = vsel %vm3012, %v2979, %v2985
      %v3027 = vsel %vm3012, %v2981, %v2987
      %v3028 = vsel %vm3012, %v2971, %v2977
      %v3029 = vsel %vm3012, %v2973, %v2979
      %v3030 = vsel %vm3012, %v2975, %v2981
      %v3031 = vsel %vm3012, %v2965, %v2971
      %v3032 = vsel %vm3012, %v2967, %v2973
      %v3033 = vsel %vm3012, %v2969, %v2975
      %v3034 = vsel %vm3012, %v2959, %v2965
      %v3035 = vsel %vm3012, %v2961, %v2967
      %v3036 = vsel %vm3012, %v2963, %v2969
      %v3037 = vsel %vm3012, %v2953, %v2959
      %v3038 = vsel %vm3012, %v2955, %v2961
      %v3039 = vsel %vm3012, %v2957, %v2963
      %v3040 = vsel %vm3012, %v3007, %v2953
      %v3041 = vsel %vm3012, %v3009, %v2955
      %v3042 = vsel %vm3012, %v3011, %v2957
      %v3043 = vadd.f32 %v2922, %v3037
      %v3044 = vadd.f32 %v2923, %v3034
      %v3045 = vadd.f32 %v2924, %v3031
      %v3046 = vadd.f32 %v2925, %v3028
      %v3047 = vadd.f32 %v2926, %v3025
      %v3048 = vadd.f32 %v2927, %v3022
      %v3049 = vadd.f32 %v2928, %v3019
      %v3050 = vadd.f32 %v2929, %v3016
      %v3051 = vadd.f32 %v2930, %v3013
      %v3052 = vadd.f32 %v2931, %v3040
      %v3053 = vadd.f32 %v2932, %v3038
      %v3054 = vadd.f32 %v2933, %v3035
      %v3055 = vadd.f32 %v2934, %v3032
      %v3056 = vadd.f32 %v2935, %v3029
      %v3057 = vadd.f32 %v2936, %v3026
      %v3058 = vadd.f32 %v2937, %v3023
      %v3059 = vadd.f32 %v2938, %v3020
      %v3060 = vadd.f32 %v2939, %v3017
      %v3061 = vadd.f32 %v2940, %v3014
      %v3062 = vadd.f32 %v2941, %v3041
      %v3063 = vadd.f32 %v2942, %v3039
      %v3064 = vadd.f32 %v2943, %v3036
      %v3065 = vadd.f32 %v2944, %v3033
      %v3066 = vadd.f32 %v2945, %v3030
      %v3067 = vadd.f32 %v2946, %v3027
      %v3068 = vadd.f32 %v2947, %v3024
      %v3069 = vadd.f32 %v2948, %v3021
      %v3070 = vadd.f32 %v2949, %v3018
      %v3071 = vadd.f32 %v2950, %v3015
      %v3072 = vadd.f32 %v2951, %v3042
      %3073 = vrot.lane.b32.xlu0 %v721, 117
      %v3074 = vpop.permute.xlu0 %3073
      %3075 = vrot.lane.b32.xlu0 %v727, 117
      %v3076 = vpop.permute.xlu0 %3075
      %3077 = vrot.lane.b32.xlu0 %v733, 117
      %v3078 = vpop.permute.xlu0 %3077
      %3079 = vrot.lane.b32.xlu0 %v723, 117
      %v3080 = vpop.permute.xlu0 %3079
      %3081 = vrot.lane.b32.xlu0 %v729, 117
      %v3082 = vpop.permute.xlu0 %3081
      %3083 = vrot.lane.b32.xlu0 %v735, 117
      %v3084 = vpop.permute.xlu0 %3083
      %3085 = vrot.lane.b32.xlu0 %v1002, 117
      %v3086 = vpop.permute.xlu0 %3085
      %3087 = vrot.lane.b32.xlu0 %v1008, 117
      %v3088 = vpop.permute.xlu0 %3087
      %3089 = vrot.lane.b32.xlu0 %v1014, 117
      %v3090 = vpop.permute.xlu0 %3089
      %3091 = vrot.lane.b32.xlu0 %v1004, 117
      %v3092 = vpop.permute.xlu0 %3091
      %3093 = vrot.lane.b32.xlu0 %v1010, 117
      %v3094 = vpop.permute.xlu0 %3093
      %3095 = vrot.lane.b32.xlu0 %v1016, 117
      %v3096 = vpop.permute.xlu0 %3095
      %3097 = vrot.lane.b32.xlu0 %v1283, 117
      %v3098 = vpop.permute.xlu0 %3097
      %3099 = vrot.lane.b32.xlu0 %v1289, 117
      %v3100 = vpop.permute.xlu0 %3099
      %3101 = vrot.lane.b32.xlu0 %v1295, 117
      %v3102 = vpop.permute.xlu0 %3101
      %3103 = vrot.lane.b32.xlu0 %v1285, 117
      %v3104 = vpop.permute.xlu0 %3103
      %3105 = vrot.lane.b32.xlu0 %v1291, 117
      %v3106 = vpop.permute.xlu0 %3105
      %3107 = vrot.lane.b32.xlu0 %v1297, 117
      %v3108 = vpop.permute.xlu0 %3107
      %3109 = vrot.lane.b32.xlu0 %v1564, 117
      %v3110 = vpop.permute.xlu0 %3109
      %3111 = vrot.lane.b32.xlu0 %v1570, 117
      %v3112 = vpop.permute.xlu0 %3111
      %3113 = vrot.lane.b32.xlu0 %v1576, 117
      %v3114 = vpop.permute.xlu0 %3113
      %3115 = vrot.lane.b32.xlu0 %v1566, 117
      %v3116 = vpop.permute.xlu0 %3115
      %3117 = vrot.lane.b32.xlu0 %v1572, 117
      %v3118 = vpop.permute.xlu0 %3117
      %3119 = vrot.lane.b32.xlu0 %v1578, 117
      %v3120 = vpop.permute.xlu0 %3119
      %3121 = vrot.lane.b32.xlu0 %v1845, 117
      %v3122 = vpop.permute.xlu0 %3121
      %3123 = vrot.lane.b32.xlu0 %v1851, 117
      %v3124 = vpop.permute.xlu0 %3123
      %3125 = vrot.lane.b32.xlu0 %v1857, 117
      %v3126 = vpop.permute.xlu0 %3125
      %3127 = vrot.lane.b32.xlu0 %v1847, 117
      %v3128 = vpop.permute.xlu0 %3127
      %3129 = vrot.lane.b32.xlu0 %v1853, 117
      %v3130 = vpop.permute.xlu0 %3129
      %3131 = vrot.lane.b32.xlu0 %v1859, 117
      %v3132 = vpop.permute.xlu0 %3131
      %vm3133 = vcmp.lt.s32.totalorder %v1922, 117
      %v3134 = vsel %vm3133, %v3122, %v3128
      %v3135 = vsel %vm3133, %v3124, %v3130
      %v3136 = vsel %vm3133, %v3126, %v3132
      %v3137 = vsel %vm3133, %v3116, %v3122
      %v3138 = vsel %vm3133, %v3118, %v3124
      %v3139 = vsel %vm3133, %v3120, %v3126
      %v3140 = vsel %vm3133, %v3110, %v3116
      %v3141 = vsel %vm3133, %v3112, %v3118
      %v3142 = vsel %vm3133, %v3114, %v3120
      %v3143 = vsel %vm3133, %v3104, %v3110
      %v3144 = vsel %vm3133, %v3106, %v3112
      %v3145 = vsel %vm3133, %v3108, %v3114
      %v3146 = vsel %vm3133, %v3098, %v3104
      %v3147 = vsel %vm3133, %v3100, %v3106
      %v3148 = vsel %vm3133, %v3102, %v3108
      %v3149 = vsel %vm3133, %v3092, %v3098
      %v3150 = vsel %vm3133, %v3094, %v3100
      %v3151 = vsel %vm3133, %v3096, %v3102
      %v3152 = vsel %vm3133, %v3086, %v3092
      %v3153 = vsel %vm3133, %v3088, %v3094
      %v3154 = vsel %vm3133, %v3090, %v3096
      %v3155 = vsel %vm3133, %v3080, %v3086
      %v3156 = vsel %vm3133, %v3082, %v3088
      %v3157 = vsel %vm3133, %v3084, %v3090
      %v3158 = vsel %vm3133, %v3074, %v3080
      %v3159 = vsel %vm3133, %v3076, %v3082
      %v3160 = vsel %vm3133, %v3078, %v3084
      %v3161 = vsel %vm3133, %v3128, %v3074
      %v3162 = vsel %vm3133, %v3130, %v3076
      %v3163 = vsel %vm3133, %v3132, %v3078
      %v3164 = vadd.f32 %v3043, %v3158
      %v3165 = vadd.f32 %v3044, %v3155
      %v3166 = vadd.f32 %v3045, %v3152
      %v3167 = vadd.f32 %v3046, %v3149
      %v3168 = vadd.f32 %v3047, %v3146
      %v3169 = vadd.f32 %v3048, %v3143
      %v3170 = vadd.f32 %v3049, %v3140
      %v3171 = vadd.f32 %v3050, %v3137
      %v3172 = vadd.f32 %v3051, %v3134
      %v3173 = vadd.f32 %v3052, %v3161
      %v3174 = vadd.f32 %v3053, %v3159
      %v3175 = vadd.f32 %v3054, %v3156
      %v3176 = vadd.f32 %v3055, %v3153
      %v3177 = vadd.f32 %v3056, %v3150
      %v3178 = vadd.f32 %v3057, %v3147
      %v3179 = vadd.f32 %v3058, %v3144
      %v3180 = vadd.f32 %v3059, %v3141
      %v3181 = vadd.f32 %v3060, %v3138
      %v3182 = vadd.f32 %v3061, %v3135
      %v3183 = vadd.f32 %v3062, %v3162
      %v3184 = vadd.f32 %v3063, %v3160
      %v3185 = vadd.f32 %v3064, %v3157
      %v3186 = vadd.f32 %v3065, %v3154
      %v3187 = vadd.f32 %v3066, %v3151
      %v3188 = vadd.f32 %v3067, %v3148
      %v3189 = vadd.f32 %v3068, %v3145
      %v3190 = vadd.f32 %v3069, %v3142
      %v3191 = vadd.f32 %v3070, %v3139
      %v3192 = vadd.f32 %v3071, %v3136
      %v3193 = vadd.f32 %v3072, %v3163
      %v3194 = vld [vmem:[%s2] sm:$0xff]
      %v3195 = vld [vmem:[%s2 + $0x8] sm:$0xff]
      %v3196 = vld [vmem:[%s2 + $0x10] sm:$0xff]
      %v3197 = vld [vmem:[%s2 + $0x18] sm:$0xff]
      %v3198 = vld [vmem:[%s2 + $0x20] sm:$0xff]
      %v3199 = vld [vmem:[%s2 + $0x28] sm:$0xff]
      %v3200 = vld [vmem:[%s2 + $0x30] sm:$0xff]
      %v3201 = vld [vmem:[%s2 + $0x38] sm:$0xff]
      %v3202 = vld [vmem:[%s2 + $0x40] sm:$0xff]
      %v3203 = vld [vmem:[%s2 + $0x48] sm:$0xff]
      %v3204 = vld [vmem:[%s2 + $0x50] sm:$0xff]
      %v3205 = vld [vmem:[%s2 + $0x58] sm:$0xff]
      %v3206 = vld [vmem:[%s2 + $0x60] sm:$0xff]
      %v3207 = vld [vmem:[%s2 + $0x68] sm:$0xff]
      %v3208 = vld [vmem:[%s2 + $0x70] sm:$0xff]
      %v3209 = vld [vmem:[%s3] sm:$0xff]
      %v3210 = vld [vmem:[%s3 + $0x8] sm:$0xff]
      %v3211 = vld [vmem:[%s3 + $0x10] sm:$0xff]
      %v3212 = vld [vmem:[%s3 + $0x18] sm:$0xff]
      %v3213 = vld [vmem:[%s3 + $0x20] sm:$0xff]
      %v3214 = vld [vmem:[%s3 + $0x28] sm:$0xff]
      %v3215 = vld [vmem:[%s3 + $0x30] sm:$0xff]
      %v3216 = vld [vmem:[%s3 + $0x38] sm:$0xff]
      %v3217 = vld [vmem:[%s3 + $0x40] sm:$0xff]
      %v3218 = vld [vmem:[%s3 + $0x48] sm:$0xff]
      %v3219 = vld [vmem:[%s3 + $0x50] sm:$0xff]
      %v3220 = vld [vmem:[%s3 + $0x58] sm:$0xff]
      %v3221 = vld [vmem:[%s3 + $0x60] sm:$0xff]
      %v3222 = vld [vmem:[%s3 + $0x68] sm:$0xff]
      %v3223 = vld [vmem:[%s3 + $0x70] sm:$0xff]
      %v3224 = vld [vmem:[%s3 + $0x78] sm:$0xff]
      %v3225 = vld [vmem:[%s3 + $0x80] sm:$0xff]
      %v3226 = vld [vmem:[%s3 + $0x88] sm:$0xff]
      %v3227 = vld [vmem:[%s3 + $0x90] sm:$0xff]
      %v3228 = vld [vmem:[%s3 + $0x98] sm:$0xff]
      %v3229 = vld [vmem:[%s3 + $0xa0] sm:$0xff]
      %v3230 = vld [vmem:[%s3 + $0xa8] sm:$0xff]
      %v3231 = vld [vmem:[%s3 + $0xb0] sm:$0xff]
      %v3232 = vld [vmem:[%s3 + $0xb8] sm:$0xff]
      %v3233 = vld [vmem:[%s3 + $0xc0] sm:$0xff]
      %v3234 = vld [vmem:[%s3 + $0xc8] sm:$0xff]
      %v3235 = vld [vmem:[%s3 + $0xd0] sm:$0xff]
      %v3236 = vld [vmem:[%s3 + $0xd8] sm:$0xff]
      %v3237 = vld [vmem:[%s3 + $0xe0] sm:$0xff]
      %v3238 = vld [vmem:[%s3 + $0xe8] sm:$0xff]
      %v3239 = vld [vmem:[%s3 + $0xf0] sm:$0xff]
      %v3240 = vld [vmem:[%s3 + $0xf8] sm:$0xff]
      %v3241 = vld [vmem:[%s3 + $0x100] sm:$0xff]
      %v3242 = vld [vmem:[%s3 + $0x108] sm:$0xff]
      %v3243 = vld [vmem:[%s3 + $0x110] sm:$0xff]
      %v3244 = vld [vmem:[%s3 + $0x118] sm:$0xff]
      %v3245 = vld [vmem:[%s3 + $0x120] sm:$0xff]
      %v3246 = vld [vmem:[%s3 + $0x128] sm:$0xff]
      %v3247 = vld [vmem:[%s3 + $0x130] sm:$0xff]
      %v3248 = vld [vmem:[%s3 + $0x138] sm:$0xff]
      %v3249 = vld [vmem:[%s3 + $0x140] sm:$0xff]
      %v3250 = vld [vmem:[%s3 + $0x148] sm:$0xff]
      %v3251 = vld [vmem:[%s3 + $0x150] sm:$0xff]
      %v3252 = vld [vmem:[%s3 + $0x158] sm:$0xff]
      %v3253 = vld [vmem:[%s3 + $0x160] sm:$0xff]
      %v3254 = vld [vmem:[%s3 + $0x168] sm:$0xff]
      %v3255 = vld [vmem:[%s3 + $0x170] sm:$0xff]
      %v3256 = vld [vmem:[%s3 + $0x178] sm:$0xff]
      %v3257 = vld [vmem:[%s3 + $0x180] sm:$0xff]
      %v3258 = vld [vmem:[%s3 + $0x188] sm:$0xff]
      %v3259 = vld [vmem:[%s3 + $0x190] sm:$0xff]
      %v3260 = vld [vmem:[%s3 + $0x198] sm:$0xff]
      %v3261 = vld [vmem:[%s3 + $0x1a0] sm:$0xff]
      %v3262 = vld [vmem:[%s3 + $0x1a8] sm:$0xff]
      %v3263 = vld [vmem:[%s3 + $0x1b0] sm:$0xff]
      %v3264 = vld [vmem:[%s3 + $0x1b8] sm:$0xff]
      %v3265 = vld [vmem:[%s3 + $0x1c0] sm:$0xff]
      %v3266 = vld [vmem:[%s3 + $0x1c8] sm:$0xff]
      %v3267 = vld [vmem:[%s3 + $0x1d0] sm:$0xff]
      %v3268 = vld [vmem:[%s3 + $0x1d8] sm:$0xff]
      %v3269 = vld [vmem:[%s3 + $0x1e0] sm:$0xff]
      %v3270 = vld [vmem:[%s3 + $0x1e8] sm:$0xff]
      %v3271 = vld [vmem:[%s3 + $0x1f0] sm:$0xff]
      %v3272 = vld [vmem:[%s3 + $0x1f8] sm:$0xff]
      %v3273 = vld [vmem:[%s3 + $0x200] sm:$0xff]
      %v3274 = vld [vmem:[%s3 + $0x208] sm:$0xff]
      %v3275 = vld [vmem:[%s3 + $0x210] sm:$0xff]
      %v3276 = vld [vmem:[%s3 + $0x218] sm:$0xff]
      %v3277 = vld [vmem:[%s3 + $0x220] sm:$0xff]
      %v3278 = vld [vmem:[%s3 + $0x228] sm:$0xff]
      %v3279 = vld [vmem:[%s3 + $0x230] sm:$0xff]
      %v3280 = vld [vmem:[%s3 + $0x238] sm:$0xff]
      %v3281 = vld [vmem:[%s3 + $0x240] sm:$0xff]
      %v3282 = vld [vmem:[%s3 + $0x248] sm:$0xff]
      %v3283 = vld [vmem:[%s3 + $0x250] sm:$0xff]
      %v3284 = vld [vmem:[%s3 + $0x258] sm:$0xff]
      %v3285 = vld [vmem:[%s3 + $0x260] sm:$0xff]
      %v3286 = vld [vmem:[%s3 + $0x268] sm:$0xff]
      %v3287 = vld [vmem:[%s3 + $0x270] sm:$0xff]
      %v3288 = vld [vmem:[%s3 + $0x278] sm:$0xff]
      %v3289 = vld [vmem:[%s4] sm:$0xff]
      %v3290 = vld [vmem:[%s4 + $0x8] sm:$0xff]
      %v3291 = vld [vmem:[%s4 + $0x10] sm:$0xff]
      %v3292 = vld [vmem:[%s4 + $0x18] sm:$0xff]
      %v3293 = vld [vmem:[%s4 + $0x20] sm:$0xff]
      %v3294 = vld [vmem:[%s4 + $0x28] sm:$0xff]
      %v3295 = vld [vmem:[%s4 + $0x30] sm:$0xff]
      %v3296 = vld [vmem:[%s4 + $0x38] sm:$0xff]
      %v3297 = vld [vmem:[%s4 + $0x40] sm:$0xff]
      %v3298 = vld [vmem:[%s4 + $0x48] sm:$0xff]
      %v3299 = vld [vmem:[%s4 + $0x50] sm:$0xff]
      %v3300 = vld [vmem:[%s4 + $0x58] sm:$0xff]
      %v3301 = vadd.f32 %v3164, %v3194
      %v3302 = vadd.f32 %v3165, %v3195
      %v3303 = vadd.f32 %v3166, %v3196
      %v3304 = vadd.f32 %v3167, %v3197
      %v3305 = vadd.f32 %v3168, %v3198
      %v3306 = vadd.f32 %v3174, %v3199
      %v3307 = vadd.f32 %v3175, %v3200
      %v3308 = vadd.f32 %v3176, %v3201
      %v3309 = vadd.f32 %v3177, %v3202
      %v3310 = vadd.f32 %v3178, %v3203
      %v3311 = vadd.f32 %v3184, %v3204
      %v3312 = vadd.f32 %v3185, %v3205
      %v3313 = vadd.f32 %v3186, %v3206
      %v3314 = vadd.f32 %v3187, %v3207
      %v3315 = vadd.f32 %v3188, %v3208
      %v3316 = vmul.f32 %v3301, %v3301
      %v3317 = vmul.f32 %v3302, %v3302
      %v3318 = vmul.f32 %v3303, %v3303
      %v3319 = vmul.f32 %v3304, %v3304
      %v3320 = vmul.f32 %v3305, %v3305
      %v3321 = vmul.f32 %v3306, %v3306
      %v3322 = vmul.f32 %v3307, %v3307
      %v3323 = vmul.f32 %v3308, %v3308
      %v3324 = vmul.f32 %v3309, %v3309
      %v3325 = vmul.f32 %v3310, %v3310
      %v3326 = vmul.f32 %v3311, %v3311
      %v3327 = vmul.f32 %v3312, %v3312
      %v3328 = vmul.f32 %v3313, %v3313
      %v3329 = vmul.f32 %v3314, %v3314
      %v3330 = vmul.f32 %v3315, %v3315
      %3331 = vmatprep.subr.mxu0 0.0
      %3332 = vmatpush1.msra.mxu0 %v3209
      %3333 = vmatprep.subr.mxu0 0.0
      %3334 = vmatpush1.msra.mxu0 %v3210
      %3335 = vmatprep.subr.mxu0 0.0
      %3336 = vmatpush1.msra.mxu0 %v3211
      %3337 = vmatprep.subr.mxu0 0.0
      %3338 = vmatpush1.msra.mxu0 %v3212
      %3339 = vmatprep.subr.mxu0 0.0
      %3340 = vmatpush1.msra.mxu0 %v3213
      %3341 = vmatprep.subr.mxu0 0.0
      %3342 = vmatpush1.msra.mxu0 %v3214
      %3343 = vmatprep.subr.mxu0 0.0
      %3344 = vmatpush1.msra.mxu0 %v3215
      %3345 = vmatprep.subr.mxu0 0.0
      %3346 = vmatpush1.msra.mxu0 %v3216
      %3347 = vmatprep.subr.mxu0 0.0
      %3348 = vmatpush1.msra.mxu0 %v3217
      %3349 = vmatprep.subr.mxu0 0.0
      %3350 = vmatpush1.msra.mxu0 %v3218
      %3351 = vmatprep.subr.mxu0 0.0
      %3352 = vmatpush1.msra.mxu0 %v3219
      %3353 = vmatprep.subr.mxu0 0.0
      %3354 = vmatpush1.msra.mxu0 %v3220
      %3355 = vmatprep.subr.mxu0 0.0
      %3356 = vmatpush1.msra.mxu0 %v3221
      %3357 = vmatprep.subr.mxu0 0.0
      %3358 = vmatpush1.msra.mxu0 %v3222
      %3359 = vmatprep.subr.mxu0 0.0
      %3360 = vmatpush1.msra.mxu0 %v3223
      %3361 = vmatprep.subr.mxu0 0.0
      %3362 = vmatpush1.msra.mxu0 %v3224
      %3363 = vmatprep.subr.mxu0 0.0
      %3364 = vmatpush1.msra.mxu0 %v3225
      %3365 = vmatprep.subr.mxu0 0.0
      %3366 = vmatpush1.msra.mxu0 %v3226
      %3367 = vmatprep.subr.mxu0 0.0
      %3368 = vmatpush1.msra.mxu0 %v3227
      %3369 = vmatprep.subr.mxu0 0.0
      %3370 = vmatpush1.msra.mxu0 %v3228
      %3371 = vmatprep.subr.mxu0 0.0
      %3372 = vmatpush1.msra.mxu0 %v3229
      %3373 = vmatprep.subr.mxu0 0.0
      %3374 = vmatpush1.msra.mxu0 %v3230
      %3375 = vmatprep.subr.mxu0 0.0
      %3376 = vmatpush1.msra.mxu0 %v3231
      %3377 = vmatprep.subr.mxu0 0.0
      %3378 = vmatpush1.msra.mxu0 %v3232
      %3379 = vmatprep.subr.mxu0 0.0
      %3380 = vmatpush1.msra.mxu0 %v3233
      %3381 = vmatprep.subr.mxu0 0.0
      %3382 = vmatpush1.msra.mxu0 %v3234
      %3383 = vmatprep.subr.mxu0 0.0
      %3384 = vmatpush1.msra.mxu0 %v3235
      %3385 = vmatprep.subr.mxu0 0.0
      %3386 = vmatpush1.msra.mxu0 %v3236
      %3387 = vmatprep.subr.mxu0 0.0
      %3388 = vmatpush1.msra.mxu0 %v3237
      %3389 = vmatprep.subr.mxu0 0.0
      %3390 = vmatpush1.msra.mxu0 %v3238
      %3391 = vmatprep.subr.mxu0 0.0
      %3392 = vmatpush1.msra.mxu0 %v3239
      %3393 = vmatprep.subr.mxu0 0.0
      %3394 = vmatpush1.msra.mxu0 %v3240
      %3395 = vmatprep.mubr.f32.mxu0 %v3317
      %3396 = vmatmul.mubr.f32.gmra.mrb[0].mxu0 %v3316
      %v3397 = vpop.f32.mrb[0].mxu0
      %v3398 = vadd.f32 0.0, %v3397
      %v3399 = vpop.f32.mrb[0].mxu0
      %3400 = vmatprep.mubr.f32.mxu0 %v3322
      %3401 = vmatmul.mubr.f32.gmra.mrb[0].mxu0 %v3321
      %v3402 = vpop.f32.mrb[0].mxu0
      %v3403 = vadd.f32 0.0, %v3402
      %v3404 = vpop.f32.mrb[0].mxu0
      %3405 = vmatprep.mubr.f32.mxu0 %v3327
      %3406 = vmatmul.mubr.f32.gmra.mrb[0].mxu0 %v3326
      %v3407 = vpop.f32.mrb[0].mxu0
      %v3408 = vadd.f32 0.0, %v3407
      %v3409 = vpop.f32.mrb[0].mxu0
      %3410 = vdwg.mxu0
      %3411 = vmatprep.subr.mxu0 0.0
      %3412 = vmatpush1.msra.mxu0 %v3241
      %3413 = vmatprep.subr.mxu0 0.0
      %3414 = vmatpush1.msra.mxu0 %v3242
      %3415 = vmatprep.subr.mxu0 0.0
      %3416 = vmatpush1.msra.mxu0 %v3243
      %3417 = vmatprep.subr.mxu0 0.0
      %3418 = vmatpush1.msra.mxu0 %v3244
      %3419 = vmatprep.subr.mxu0 0.0
      %3420 = vmatpush1.msra.mxu0 %v3245
      %3421 = vmatprep.subr.mxu0 0.0
      %3422 = vmatpush1.msra.mxu0 %v3246
      %3423 = vmatprep.subr.mxu0 0.0
      %3424 = vmatpush1.msra.mxu0 %v3247
      %3425 = vmatprep.subr.mxu0 0.0
      %3426 = vmatpush1.msra.mxu0 %v3248
      %3427 = vmatprep.subr.mxu0 0.0
      %3428 = vmatpush1.msra.mxu0 %v3249
      %3429 = vmatprep.subr.mxu0 0.0
      %3430 = vmatpush1.msra.mxu0 %v3250
      %3431 = vmatprep.subr.mxu0 0.0
      %3432 = vmatpush1.msra.mxu0 %v3251
      %3433 = vmatprep.subr.mxu0 0.0
      %3434 = vmatpush1.msra.mxu0 %v3252
      %3435 = vmatprep.subr.mxu0 0.0
      %3436 = vmatpush1.msra.mxu0 %v3253
      %3437 = vmatprep.subr.mxu0 0.0
      %3438 = vmatpush1.msra.mxu0 %v3254
      %3439 = vmatprep.subr.mxu0 0.0
      %3440 = vmatpush1.msra.mxu0 %v3255
      %3441 = vmatprep.subr.mxu0 0.0
      %3442 = vmatpush1.msra.mxu0 %v3256
      %3443 = vmatprep.subr.mxu0 0.0
      %3444 = vmatpush1.msra.mxu0 %v3257
      %3445 = vmatprep.subr.mxu0 0.0
      %3446 = vmatpush1.msra.mxu0 %v3258
      %3447 = vmatprep.subr.mxu0 0.0
      %3448 = vmatpush1.msra.mxu0 %v3259
      %3449 = vmatprep.subr.mxu0 0.0
      %3450 = vmatpush1.msra.mxu0 %v3260
      %3451 = vmatprep.subr.mxu0 0.0
      %3452 = vmatpush1.msra.mxu0 %v3261
      %3453 = vmatprep.subr.mxu0 0.0
      %3454 = vmatpush1.msra.mxu0 %v3262
      %3455 = vmatprep.subr.mxu0 0.0
      %3456 = vmatpush1.msra.mxu0 %v3263
      %3457 = vmatprep.subr.mxu0 0.0
      %3458 = vmatpush1.msra.mxu0 %v3264
      %3459 = vmatprep.subr.mxu0 0.0
      %3460 = vmatpush1.msra.mxu0 %v3265
      %3461 = vmatprep.subr.mxu0 0.0
      %3462 = vmatpush1.msra.mxu0 %v3266
      %3463 = vmatprep.subr.mxu0 0.0
      %3464 = vmatpush1.msra.mxu0 %v3267
      %3465 = vmatprep.subr.mxu0 0.0
      %3466 = vmatpush1.msra.mxu0 %v3268
      %3467 = vmatprep.subr.mxu0 0.0
      %3468 = vmatpush1.msra.mxu0 %v3269
      %3469 = vmatprep.subr.mxu0 0.0
      %3470 = vmatpush1.msra.mxu0 %v3270
      %3471 = vmatprep.subr.mxu0 0.0
      %3472 = vmatpush1.msra.mxu0 %v3271
      %3473 = vmatprep.subr.mxu0 0.0
      %3474 = vmatpush1.msra.mxu0 %v3272
      %3475 = vmatprep.mubr.f32.mxu0 %v3319
      %3476 = vmatmul.mubr.f32.gmra.mrb[0].mxu0 %v3318
      %v3477 = vpop.f32.mrb[0].mxu0
      %v3478 = vadd.f32 %v3398, %v3477
      %v3479 = vpop.f32.mrb[0].mxu0
      %3480 = vmatprep.mubr.f32.mxu0 %v3324
      %3481 = vmatmul.mubr.f32.gmra.mrb[0].mxu0 %v3323
      %v3482 = vpop.f32.mrb[0].mxu0
      %v3483 = vadd.f32 %v3403, %v3482
      %v3484 = vpop.f32.mrb[0].mxu0
      %3485 = vmatprep.mubr.f32.mxu0 %v3329
      %3486 = vmatmul.mubr.f32.gmra.mrb[0].mxu0 %v3328
      %v3487 = vpop.f32.mrb[0].mxu0
      %v3488 = vadd.f32 %v3408, %v3487
      %v3489 = vpop.f32.mrb[0].mxu0
      %3490 = vdwg.mxu0
      %3491 = vmatprep.subr.mxu0 0.0
      %3492 = vmatpush1.msra.mxu0 %v3273
      %3493 = vmatprep.subr.mxu0 0.0
      %3494 = vmatpush1.msra.mxu0 %v3274
      %3495 = vmatprep.subr.mxu0 0.0
      %3496 = vmatpush1.msra.mxu0 %v3275
      %3497 = vmatprep.subr.mxu0 0.0
      %3498 = vmatpush1.msra.mxu0 %v3276
      %3499 = vmatprep.subr.mxu0 0.0
      %3500 = vmatpush1.msra.mxu0 %v3277
      %3501 = vmatprep.subr.mxu0 0.0
      %3502 = vmatpush1.msra.mxu0 %v3278
      %3503 = vmatprep.subr.mxu0 0.0
      %3504 = vmatpush1.msra.mxu0 %v3279
      %3505 = vmatprep.subr.mxu0 0.0
      %3506 = vmatpush1.msra.mxu0 %v3280
      %3507 = vmatprep.subr.mxu0 0.0
      %3508 = vmatpush1.msra.mxu0 %v3281
      %3509 = vmatprep.subr.mxu0 0.0
      %3510 = vmatpush1.msra.mxu0 %v3282
      %3511 = vmatprep.subr.mxu0 0.0
      %3512 = vmatpush1.msra.mxu0 %v3283
      %3513 = vmatprep.subr.mxu0 0.0
      %3514 = vmatpush1.msra.mxu0 %v3284
      %3515 = vmatprep.subr.mxu0 0.0
      %3516 = vmatpush1.msra.mxu0 %v3285
      %3517 = vmatprep.subr.mxu0 0.0
      %3518 = vmatpush1.msra.mxu0 %v3286
      %3519 = vmatprep.subr.mxu0 0.0
      %3520 = vmatpush1.msra.mxu0 %v3287
      %3521 = vmatprep.subr.mxu0 0.0
      %3522 = vmatpush1.msra.mxu0 %v3288
      %3523 = vmatprep.subr.mxu0 0.0
      %3524 = vmatpush1.msra.mxu0 0.0
      %3525 = vmatprep.subr.mxu0 0.0
      %3526 = vmatpush1.msra.mxu0 0.0
      %3527 = vmatprep.subr.mxu0 0.0
      %3528 = vmatpush1.msra.mxu0 0.0
      %3529 = vmatprep.subr.mxu0 0.0
      %3530 = vmatpush1.msra.mxu0 0.0
      %3531 = vmatprep.subr.mxu0 0.0
      %3532 = vmatpush1.msra.mxu0 0.0
      %3533 = vmatprep.subr.mxu0 0.0
      %3534 = vmatpush1.msra.mxu0 0.0
      %3535 = vmatprep.subr.mxu0 0.0
      %3536 = vmatpush1.msra.mxu0 0.0
      %3537 = vmatprep.subr.mxu0 0.0
      %3538 = vmatpush1.msra.mxu0 0.0
      %3539 = vmatprep.subr.mxu0 0.0
      %3540 = vmatpush1.msra.mxu0 0.0
      %3541 = vmatprep.subr.mxu0 0.0
      %3542 = vmatpush1.msra.mxu0 0.0
      %3543 = vmatprep.subr.mxu0 0.0
      %3544 = vmatpush1.msra.mxu0 0.0
      %3545 = vmatprep.subr.mxu0 0.0
      %3546 = vmatpush1.msra.mxu0 0.0
      %3547 = vmatprep.subr.mxu0 0.0
      %3548 = vmatpush1.msra.mxu0 0.0
      %3549 = vmatprep.subr.mxu0 0.0
      %3550 = vmatpush1.msra.mxu0 0.0
      %3551 = vmatprep.subr.mxu0 0.0
      %3552 = vmatpush1.msra.mxu0 0.0
      %3553 = vmatprep.subr.mxu0 0.0
      %3554 = vmatpush1.msra.mxu0 0.0
      %3555 = vmatprep.mubr.f32.mxu0 0.0
      %3556 = vmatmul.mubr.f32.gmra.mrb[0].mxu0 %v3320
      %v3557 = vpop.f32.mrb[0].mxu0
      %v3558 = vadd.f32 %v3478, %v3557
      %v3559 = vpop.f32.mrb[0].mxu0
      %3560 = vmatprep.mubr.f32.mxu0 0.0
      %3561 = vmatmul.mubr.f32.gmra.mrb[0].mxu0 %v3325
      %v3562 = vpop.f32.mrb[0].mxu0
      %v3563 = vadd.f32 %v3483, %v3562
      %v3564 = vpop.f32.mrb[0].mxu0
      %3565 = vmatprep.mubr.f32.mxu0 0.0
      %3566 = vmatmul.mubr.f32.gmra.mrb[0].mxu0 %v3330
      %v3567 = vpop.f32.mrb[0].mxu0
      %v3568 = vadd.f32 %v3488, %v3567
      %v3569 = vpop.f32.mrb[0].mxu0
      %3570 = vdwg.mxu0
      %v3571 = vlog2.pop %v3558
      %v3572 = vmul.f32 %v3571, 0.6931472
      %v3573 = vlog2.pop %v3563
      %v3574 = vmul.f32 %v3573, 0.6931472
      %v3575 = vlog2.pop %v3568
      %v3576 = vmul.f32 %v3575, 0.6931472
      %v3577 = vmul.f32 %v3572, %v3289
      %v3578 = vmul.f32 %v3574, %v3290
      %v3579 = vmul.f32 %v3576, %v3291
      %v3580 = vmul.f32 %v3572, %v3292
      %v3581 = vmul.f32 %v3574, %v3293
      %v3582 = vmul.f32 %v3576, %v3294
      %v3583 = vmul.f32 %v3572, %v3295
      %v3584 = vmul.f32 %v3574, %v3296
      %v3585 = vmul.f32 %v3576, %v3297
      %v3586 = vmul.f32 %v3572, %v3298
      %v3587 = vmul.f32 %v3574, %v3299
      %v3588 = vmul.f32 %v3576, %v3300
      %vm3589 = vcmask 343040
      %v3590 = vsel %vm3589, %v3577, 0.0
      %3591 = vadd.xlane.f32.xlu0 %v3590
      %v3592 = vpop.xlane.xlu0 %3591
      %v3593 = vsel %vm3589, %v3578, 0.0
      %3594 = vadd.xlane.f32.xlu0 %v3593
      %v3595 = vpop.xlane.xlu0 %3594
      %v3596 = vsel %vm3589, %v3579, 0.0
      %3597 = vadd.xlane.f32.xlu0 %v3596
      %v3598 = vpop.xlane.xlu0 %3597
      %v3599 = vsel %vm3589, %v3580, 0.0
      %3600 = vadd.xlane.f32.xlu0 %v3599
      %v3601 = vpop.xlane.xlu0 %3600
      %v3602 = vsel %vm3589, %v3581, 0.0
      %3603 = vadd.xlane.f32.xlu0 %v3602
      %v3604 = vpop.xlane.xlu0 %3603
      %v3605 = vsel %vm3589, %v3582, 0.0
      %3606 = vadd.xlane.f32.xlu0 %v3605
      %v3607 = vpop.xlane.xlu0 %3606
      %v3608 = vsel %vm3589, %v3583, 0.0
      %3609 = vadd.xlane.f32.xlu0 %v3608
      %v3610 = vpop.xlane.xlu0 %3609
      %v3611 = vsel %vm3589, %v3584, 0.0
      %3612 = vadd.xlane.f32.xlu0 %v3611
      %v3613 = vpop.xlane.xlu0 %3612
      %v3614 = vsel %vm3589, %v3585, 0.0
      %3615 = vadd.xlane.f32.xlu0 %v3614
      %v3616 = vpop.xlane.xlu0 %3615
      %v3617 = vsel %vm3589, %v3586, 0.0
      %3618 = vadd.xlane.f32.xlu0 %v3617
      %v3619 = vpop.xlane.xlu0 %3618
      %v3620 = vsel %vm3589, %v3587, 0.0
      %3621 = vadd.xlane.f32.xlu0 %v3620
      %v3622 = vpop.xlane.xlu0 %3621
      %v3623 = vsel %vm3589, %v3588, 0.0
      %3624 = vadd.xlane.f32.xlu0 %v3623
      %v3625 = vpop.xlane.xlu0 %3624
      %v3626 = vadd.f32 %v3592, %v3595
      %v3627 = vadd.f32 %v3626, %v3598
      %v3628 = vrot.slane %v3627, 4
      %v3629 = vadd.f32 %v3627, %v3628
      %v3630 = vrot.slane %v3629, 2
      %v3631 = vadd.f32 %v3629, %v3630
      %v3632 = vrot.slane %v3631, 1
      %v3633 = vadd.f32 %v3631, %v3632
      %v3634 = vadd.f32 %v3601, %v3604
      %v3635 = vadd.f32 %v3634, %v3607
      %v3636 = vrot.slane %v3635, 4
      %v3637 = vadd.f32 %v3635, %v3636
      %v3638 = vrot.slane %v3637, 2
      %v3639 = vadd.f32 %v3637, %v3638
      %v3640 = vrot.slane %v3639, 1
      %v3641 = vadd.f32 %v3639, %v3640
      %v3642 = vadd.f32 %v3610, %v3613
      %v3643 = vadd.f32 %v3642, %v3616
      %v3644 = vrot.slane %v3643, 4
      %v3645 = vadd.f32 %v3643, %v3644
      %v3646 = vrot.slane %v3645, 2
      %v3647 = vadd.f32 %v3645, %v3646
      %v3648 = vrot.slane %v3647, 1
      %v3649 = vadd.f32 %v3647, %v3648
      %v3650 = vadd.f32 %v3619, %v3622
      %v3651 = vadd.f32 %v3650, %v3625
      %v3652 = vrot.slane %v3651, 4
      %v3653 = vadd.f32 %v3651, %v3652
      %v3654 = vrot.slane %v3653, 2
      %v3655 = vadd.f32 %v3653, %v3654
      %v3656 = vrot.slane %v3655, 1
      %v3657 = vadd.f32 %v3655, %v3656
      %vm3658 = vcmask 1040384
      %v3659 = vsel %vm3658, %v3633, %v3641
      %vm3660 = vcmask 1041408
      %v3661 = vsel %vm3660, %v3659, %v3649
      %vm3662 = vcmask 1042432
      %v3663 = vsel %vm3662, %v3661, %v3657
      %v3664 = vadd.f32 %v3169, %v3194
      %v3665 = vadd.f32 %v3170, %v3195
      %v3666 = vadd.f32 %v3171, %v3196
      %v3667 = vadd.f32 %v3172, %v3197
      %v3668 = vadd.f32 %v3173, %v3198
      %v3669 = vadd.f32 %v3179, %v3199
      %v3670 = vadd.f32 %v3180, %v3200
      %v3671 = vadd.f32 %v3181, %v3201
      %v3672 = vadd.f32 %v3182, %v3202
      %v3673 = vadd.f32 %v3183, %v3203
      %v3674 = vadd.f32 %v3189, %v3204
      %v3675 = vadd.f32 %v3190, %v3205
      %v3676 = vadd.f32 %v3191, %v3206
      %v3677 = vadd.f32 %v3192, %v3207
      %v3678 = vadd.f32 %v3193, %v3208
      %v3679 = vmul.f32 %v3664, %v3664
      %v3680 = vmul.f32 %v3665, %v3665
      %v3681 = vmul.f32 %v3666, %v3666
      %v3682 = vmul.f32 %v3667, %v3667
      %v3683 = vmul.f32 %v3668, %v3668
      %v3684 = vmul.f32 %v3669, %v3669
      %v3685 = vmul.f32 %v3670, %v3670
      %v3686 = vmul.f32 %v3671, %v3671
      %v3687 = vmul.f32 %v3672, %v3672
      %v3688 = vmul.f32 %v3673, %v3673
      %v3689 = vmul.f32 %v3674, %v3674
      %v3690 = vmul.f32 %v3675, %v3675
      %v3691 = vmul.f32 %v3676, %v3676
      %v3692 = vmul.f32 %v3677, %v3677
      %v3693 = vmul.f32 %v3678, %v3678
      %3694 = vmatprep.subr.mxu0 0.0
      %3695 = vmatpush1.msra.mxu0 %v3209
      %3696 = vmatprep.subr.mxu0 0.0
      %3697 = vmatpush1.msra.mxu0 %v3210
      %3698 = vmatprep.subr.mxu0 0.0
      %3699 = vmatpush1.msra.mxu0 %v3211
      %3700 = vmatprep.subr.mxu0 0.0
      %3701 = vmatpush1.msra.mxu0 %v3212
      %3702 = vmatprep.subr.mxu0 0.0
      %3703 = vmatpush1.msra.mxu0 %v3213
      %3704 = vmatprep.subr.mxu0 0.0
      %3705 = vmatpush1.msra.mxu0 %v3214
      %3706 = vmatprep.subr.mxu0 0.0
      %3707 = vmatpush1.msra.mxu0 %v3215
      %3708 = vmatprep.subr.mxu0 0.0
      %3709 = vmatpush1.msra.mxu0 %v3216
      %3710 = vmatprep.subr.mxu0 0.0
      %3711 = vmatpush1.msra.mxu0 %v3217
      %3712 = vmatprep.subr.mxu0 0.0
      %3713 = vmatpush1.msra.mxu0 %v3218
      %3714 = vmatprep.subr.mxu0 0.0
      %3715 = vmatpush1.msra.mxu0 %v3219
      %3716 = vmatprep.subr.mxu0 0.0
      %3717 = vmatpush1.msra.mxu0 %v3220
      %3718 = vmatprep.subr.mxu0 0.0
      %3719 = vmatpush1.msra.mxu0 %v3221
      %3720 = vmatprep.subr.mxu0 0.0
      %3721 = vmatpush1.msra.mxu0 %v3222
      %3722 = vmatprep.subr.mxu0 0.0
      %3723 = vmatpush1.msra.mxu0 %v3223
      %3724 = vmatprep.subr.mxu0 0.0
      %3725 = vmatpush1.msra.mxu0 %v3224
      %3726 = vmatprep.subr.mxu0 0.0
      %3727 = vmatpush1.msra.mxu0 %v3225
      %3728 = vmatprep.subr.mxu0 0.0
      %3729 = vmatpush1.msra.mxu0 %v3226
      %3730 = vmatprep.subr.mxu0 0.0
      %3731 = vmatpush1.msra.mxu0 %v3227
      %3732 = vmatprep.subr.mxu0 0.0
      %3733 = vmatpush1.msra.mxu0 %v3228
      %3734 = vmatprep.subr.mxu0 0.0
      %3735 = vmatpush1.msra.mxu0 %v3229
      %3736 = vmatprep.subr.mxu0 0.0
      %3737 = vmatpush1.msra.mxu0 %v3230
      %3738 = vmatprep.subr.mxu0 0.0
      %3739 = vmatpush1.msra.mxu0 %v3231
      %3740 = vmatprep.subr.mxu0 0.0
      %3741 = vmatpush1.msra.mxu0 %v3232
      %3742 = vmatprep.subr.mxu0 0.0
      %3743 = vmatpush1.msra.mxu0 %v3233
      %3744 = vmatprep.subr.mxu0 0.0
      %3745 = vmatpush1.msra.mxu0 %v3234
      %3746 = vmatprep.subr.mxu0 0.0
      %3747 = vmatpush1.msra.mxu0 %v3235
      %3748 = vmatprep.subr.mxu0 0.0
      %3749 = vmatpush1.msra.mxu0 %v3236
      %3750 = vmatprep.subr.mxu0 0.0
      %3751 = vmatpush1.msra.mxu0 %v3237
      %3752 = vmatprep.subr.mxu0 0.0
      %3753 = vmatpush1.msra.mxu0 %v3238
      %3754 = vmatprep.subr.mxu0 0.0
      %3755 = vmatpush1.msra.mxu0 %v3239
      %3756 = vmatprep.subr.mxu0 0.0
      %3757 = vmatpush1.msra.mxu0 %v3240
      %3758 = vmatprep.mubr.f32.mxu0 %v3680
      %3759 = vmatmul.mubr.f32.gmra.mrb[0].mxu0 %v3679
      %v3760 = vpop.f32.mrb[0].mxu0
      %v3761 = vadd.f32 0.0, %v3760
      %v3762 = vpop.f32.mrb[0].mxu0
      %3763 = vmatprep.mubr.f32.mxu0 %v3685
      %3764 = vmatmul.mubr.f32.gmra.mrb[0].mxu0 %v3684
      %v3765 = vpop.f32.mrb[0].mxu0
      %v3766 = vadd.f32 0.0, %v3765
      %v3767 = vpop.f32.mrb[0].mxu0
      %3768 = vmatprep.mubr.f32.mxu0 %v3690
      %3769 = vmatmul.mubr.f32.gmra.mrb[0].mxu0 %v3689
      %v3770 = vpop.f32.mrb[0].mxu0
      %v3771 = vadd.f32 0.0, %v3770
      %v3772 = vpop.f32.mrb[0].mxu0
      %3773 = vdwg.mxu0
      %3774 = vmatprep.subr.mxu0 0.0
      %3775 = vmatpush1.msra.mxu0 %v3241
      %3776 = vmatprep.subr.mxu0 0.0
      %3777 = vmatpush1.msra.mxu0 %v3242
      %3778 = vmatprep.subr.mxu0 0.0
      %3779 = vmatpush1.msra.mxu0 %v3243
      %3780 = vmatprep.subr.mxu0 0.0
      %3781 = vmatpush1.msra.mxu0 %v3244
      %3782 = vmatprep.subr.mxu0 0.0
      %3783 = vmatpush1.msra.mxu0 %v3245
      %3784 = vmatprep.subr.mxu0 0.0
      %3785 = vmatpush1.msra.mxu0 %v3246
      %3786 = vmatprep.subr.mxu0 0.0
      %3787 = vmatpush1.msra.mxu0 %v3247
      %3788 = vmatprep.subr.mxu0 0.0
      %3789 = vmatpush1.msra.mxu0 %v3248
      %3790 = vmatprep.subr.mxu0 0.0
      %3791 = vmatpush1.msra.mxu0 %v3249
      %3792 = vmatprep.subr.mxu0 0.0
      %3793 = vmatpush1.msra.mxu0 %v3250
      %3794 = vmatprep.subr.mxu0 0.0
      %3795 = vmatpush1.msra.mxu0 %v3251
      %3796 = vmatprep.subr.mxu0 0.0
      %3797 = vmatpush1.msra.mxu0 %v3252
      %3798 = vmatprep.subr.mxu0 0.0
      %3799 = vmatpush1.msra.mxu0 %v3253
      %3800 = vmatprep.subr.mxu0 0.0
      %3801 = vmatpush1.msra.mxu0 %v3254
      %3802 = vmatprep.subr.mxu0 0.0
      %3803 = vmatpush1.msra.mxu0 %v3255
      %3804 = vmatprep.subr.mxu0 0.0
      %3805 = vmatpush1.msra.mxu0 %v3256
      %3806 = vmatprep.subr.mxu0 0.0
      %3807 = vmatpush1.msra.mxu0 %v3257
      %3808 = vmatprep.subr.mxu0 0.0
      %3809 = vmatpush1.msra.mxu0 %v3258
      %3810 = vmatprep.subr.mxu0 0.0
      %3811 = vmatpush1.msra.mxu0 %v3259
      %3812 = vmatprep.subr.mxu0 0.0
      %3813 = vmatpush1.msra.mxu0 %v3260
      %3814 = vmatprep.subr.mxu0 0.0
      %3815 = vmatpush1.msra.mxu0 %v3261
      %3816 = vmatprep.subr.mxu0 0.0
      %3817 = vmatpush1.msra.mxu0 %v3262
      %3818 = vmatprep.subr.mxu0 0.0
      %3819 = vmatpush1.msra.mxu0 %v3263
      %3820 = vmatprep.subr.mxu0 0.0
      %3821 = vmatpush1.msra.mxu0 %v3264
      %3822 = vmatprep.subr.mxu0 0.0
      %3823 = vmatpush1.msra.mxu0 %v3265
      %3824 = vmatprep.subr.mxu0 0.0
      %3825 = vmatpush1.msra.mxu0 %v3266
      %3826 = vmatprep.subr.mxu0 0.0
      %3827 = vmatpush1.msra.mxu0 %v3267
      %3828 = vmatprep.subr.mxu0 0.0
      %3829 = vmatpush1.msra.mxu0 %v3268
      %3830 = vmatprep.subr.mxu0 0.0
      %3831 = vmatpush1.msra.mxu0 %v3269
      %3832 = vmatprep.subr.mxu0 0.0
      %3833 = vmatpush1.msra.mxu0 %v3270
      %3834 = vmatprep.subr.mxu0 0.0
      %3835 = vmatpush1.msra.mxu0 %v3271
      %3836 = vmatprep.subr.mxu0 0.0
      %3837 = vmatpush1.msra.mxu0 %v3272
      %3838 = vmatprep.mubr.f32.mxu0 %v3682
      %3839 = vmatmul.mubr.f32.gmra.mrb[0].mxu0 %v3681
      %v3840 = vpop.f32.mrb[0].mxu0
      %v3841 = vadd.f32 %v3761, %v3840
      %v3842 = vpop.f32.mrb[0].mxu0
      %3843 = vmatprep.mubr.f32.mxu0 %v3687
      %3844 = vmatmul.mubr.f32.gmra.mrb[0].mxu0 %v3686
      %v3845 = vpop.f32.mrb[0].mxu0
      %v3846 = vadd.f32 %v3766, %v3845
      %v3847 = vpop.f32.mrb[0].mxu0
      %3848 = vmatprep.mubr.f32.mxu0 %v3692
      %3849 = vmatmul.mubr.f32.gmra.mrb[0].mxu0 %v3691
      %v3850 = vpop.f32.mrb[0].mxu0
      %v3851 = vadd.f32 %v3771, %v3850
      %v3852 = vpop.f32.mrb[0].mxu0
      %3853 = vdwg.mxu0
      %3854 = vmatprep.subr.mxu0 0.0
      %3855 = vmatpush1.msra.mxu0 %v3273
      %3856 = vmatprep.subr.mxu0 0.0
      %3857 = vmatpush1.msra.mxu0 %v3274
      %3858 = vmatprep.subr.mxu0 0.0
      %3859 = vmatpush1.msra.mxu0 %v3275
      %3860 = vmatprep.subr.mxu0 0.0
      %3861 = vmatpush1.msra.mxu0 %v3276
      %3862 = vmatprep.subr.mxu0 0.0
      %3863 = vmatpush1.msra.mxu0 %v3277
      %3864 = vmatprep.subr.mxu0 0.0
      %3865 = vmatpush1.msra.mxu0 %v3278
      %3866 = vmatprep.subr.mxu0 0.0
      %3867 = vmatpush1.msra.mxu0 %v3279
      %3868 = vmatprep.subr.mxu0 0.0
      %3869 = vmatpush1.msra.mxu0 %v3280
      %3870 = vmatprep.subr.mxu0 0.0
      %3871 = vmatpush1.msra.mxu0 %v3281
      %3872 = vmatprep.subr.mxu0 0.0
      %3873 = vmatpush1.msra.mxu0 %v3282
      %3874 = vmatprep.subr.mxu0 0.0
      %3875 = vmatpush1.msra.mxu0 %v3283
      %3876 = vmatprep.subr.mxu0 0.0
      %3877 = vmatpush1.msra.mxu0 %v3284
      %3878 = vmatprep.subr.mxu0 0.0
      %3879 = vmatpush1.msra.mxu0 %v3285
      %3880 = vmatprep.subr.mxu0 0.0
      %3881 = vmatpush1.msra.mxu0 %v3286
      %3882 = vmatprep.subr.mxu0 0.0
      %3883 = vmatpush1.msra.mxu0 %v3287
      %3884 = vmatprep.subr.mxu0 0.0
      %3885 = vmatpush1.msra.mxu0 %v3288
      %3886 = vmatprep.subr.mxu0 0.0
      %3887 = vmatpush1.msra.mxu0 0.0
      %3888 = vmatprep.subr.mxu0 0.0
      %3889 = vmatpush1.msra.mxu0 0.0
      %3890 = vmatprep.subr.mxu0 0.0
      %3891 = vmatpush1.msra.mxu0 0.0
      %3892 = vmatprep.subr.mxu0 0.0
      %3893 = vmatpush1.msra.mxu0 0.0
      %3894 = vmatprep.subr.mxu0 0.0
      %3895 = vmatpush1.msra.mxu0 0.0
      %3896 = vmatprep.subr.mxu0 0.0
      %3897 = vmatpush1.msra.mxu0 0.0
      %3898 = vmatprep.subr.mxu0 0.0
      %3899 = vmatpush1.msra.mxu0 0.0
      %3900 = vmatprep.subr.mxu0 0.0
      %3901 = vmatpush1.msra.mxu0 0.0
      %3902 = vmatprep.subr.mxu0 0.0
      %3903 = vmatpush1.msra.mxu0 0.0
      %3904 = vmatprep.subr.mxu0 0.0
      %3905 = vmatpush1.msra.mxu0 0.0
      %3906 = vmatprep.subr.mxu0 0.0
      %3907 = vmatpush1.msra.mxu0 0.0
      %3908 = vmatprep.subr.mxu0 0.0
      %3909 = vmatpush1.msra.mxu0 0.0
      %3910 = vmatprep.subr.mxu0 0.0
      %3911 = vmatpush1.msra.mxu0 0.0
      %3912 = vmatprep.subr.mxu0 0.0
      %3913 = vmatpush1.msra.mxu0 0.0
      %3914 = vmatprep.subr.mxu0 0.0
      %3915 = vmatpush1.msra.mxu0 0.0
      %3916 = vmatprep.subr.mxu0 0.0
      %3917 = vmatpush1.msra.mxu0 0.0
      %3918 = vmatprep.mubr.f32.mxu0 0.0
      %3919 = vmatmul.mubr.f32.gmra.mrb[0].mxu0 %v3683
      %v3920 = vpop.f32.mrb[0].mxu0
      %v3921 = vadd.f32 %v3841, %v3920
      %v3922 = vpop.f32.mrb[0].mxu0
      %3923 = vmatprep.mubr.f32.mxu0 0.0
      %3924 = vmatmul.mubr.f32.gmra.mrb[0].mxu0 %v3688
      %v3925 = vpop.f32.mrb[0].mxu0
      %v3926 = vadd.f32 %v3846, %v3925
      %v3927 = vpop.f32.mrb[0].mxu0
      %3928 = vmatprep.mubr.f32.mxu0 0.0
      %3929 = vmatmul.mubr.f32.gmra.mrb[0].mxu0 %v3693
      %v3930 = vpop.f32.mrb[0].mxu0
      %v3931 = vadd.f32 %v3851, %v3930
      %v3932 = vpop.f32.mrb[0].mxu0
      %3933 = vdwg.mxu0
      %v3934 = vlog2.pop %v3921
      %v3935 = vmul.f32 %v3934, 0.6931472
      %v3936 = vlog2.pop %v3926
      %v3937 = vmul.f32 %v3936, 0.6931472
      %v3938 = vlog2.pop %v3931
      %v3939 = vmul.f32 %v3938, 0.6931472
      %v3940 = vmul.f32 %v3935, %v3289
      %v3941 = vmul.f32 %v3937, %v3290
      %v3942 = vmul.f32 %v3939, %v3291
      %v3943 = vmul.f32 %v3935, %v3292
      %v3944 = vmul.f32 %v3937, %v3293
      %v3945 = vmul.f32 %v3939, %v3294
      %v3946 = vmul.f32 %v3935, %v3295
      %v3947 = vmul.f32 %v3937, %v3296
      %v3948 = vmul.f32 %v3939, %v3297
      %v3949 = vmul.f32 %v3935, %v3298
      %v3950 = vmul.f32 %v3937, %v3299
      %v3951 = vmul.f32 %v3939, %v3300
      %v3952 = vsel %vm3589, %v3940, 0.0
      %3953 = vadd.xlane.f32.xlu0 %v3952
      %v3954 = vpop.xlane.xlu0 %3953
      %v3955 = vsel %vm3589, %v3941, 0.0
      %3956 = vadd.xlane.f32.xlu0 %v3955
      %v3957 = vpop.xlane.xlu0 %3956
      %v3958 = vsel %vm3589, %v3942, 0.0
      %3959 = vadd.xlane.f32.xlu0 %v3958
      %v3960 = vpop.xlane.xlu0 %3959
      %v3961 = vsel %vm3589, %v3943, 0.0
      %3962 = vadd.xlane.f32.xlu0 %v3961
      %v3963 = vpop.xlane.xlu0 %3962
      %v3964 = vsel %vm3589, %v3944, 0.0
      %3965 = vadd.xlane.f32.xlu0 %v3964
      %v3966 = vpop.xlane.xlu0 %3965
      %v3967 = vsel %vm3589, %v3945, 0.0
      %3968 = vadd.xlane.f32.xlu0 %v3967
      %v3969 = vpop.xlane.xlu0 %3968
      %v3970 = vsel %vm3589, %v3946, 0.0
      %3971 = vadd.xlane.f32.xlu0 %v3970
      %v3972 = vpop.xlane.xlu0 %3971
      %v3973 = vsel %vm3589, %v3947, 0.0
      %3974 = vadd.xlane.f32.xlu0 %v3973
      %v3975 = vpop.xlane.xlu0 %3974
      %v3976 = vsel %vm3589, %v3948, 0.0
      %3977 = vadd.xlane.f32.xlu0 %v3976
      %v3978 = vpop.xlane.xlu0 %3977
      %v3979 = vsel %vm3589, %v3949, 0.0
      %3980 = vadd.xlane.f32.xlu0 %v3979
      %v3981 = vpop.xlane.xlu0 %3980
      %v3982 = vsel %vm3589, %v3950, 0.0
      %3983 = vadd.xlane.f32.xlu0 %v3982
      %v3984 = vpop.xlane.xlu0 %3983
      %v3985 = vsel %vm3589, %v3951, 0.0
      %3986 = vadd.xlane.f32.xlu0 %v3985
      %v3987 = vpop.xlane.xlu0 %3986
      %v3988 = vadd.f32 %v3954, %v3957
      %v3989 = vadd.f32 %v3988, %v3960
      %v3990 = vrot.slane %v3989, 4
      %v3991 = vadd.f32 %v3989, %v3990
      %v3992 = vrot.slane %v3991, 2
      %v3993 = vadd.f32 %v3991, %v3992
      %v3994 = vrot.slane %v3993, 1
      %v3995 = vadd.f32 %v3993, %v3994
      %v3996 = vadd.f32 %v3963, %v3966
      %v3997 = vadd.f32 %v3996, %v3969
      %v3998 = vrot.slane %v3997, 4
      %v3999 = vadd.f32 %v3997, %v3998
      %v4000 = vrot.slane %v3999, 2
      %v4001 = vadd.f32 %v3999, %v4000
      %v4002 = vrot.slane %v4001, 1
      %v4003 = vadd.f32 %v4001, %v4002
      %v4004 = vadd.f32 %v3972, %v3975
      %v4005 = vadd.f32 %v4004, %v3978
      %v4006 = vrot.slane %v4005, 4
      %v4007 = vadd.f32 %v4005, %v4006
      %v4008 = vrot.slane %v4007, 2
      %v4009 = vadd.f32 %v4007, %v4008
      %v4010 = vrot.slane %v4009, 1
      %v4011 = vadd.f32 %v4009, %v4010
      %v4012 = vadd.f32 %v3981, %v3984
      %v4013 = vadd.f32 %v4012, %v3987
      %v4014 = vrot.slane %v4013, 4
      %v4015 = vadd.f32 %v4013, %v4014
      %v4016 = vrot.slane %v4015, 2
      %v4017 = vadd.f32 %v4015, %v4016
      %v4018 = vrot.slane %v4017, 1
      %v4019 = vadd.f32 %v4017, %v4018
      %v4020 = vsel %vm3658, %v3995, %v4003
      %v4021 = vsel %vm3660, %v4020, %v4011
      %v4022 = vsel %vm3662, %v4021, %v4019
      %4024 = vrot.lane.b32.xlu0 %v4022, 1
      %v4025 = vpop.permute.xlu0 %4024
      %vm4027 = vcmask 7168
      %v4028 = vsel %vm4027, %v3663, %v4025
      %v4029 = vld [vmem:[%s5] sm:$0xf]
      %4031 = vset.pattern.permute.xlu0 0
      %4032 = vperm.xlu0 %4031, %v4029
      %v4033 = vpop.permute.xlu0 %4032
      %v4035 = vadd.f32 %v4028, %v4033
      %vm4036 = vcmask 11264
      %4037 = vst.msk [vmem:[%s249] sm:$0xf] %vm4036, %v4035
      %p4038 = scmp.lt.s32.totalorder %s17, 1
      %s4039 = scalar_select %p4038, %s17, 1
      %s4040 = smul.addr %s4039, 4
      %s4041 = scalar_lea.vmem %s6, %s4040
      // Predicated region
      $region45: #{tpu_custom_call.1} parent=43 // pred_check
        %p4042 = pneg %p166
      $region46: #{tpu_custom_call.1} parent=43 // pred_check_branch
        %4044 = sbr.rel (%p4042) target = $region48
      $region47: #{tpu_custom_call.1} parent=43 // pred_region
        _
      $region48: #{tpu_custom_call.1} parent=43 // pred_fallthru
        _
    $region44: #{tpu_custom_call.1} parent=5 // pred_fallthru
      _
    %p4045 = scmp.le.s32.totalorder 2, %s12
    // Predicated region
    $region49: #{tpu_custom_call.1} parent=5 // pred_check
      %p4046 = pneg %p4045
    $region50: #{tpu_custom_call.1} parent=5 // pred_check_branch
      %4048 = sbr.rel (%p4046) target = $region52
    $region51: #{tpu_custom_call.1} parent=5 // pred_region
      %s4049 = ssub.s32 %s12, 2
      // Predicated region
      $region53: #{tpu_custom_call.1} parent=51 // pred_check
        %p4050 = pneg %p172
      $region54: #{tpu_custom_call.1} parent=51 // pred_check_branch
        %4052 = sbr.rel (%p4050) target = $region56
      $region55: #{tpu_custom_call.1} parent=51 // pred_region
        %p4053 = scmp.lt.s32.totalorder %s18, 1
        %s4054 = scalar_select %p4053, %s18, 1
        %s4055 = smul.addr %s4054, 4
        %s4056 = scalar_lea.vmem %s6, %s4055
      $region56: #{tpu_custom_call.1} parent=51 // pred_fallthru
        _
    $region52: #{tpu_custom_call.1} parent=5 // pred_fallthru
      _
  $region6: #{tpu_custom_call.1} parent=0 // loop_footer
    %s16 = sadd.s32 1, %s12
  $region7: #{tpu_custom_call.1} parent=0 // loop_footer_branch
    %11 = sbr.rel target = $region3
  $region8: #{tpu_custom_call.1} parent=0 // loop_exit
    _

</llo_original>
